<compile_context>
chip_gen: v7x
topology: tpu7x:2x2x1
jax: 0.10.0
libtpu: 0.0.40
codegen_flags: <defaults>
</compile_context>

<pallas_src>
import functools
import math

import jax
import jax.numpy as jnp
from jax import lax
from jax.experimental import pallas as pl
from jax.experimental.pallas import tpu as pltpu

LN_EPS = 1e-5       # PyTorch nn.LayerNorm default
NEG_INF = -1e30


# ----------------------------- kernel helpers -------------------------------

def _layer_norm(x, gamma, beta):
    mu = jnp.mean(x, axis=-1, keepdims=True)
    var = jnp.mean((x - mu) ** 2, axis=-1, keepdims=True)
    return (x - mu) * lax.rsqrt(var + LN_EPS) * gamma + beta


def _gelu_exact(x):
    # PyTorch nn.GELU default = exact erf formulation
    return 0.5 * x * (1.0 + lax.erf(x * (1.0 / jnp.sqrt(2.0).astype(x.dtype))))


# --------------------------- Token_transformer kernel -----------------------

def token_transformer_kernel(x_ref, g1_ref, b1_ref, wqkv_ref, wproj_ref,
                             bproj_ref, g2_ref, b2_ref, wfc1_ref, bfc1_ref,
                             wfc2_ref, bfc2_ref, out_ref,
                             *, in_dim, n_valid, n_pad):
    x = x_ref[0]                                             # (N_pad, C) f32
    xn = _layer_norm(x, g1_ref[0], b1_ref[0])                # norm1

    # fused QKV matmul (scale already folded into the q columns of wqkv)
    qkv = jnp.dot(xn.astype(jnp.bfloat16), wqkv_ref[...],
                  preferred_element_type=jnp.float32)        # (N_pad, 3*D)
    q = qkv[:, :in_dim]
    k = qkv[:, in_dim:2 * in_dim]
    v = qkv[:, 2 * in_dim:]

    # attention scores: q @ k^T (contract last dims)
    attn = lax.dot_general(q.astype(jnp.bfloat16), k.astype(jnp.bfloat16),
                           (((1,), (1,)), ((), ())),
                           preferred_element_type=jnp.float32)   # (N_pad, N_pad)

    if n_valid < n_pad:
        # padded key columns must not contribute to the softmax denominator
        col = lax.broadcasted_iota(jnp.int32, attn.shape, 1)
        attn = jnp.where(col < n_valid, attn, NEG_INF)

    attn = attn - jnp.max(attn, axis=-1, keepdims=True)
    p = jnp.exp(attn)
    p = p * pl.reciprocal(jnp.sum(p, axis=-1, keepdims=True), approx=True)

    o = jnp.dot(p.astype(jnp.bfloat16), v.astype(jnp.bfloat16),
                preferred_element_type=jnp.float32)              # (N_pad, D)
    o = jnp.dot(o.astype(jnp.bfloat16), wproj_ref[...],
                preferred_element_type=jnp.float32) + bproj_ref[0]

    # T2T token_transformer skip connection uses v (input/output dims differ)
    x1 = v + o

    # MLP branch
    xn2 = _layer_norm(x1, g2_ref[0], b2_ref[0])                  # norm2
    h = _gelu_exact(jnp.dot(xn2.astype(jnp.bfloat16), wfc1_ref[...],
                            preferred_element_type=jnp.float32) + bfc1_ref[0])
    m = jnp.dot(h.astype(jnp.bfloat16), wfc2_ref[...],
                preferred_element_type=jnp.float32) + bfc2_ref[0]

    out_ref[0] = x1 + m


def token_transformer(x, params):
    """x: (B, N, C) float32 -> (B, N, in_dim) float32."""
    B, N, C = x.shape
    D = params['wq'].shape[1]
    scale = float(D) ** -0.5          # num_heads = 1 -> head_dim = in_dim

    # pad token count to a multiple of 8 (sublane alignment)
    n_pad = ((N + 7) // 8) * 8
    if n_pad != N:
        x = jnp.pad(x, ((0, 0), (0, n_pad - N), (0, 0)))

    # pack QKV into one bf16 weight, folding the attention scale into q
    wqkv = jnp.concatenate([params['wq'] * scale, params['wk'], params['wv']],
                           axis=1).astype(jnp.bfloat16)

    weights = [
        params['g1'], params['b1'],
        wqkv,
        params['wproj'].astype(jnp.bfloat16),
        params['bproj'],
        params['g2'], params['b2'],
        params['wfc1'].astype(jnp.bfloat16),
        params['bfc1'],
        params['wfc2'].astype(jnp.bfloat16),
        params['bfc2'],
    ]

    in_specs = [pl.BlockSpec((1, n_pad, C), lambda b: (b, 0, 0))]
    args = [x]
    for w in weights:
        in_specs.append(pl.BlockSpec(w.shape, lambda b, nd=w.ndim: (0,) * nd))
        args.append(w)

    out = pl.pallas_call(
        functools.partial(token_transformer_kernel,
                          in_dim=D, n_valid=N, n_pad=n_pad),
        out_shape=jax.ShapeDtypeStruct((B, n_pad, D), jnp.float32),
        grid=(B,),
        in_specs=in_specs,
        out_specs=pl.BlockSpec((1, n_pad, D), lambda b: (b, 0, 0)),
        compiler_params=pltpu.CompilerParams(dimension_semantics=("parallel",)),
    )(*args)
    return out[:, :N, :]


# ------------------------------- Linear kernel ------------------------------

def linear_kernel(x_ref, w_ref, b_ref, out_ref):
    out_ref[...] = (jnp.dot(x_ref[...].astype(jnp.bfloat16), w_ref[...],
                            preferred_element_type=jnp.float32) + b_ref[...])


def linear(x, w, b):
    """x: (B, N, Cin) @ w: (Cin, Cout) + b: (1, Cout) -> (B, N, Cout).

    Flattened to a single (B*N, Cin) x (Cin, Cout) matmul so the MXU sees one
    big lane-dense tile instead of B tiny 49-row matmuls.
    """
    B, N, Cin = x.shape
    Cout = w.shape[1]
    x2d = x.reshape(B * N, Cin)
    out = pl.pallas_call(
        linear_kernel,
        out_shape=jax.ShapeDtypeStruct((B * N, Cout), jnp.float32),
        grid=(1,),
        in_specs=[pl.BlockSpec((B * N, Cin), lambda i: (0, 0)),
                  pl.BlockSpec((Cin, Cout), lambda i: (0, 0)),
                  pl.BlockSpec((1, Cout), lambda i: (0, 0))],
        out_specs=pl.BlockSpec((B * N, Cout), lambda i: (0, 0)),
    )(x2d, w.astype(jnp.bfloat16), b)
    return out.reshape(B, N, Cout)


# ------------------------------- JAX glue -----------------------------------

def unfold(x, k, stride=1, dilation=1):
    """torch.nn.Unfold semantics on NCHW input: -> (B, C*k*k, L)."""
    B, C, H, W = x.shape
    oh = (H - dilation * (k - 1) - 1) // stride + 1
    ow = (W - dilation * (k - 1) - 1) // stride + 1
    patches = []
    for i in range(k):
        for j in range(k):
            hs, ws = i * dilation, j * dilation
            patches.append(
                x[:, :, hs:hs + (oh - 1) * stride + 1:stride,
                        ws:ws + (ow - 1) * stride + 1:stride])
    p = jnp.stack(patches, axis=2)                   # (B, C, k*k, oh, ow)
    return p.reshape(B, C * k * k, oh * ow)          # c slowest, kh, kw fastest


def t2t_forward(x, params):
    """CTformer T2T_module.forward. x: (B, in_chans, H, W) NCHW float32."""
    B = x.shape[0]

    # soft_split0: Unfold(7, stride=2), tokens = (B, L0, in_chans*49)
    t0 = jnp.transpose(unfold(x, 7, stride=2), (0, 2, 1))
    x1 = token_transformer(t0, params['attn1'])      # (B, L0, token_dim)
    res_11 = x1

    _, L0, C1 = x1.shape
    s0 = int(math.isqrt(L0))
    img1 = jnp.transpose(x1, (0, 2, 1)).reshape(B, C1, s0, s0)
    img1 = jnp.roll(img1, shift=(2, 2), axis=(2, 3))

    # soft_split1: Unfold(3, stride=1, dilation=2)
    t1 = jnp.transpose(unfold(img1, 3, stride=1, dilation=2), (0, 2, 1))
    x2 = token_transformer(t1, params['attn2'])      # (B, L1, token_dim)
    res_22 = x2

    _, L1, C2 = x2.shape
    s1 = int(math.isqrt(L1))
    img2 = jnp.transpose(x2, (0, 2, 1)).reshape(B, C2, s1, s1)
    img2 = jnp.roll(img2, shift=(2, 2), axis=(2, 3))

    # soft_split2: Unfold(3, stride=1), then Linear projection
    t2 = jnp.transpose(unfold(img2, 3, stride=1), (0, 2, 1))   # (B, L2, token_dim*9)
    out = linear(t2, params['proj_w'], params['proj_b'])       # (B, L2, embed_dim)
    return out, res_11, res_22


# --------------------------- parameter construction -------------------------

def init_token_transformer_params(key, dim, in_dim, mlp_ratio=1.0):
    hidden = int(in_dim * mlp_ratio)
    ks = jax.random.split(key, 6)
    s = 0.02
    return {
        'g1': jnp.ones((1, dim), jnp.float32),
        'b1': jnp.zeros((1, dim), jnp.float32),
        'wq': s * jax.random.normal(ks[0], (dim, in_dim), jnp.float32),
        'wk': s * jax.random.normal(ks[1], (dim, in_dim), jnp.float32),
        'wv': s * jax.random.normal(ks[2], (dim, in_dim), jnp.float32),
        'wproj': s * jax.random.normal(ks[3], (in_dim, in_dim), jnp.float32),
        'bproj': jnp.zeros((1, in_dim), jnp.float32),
        'g2': jnp.ones((1, in_dim), jnp.float32),
        'b2': jnp.zeros((1, in_dim), jnp.float32),
        'wfc1': s * jax.random.normal(ks[4], (in_dim, hidden), jnp.float32),
        'bfc1': jnp.zeros((1, hidden), jnp.float32),
        'wfc2': s * jax.random.normal(ks[5], (hidden, in_dim), jnp.float32),
        'bfc2': jnp.zeros((1, in_dim), jnp.float32),
    }


if __name__ == "__main__":
    key = jax.random.PRNGKey(0)
    kx, k1, k2, k3 = jax.random.split(key, 4)

    # module config (small but shape-consistent): img 32x32, in_chans=1,
    # token_dim=64, embed_dim=256  ->  L0=13*13=169, L1=9*9=81, L2=7*7=49
    batch, in_chans, img = 2, 1, 32
    token_dim, embed_dim = 64, 256

    x = jax.random.normal(kx, (batch, in_chans, img, img), jnp.float32)

    params = {
        'attn1': init_token_transformer_params(k1, in_chans * 7 * 7, token_dim),
        'attn2': init_token_transformer_params(k2, token_dim * 3 * 3, token_dim),
        'proj_w': 0.02 * jax.random.normal(k3, (token_dim * 3 * 3, embed_dim),
                                           jnp.float32),
        'proj_b': jnp.zeros((1, embed_dim), jnp.float32),
    }

    out, r11, r22 = t2t_forward(x, params)
    jax.block_until_ready((out, r11, r22))

    assert out.shape == (batch, 49, embed_dim), out.shape
    assert r11.shape == (batch, 169, token_dim), r11.shape
    assert r22.shape == (batch, 81, token_dim), r22.shape
    assert jnp.all(jnp.isfinite(out)) and jnp.all(jnp.isfinite(r11)) and jnp.all(jnp.isfinite(r22))
    print("KERNEL_OK")
</pallas_src>

<mosaic_0001>
module attributes {stable_mosaic.version = 11 : i64} {
  func.func @token_transformer_kernel(%arg0: i32, %arg1: memref<1x176x49xf32, #tpu.memory_space<vmem>>, %arg2: memref<1x49xf32, #tpu.memory_space<vmem>>, %arg3: memref<1x49xf32, #tpu.memory_space<vmem>>, %arg4: memref<49x192xbf16, #tpu.memory_space<vmem>>, %arg5: memref<64x64xbf16, #tpu.memory_space<vmem>>, %arg6: memref<1x64xf32, #tpu.memory_space<vmem>>, %arg7: memref<1x64xf32, #tpu.memory_space<vmem>>, %arg8: memref<1x64xf32, #tpu.memory_space<vmem>>, %arg9: memref<64x64xbf16, #tpu.memory_space<vmem>>, %arg10: memref<1x64xf32, #tpu.memory_space<vmem>>, %arg11: memref<64x64xbf16, #tpu.memory_space<vmem>>, %arg12: memref<1x64xf32, #tpu.memory_space<vmem>>, %arg13: memref<1x176x64xf32, #tpu.memory_space<vmem>>) attributes {dimension_semantics = [#tpu.dimension_semantics<parallel>], iteration_bounds = array<i64: 2>, scalar_prefetch = 0 : i64, scratch_operands = 0 : i64, tpu.core_type = #tpu.core_type<tc>, window_params = [{transform_indices = @transform_0, window_bounds = array<i64: 1, 176, 49>}, {pipeline_mode = #tpu.pipeline_mode<synchronous>, transform_indices = @transform_1, window_bounds = array<i64: 1, 49>}, {pipeline_mode = #tpu.pipeline_mode<synchronous>, transform_indices = @transform_2, window_bounds = array<i64: 1, 49>}, {pipeline_mode = #tpu.pipeline_mode<synchronous>, transform_indices = @transform_3, window_bounds = array<i64: 49, 192>}, {pipeline_mode = #tpu.pipeline_mode<synchronous>, transform_indices = @transform_4, window_bounds = array<i64: 64, 64>}, {pipeline_mode = #tpu.pipeline_mode<synchronous>, transform_indices = @transform_5, window_bounds = array<i64: 1, 64>}, {pipeline_mode = #tpu.pipeline_mode<synchronous>, transform_indices = @transform_6, window_bounds = array<i64: 1, 64>}, {pipeline_mode = #tpu.pipeline_mode<synchronous>, transform_indices = @transform_7, window_bounds = array<i64: 1, 64>}, {pipeline_mode = #tpu.pipeline_mode<synchronous>, transform_indices = @transform_8, window_bounds = array<i64: 64, 64>}, {pipeline_mode = #tpu.pipeline_mode<synchronous>, transform_indices = @transform_9, window_bounds = array<i64: 1, 64>}, {pipeline_mode = #tpu.pipeline_mode<synchronous>, transform_indices = @transform_10, window_bounds = array<i64: 64, 64>}, {pipeline_mode = #tpu.pipeline_mode<synchronous>, transform_indices = @transform_11, window_bounds = array<i64: 1, 64>}, {transform_indices = @transform_12, window_bounds = array<i64: 1, 176, 64>}]} {
    %c0 = arith.constant 0 : index
    %c0_0 = arith.constant 0 : index
    %c0_1 = arith.constant 0 : index
    %0 = vector.load %arg1[%c0, %c0_0, %c0_1] : memref<1x176x49xf32, #tpu.memory_space<vmem>>, vector<1x176x49xf32>
    %1 = vector.shape_cast %0 : vector<1x176x49xf32> to vector<176x49xf32>
    %c0_2 = arith.constant 0 : index
    %c0_3 = arith.constant 0 : index
    %2 = vector.load %arg2[%c0_2, %c0_3] : memref<1x49xf32, #tpu.memory_space<vmem>>, vector<1x49xf32>
    %3 = vector.shape_cast %2 : vector<1x49xf32> to vector<49xf32>
    %c0_4 = arith.constant 0 : index
    %c0_5 = arith.constant 0 : index
    %4 = vector.load %arg3[%c0_4, %c0_5] : memref<1x49xf32, #tpu.memory_space<vmem>>, vector<1x49xf32>
    %5 = vector.shape_cast %4 : vector<1x49xf32> to vector<49xf32>
    %cst = arith.constant dense<0.000000e+00> : vector<176xf32>
    %6 = vector.multi_reduction <add>, %1, %cst [1] : vector<176x49xf32> to vector<176xf32>
    %7 = vector.shape_cast %6 : vector<176xf32> to vector<176x1xf32>
    %cst_6 = arith.constant 4.900000e+01 : f32
    %8 = vector.broadcast %cst_6 : f32 to vector<176x1xf32>
    %9 = arith.divf %7, %8 : vector<176x1xf32>
    %10 = vector.broadcast %9 : vector<176x1xf32> to vector<176x49xf32>
    %11 = arith.subf %1, %10 : vector<176x49xf32>
    %12 = arith.mulf %11, %11 : vector<176x49xf32>
    %cst_7 = arith.constant dense<0.000000e+00> : vector<176xf32>
    %13 = vector.multi_reduction <add>, %12, %cst_7 [1] : vector<176x49xf32> to vector<176xf32>
    %14 = vector.shape_cast %13 : vector<176xf32> to vector<176x1xf32>
    %cst_8 = arith.constant 4.900000e+01 : f32
    %15 = vector.broadcast %cst_8 : f32 to vector<176x1xf32>
    %16 = arith.divf %14, %15 : vector<176x1xf32>
    %17 = vector.broadcast %9 : vector<176x1xf32> to vector<176x49xf32>
    %18 = arith.subf %1, %17 : vector<176x49xf32>
    %cst_9 = arith.constant 9.99999974E-6 : f32
    %19 = vector.broadcast %cst_9 : f32 to vector<176x1xf32>
    %20 = arith.addf %16, %19 : vector<176x1xf32>
    %21 = math.rsqrt %20 : vector<176x1xf32>
    %22 = vector.broadcast %21 : vector<176x1xf32> to vector<176x49xf32>
    %23 = arith.mulf %18, %22 : vector<176x49xf32>
    %24 = vector.shape_cast %3 : vector<49xf32> to vector<1x49xf32>
    %25 = vector.broadcast %24 : vector<1x49xf32> to vector<176x49xf32>
    %26 = arith.mulf %23, %25 : vector<176x49xf32>
    %27 = vector.shape_cast %5 : vector<49xf32> to vector<1x49xf32>
    %28 = vector.broadcast %27 : vector<1x49xf32> to vector<176x49xf32>
    %29 = arith.addf %26, %28 : vector<176x49xf32>
    %30 = arith.truncf %29 : vector<176x49xf32> to vector<176x49xbf16>
    %c0_10 = arith.constant 0 : index
    %c0_11 = arith.constant 0 : index
    %31 = vector.load %arg4[%c0_10, %c0_11] : memref<49x192xbf16, #tpu.memory_space<vmem>>, vector<49x192xbf16>
    %cst_12 = arith.constant dense<0.000000e+00> : vector<176x192xf32>
    %32 = tpu.matmul %30, %31, %cst_12 {dimension_numbers = #tpu.dot_dimension_numbers<[1], [0], [0], [1], [0, 0, 1, 1], [], []>} : vector<176x49xbf16>, vector<49x192xbf16>, vector<176x192xf32> -> vector<176x192xf32>
    %33 = vector.extract_strided_slice %32 {offsets = [0, 0], sizes = [176, 64], strides = [1, 1]} : vector<176x192xf32> to vector<176x64xf32>
    %34 = vector.extract_strided_slice %32 {offsets = [0, 64], sizes = [176, 64], strides = [1, 1]} : vector<176x192xf32> to vector<176x64xf32>
    %35 = vector.extract_strided_slice %32 {offsets = [0, 128], sizes = [176, 64], strides = [1, 1]} : vector<176x192xf32> to vector<176x64xf32>
    %36 = arith.truncf %33 : vector<176x64xf32> to vector<176x64xbf16>
    %37 = arith.truncf %34 : vector<176x64xf32> to vector<176x64xbf16>
    %cst_13 = arith.constant dense<0.000000e+00> : vector<176x176xf32>
    %38 = tpu.matmul %36, %37, %cst_13 {dimension_numbers = #tpu.dot_dimension_numbers<[1], [1], [0], [0], [0, 0, 1, 0], [], []>} : vector<176x64xbf16>, vector<176x64xbf16>, vector<176x176xf32> -> vector<176x176xf32>
    %39 = tpu.iota {dimensions = array<i32: 1>} : vector<176x176xi32>
    %c169_i32 = arith.constant 169 : i32
    %40 = vector.broadcast %c169_i32 : i32 to vector<176x176xi32>
    %41 = arith.cmpi slt, %39, %40 : vector<176x176xi32>
    %cst_14 = arith.constant -1.000000e+30 : f32
    %42 = vector.broadcast %cst_14 : f32 to vector<176x176xf32>
    %43 = arith.select %41, %38, %42 : vector<176x176xi1>, vector<176x176xf32>
    %cst_15 = arith.constant dense<0xFF800000> : vector<176xf32>
    %44 = vector.multi_reduction <maximumf>, %43, %cst_15 [1] : vector<176x176xf32> to vector<176xf32>
    %45 = vector.shape_cast %44 : vector<176xf32> to vector<176x1xf32>
    %46 = vector.broadcast %45 : vector<176x1xf32> to vector<176x176xf32>
    %47 = arith.subf %43, %46 : vector<176x176xf32>
    %48 = math.exp %47 : vector<176x176xf32>
    %cst_16 = arith.constant dense<0.000000e+00> : vector<176xf32>
    %49 = vector.multi_reduction <add>, %48, %cst_16 [1] : vector<176x176xf32> to vector<176xf32>
    %50 = vector.shape_cast %49 : vector<176xf32> to vector<176x1xf32>
    %51 = tpu.reciprocal %50 {approx = true} : vector<176x1xf32> -> vector<176x1xf32>
    %52 = vector.broadcast %51 : vector<176x1xf32> to vector<176x176xf32>
    %53 = arith.mulf %48, %52 : vector<176x176xf32>
    %54 = arith.truncf %53 : vector<176x176xf32> to vector<176x176xbf16>
    %55 = arith.truncf %35 : vector<176x64xf32> to vector<176x64xbf16>
    %cst_17 = arith.constant dense<0.000000e+00> : vector<176x64xf32>
    %56 = tpu.matmul %54, %55, %cst_17 {dimension_numbers = #tpu.dot_dimension_numbers<[1], [0], [0], [1], [0, 0, 1, 1], [], []>} : vector<176x176xbf16>, vector<176x64xbf16>, vector<176x64xf32> -> vector<176x64xf32>
    %57 = arith.truncf %56 : vector<176x64xf32> to vector<176x64xbf16>
    %c0_18 = arith.constant 0 : index
    %c0_19 = arith.constant 0 : index
    %58 = vector.load %arg5[%c0_18, %c0_19] : memref<64x64xbf16, #tpu.memory_space<vmem>>, vector<64x64xbf16>
    %cst_20 = arith.constant dense<0.000000e+00> : vector<176x64xf32>
    %59 = tpu.matmul %57, %58, %cst_20 {dimension_numbers = #tpu.dot_dimension_numbers<[1], [0], [0], [1], [0, 0, 1, 1], [], []>} : vector<176x64xbf16>, vector<64x64xbf16>, vector<176x64xf32> -> vector<176x64xf32>
    %c0_21 = arith.constant 0 : index
    %c0_22 = arith.constant 0 : index
    %60 = vector.load %arg6[%c0_21, %c0_22] : memref<1x64xf32, #tpu.memory_space<vmem>>, vector<1x64xf32>
    %61 = vector.shape_cast %60 : vector<1x64xf32> to vector<64xf32>
    %62 = vector.shape_cast %61 : vector<64xf32> to vector<1x64xf32>
    %63 = vector.broadcast %62 : vector<1x64xf32> to vector<176x64xf32>
    %64 = arith.addf %59, %63 : vector<176x64xf32>
    %65 = arith.addf %35, %64 : vector<176x64xf32>
    %c0_23 = arith.constant 0 : index
    %c0_24 = arith.constant 0 : index
    %66 = vector.load %arg7[%c0_23, %c0_24] : memref<1x64xf32, #tpu.memory_space<vmem>>, vector<1x64xf32>
    %67 = vector.shape_cast %66 : vector<1x64xf32> to vector<64xf32>
    %c0_25 = arith.constant 0 : index
    %c0_26 = arith.constant 0 : index
    %68 = vector.load %arg8[%c0_25, %c0_26] : memref<1x64xf32, #tpu.memory_space<vmem>>, vector<1x64xf32>
    %69 = vector.shape_cast %68 : vector<1x64xf32> to vector<64xf32>
    %cst_27 = arith.constant dense<0.000000e+00> : vector<176xf32>
    %70 = vector.multi_reduction <add>, %65, %cst_27 [1] : vector<176x64xf32> to vector<176xf32>
    %71 = vector.shape_cast %70 : vector<176xf32> to vector<176x1xf32>
    %cst_28 = arith.constant 6.400000e+01 : f32
    %72 = vector.broadcast %cst_28 : f32 to vector<176x1xf32>
    %73 = arith.divf %71, %72 : vector<176x1xf32>
    %74 = vector.broadcast %73 : vector<176x1xf32> to vector<176x64xf32>
    %75 = arith.subf %65, %74 : vector<176x64xf32>
    %76 = arith.mulf %75, %75 : vector<176x64xf32>
    %cst_29 = arith.constant dense<0.000000e+00> : vector<176xf32>
    %77 = vector.multi_reduction <add>, %76, %cst_29 [1] : vector<176x64xf32> to vector<176xf32>
    %78 = vector.shape_cast %77 : vector<176xf32> to vector<176x1xf32>
    %cst_30 = arith.constant 6.400000e+01 : f32
    %79 = vector.broadcast %cst_30 : f32 to vector<176x1xf32>
    %80 = arith.divf %78, %79 : vector<176x1xf32>
    %81 = vector.broadcast %73 : vector<176x1xf32> to vector<176x64xf32>
    %82 = arith.subf %65, %81 : vector<176x64xf32>
    %cst_31 = arith.constant 9.99999974E-6 : f32
    %83 = vector.broadcast %cst_31 : f32 to vector<176x1xf32>
    %84 = arith.addf %80, %83 : vector<176x1xf32>
    %85 = math.rsqrt %84 : vector<176x1xf32>
    %86 = vector.broadcast %85 : vector<176x1xf32> to vector<176x64xf32>
    %87 = arith.mulf %82, %86 : vector<176x64xf32>
    %88 = vector.shape_cast %67 : vector<64xf32> to vector<1x64xf32>
    %89 = vector.broadcast %88 : vector<1x64xf32> to vector<176x64xf32>
    %90 = arith.mulf %87, %89 : vector<176x64xf32>
    %91 = vector.shape_cast %69 : vector<64xf32> to vector<1x64xf32>
    %92 = vector.broadcast %91 : vector<1x64xf32> to vector<176x64xf32>
    %93 = arith.addf %90, %92 : vector<176x64xf32>
    %94 = arith.truncf %93 : vector<176x64xf32> to vector<176x64xbf16>
    %c0_32 = arith.constant 0 : index
    %c0_33 = arith.constant 0 : index
    %95 = vector.load %arg9[%c0_32, %c0_33] : memref<64x64xbf16, #tpu.memory_space<vmem>>, vector<64x64xbf16>
    %cst_34 = arith.constant dense<0.000000e+00> : vector<176x64xf32>
    %96 = tpu.matmul %94, %95, %cst_34 {dimension_numbers = #tpu.dot_dimension_numbers<[1], [0], [0], [1], [0, 0, 1, 1], [], []>} : vector<176x64xbf16>, vector<64x64xbf16>, vector<176x64xf32> -> vector<176x64xf32>
    %c0_35 = arith.constant 0 : index
    %c0_36 = arith.constant 0 : index
    %97 = vector.load %arg10[%c0_35, %c0_36] : memref<1x64xf32, #tpu.memory_space<vmem>>, vector<1x64xf32>
    %98 = vector.shape_cast %97 : vector<1x64xf32> to vector<64xf32>
    %99 = vector.shape_cast %98 : vector<64xf32> to vector<1x64xf32>
    %100 = vector.broadcast %99 : vector<1x64xf32> to vector<176x64xf32>
    %101 = arith.addf %96, %100 : vector<176x64xf32>
    %cst_37 = arith.constant 5.000000e-01 : f32
    %102 = vector.broadcast %cst_37 : f32 to vector<176x64xf32>
    %103 = arith.mulf %102, %101 : vector<176x64xf32>
    %cst_38 = arith.constant 2.000000e+00 : f32
    %104 = math.sqrt %cst_38 : f32
    %cst_39 = arith.constant 1.000000e+00 : f32
    %105 = arith.divf %cst_39, %104 : f32
    %106 = vector.broadcast %105 : f32 to vector<176x64xf32>
    %107 = arith.mulf %101, %106 : vector<176x64xf32>
    %108 = math.erf %107 : vector<176x64xf32>
    %cst_40 = arith.constant 1.000000e+00 : f32
    %109 = vector.broadcast %cst_40 : f32 to vector<176x64xf32>
    %110 = arith.addf %109, %108 : vector<176x64xf32>
    %111 = arith.mulf %103, %110 : vector<176x64xf32>
    %112 = arith.truncf %111 : vector<176x64xf32> to vector<176x64xbf16>
    %c0_41 = arith.constant 0 : index
    %c0_42 = arith.constant 0 : index
    %113 = vector.load %arg11[%c0_41, %c0_42] : memref<64x64xbf16, #tpu.memory_space<vmem>>, vector<64x64xbf16>
    %cst_43 = arith.constant dense<0.000000e+00> : vector<176x64xf32>
    %114 = tpu.matmul %112, %113, %cst_43 {dimension_numbers = #tpu.dot_dimension_numbers<[1], [0], [0], [1], [0, 0, 1, 1], [], []>} : vector<176x64xbf16>, vector<64x64xbf16>, vector<176x64xf32> -> vector<176x64xf32>
    %c0_44 = arith.constant 0 : index
    %c0_45 = arith.constant 0 : index
    %115 = vector.load %arg12[%c0_44, %c0_45] : memref<1x64xf32, #tpu.memory_space<vmem>>, vector<1x64xf32>
    %116 = vector.shape_cast %115 : vector<1x64xf32> to vector<64xf32>
    %117 = vector.shape_cast %116 : vector<64xf32> to vector<1x64xf32>
    %118 = vector.broadcast %117 : vector<1x64xf32> to vector<176x64xf32>
    %119 = arith.addf %114, %118 : vector<176x64xf32>
    %120 = arith.addf %65, %119 : vector<176x64xf32>
    %c0_46 = arith.constant 0 : index
    %c0_47 = arith.constant 0 : index
    %c0_48 = arith.constant 0 : index
    %121 = vector.load %arg13[%c0_46, %c0_47, %c0_48] : memref<1x176x64xf32, #tpu.memory_space<vmem>>, vector<1x176x64xf32>
    %122 = vector.shape_cast %121 : vector<1x176x64xf32> to vector<176x64xf32>
    %123 = vector.shape_cast %120 : vector<176x64xf32> to vector<1x176x64xf32>
    tpu.vector_store %arg13[%c0_46, %c0_47, %c0_48], %123 {strides = array<i32>} : memref<1x176x64xf32, #tpu.memory_space<vmem>>, vector<1x176x64xf32>,
    return
  }
  func.func @transform_0(%arg0: i32) -> (i32, i32, i32) {
    %c0_i32 = arith.constant 0 : i32
    %c0_i32_0 = arith.constant 0 : i32
    %c0_i32_1 = arith.constant 0 : i32
    return %arg0, %c0_i32, %c0_i32_0 : i32, i32, i32
  }
  func.func @transform_1(%arg0: i32) -> (i32, i32) {
    %c0_i32 = arith.constant 0 : i32
    %c0_i32_0 = arith.constant 0 : i32
    %c0_i32_1 = arith.constant 0 : i32
    return %c0_i32, %c0_i32_0 : i32, i32
  }
  func.func @transform_2(%arg0: i32) -> (i32, i32) {
    %c0_i32 = arith.constant 0 : i32
    %c0_i32_0 = arith.constant 0 : i32
    %c0_i32_1 = arith.constant 0 : i32
    return %c0_i32, %c0_i32_0 : i32, i32
  }
  func.func @transform_3(%arg0: i32) -> (i32, i32) {
    %c0_i32 = arith.constant 0 : i32
    %c0_i32_0 = arith.constant 0 : i32
    %c0_i32_1 = arith.constant 0 : i32
    return %c0_i32, %c0_i32_0 : i32, i32
  }
  func.func @transform_4(%arg0: i32) -> (i32, i32) {
    %c0_i32 = arith.constant 0 : i32
    %c0_i32_0 = arith.constant 0 : i32
    %c0_i32_1 = arith.constant 0 : i32
    return %c0_i32, %c0_i32_0 : i32, i32
  }
  func.func @transform_5(%arg0: i32) -> (i32, i32) {
    %c0_i32 = arith.constant 0 : i32
    %c0_i32_0 = arith.constant 0 : i32
    %c0_i32_1 = arith.constant 0 : i32
    return %c0_i32, %c0_i32_0 : i32, i32
  }
  func.func @transform_6(%arg0: i32) -> (i32, i32) {
    %c0_i32 = arith.constant 0 : i32
    %c0_i32_0 = arith.constant 0 : i32
    %c0_i32_1 = arith.constant 0 : i32
    return %c0_i32, %c0_i32_0 : i32, i32
  }
  func.func @transform_7(%arg0: i32) -> (i32, i32) {
    %c0_i32 = arith.constant 0 : i32
    %c0_i32_0 = arith.constant 0 : i32
    %c0_i32_1 = arith.constant 0 : i32
    return %c0_i32, %c0_i32_0 : i32, i32
  }
  func.func @transform_8(%arg0: i32) -> (i32, i32) {
    %c0_i32 = arith.constant 0 : i32
    %c0_i32_0 = arith.constant 0 : i32
    %c0_i32_1 = arith.constant 0 : i32
    return %c0_i32, %c0_i32_0 : i32, i32
  }
  func.func @transform_9(%arg0: i32) -> (i32, i32) {
    %c0_i32 = arith.constant 0 : i32
    %c0_i32_0 = arith.constant 0 : i32
    %c0_i32_1 = arith.constant 0 : i32
    return %c0_i32, %c0_i32_0 : i32, i32
  }
  func.func @transform_10(%arg0: i32) -> (i32, i32) {
    %c0_i32 = arith.constant 0 : i32
    %c0_i32_0 = arith.constant 0 : i32
    %c0_i32_1 = arith.constant 0 : i32
    return %c0_i32, %c0_i32_0 : i32, i32
  }
  func.func @transform_11(%arg0: i32) -> (i32, i32) {
    %c0_i32 = arith.constant 0 : i32
    %c0_i32_0 = arith.constant 0 : i32
    %c0_i32_1 = arith.constant 0 : i32
    return %c0_i32, %c0_i32_0 : i32, i32
  }
  func.func @transform_12(%arg0: i32) -> (i32, i32, i32) {
    %c0_i32 = arith.constant 0 : i32
    %c0_i32_0 = arith.constant 0 : i32
    %c0_i32_1 = arith.constant 0 : i32
    return %arg0, %c0_i32, %c0_i32_0 : i32, i32, i32
  }
}

</mosaic_0001>

<llo_original>
// kernel: tpu_custom_call.1
$region0: #{tpu_custom_call.1}
  #allocation0 [shape = 'u32[]', space=smem, size = 0x4, offset = 0x4, fixed_abs, tag = 'smem constant byte address 0x4 - core index']
  #allocation1 [shape = 'u32[144,128]{1,0:T(1,128)}', space=vmem, size = 0x12000, scoped, tag = 'internal scratch']
  %s0 = inlined_call_operand.vmem [shape: f32[2,176,49], index: 0, kind: input, shape index: {}]
  %s1 = inlined_call_operand.vmem [shape: f32[1,49], index: 1, kind: input, shape index: {}]
  %s2 = inlined_call_operand.vmem [shape: f32[1,49], index: 2, kind: input, shape index: {}]
  %s3 = inlined_call_operand.vmem [shape: bf16[49,192], index: 3, kind: input, shape index: {}]
  %s4 = inlined_call_operand.vmem [shape: bf16[64,64], index: 4, kind: input, shape index: {}]
  %s5 = inlined_call_operand.vmem [shape: f32[1,64], index: 5, kind: input, shape index: {}]
  %s6 = inlined_call_operand.vmem [shape: f32[1,64], index: 6, kind: input, shape index: {}]
  %s7 = inlined_call_operand.vmem [shape: f32[1,64], index: 7, kind: input, shape index: {}]
  %s8 = inlined_call_operand.vmem [shape: bf16[64,64], index: 8, kind: input, shape index: {}]
  %s9 = inlined_call_operand.vmem [shape: f32[1,64], index: 9, kind: input, shape index: {}]
  %s10 = inlined_call_operand.vmem [shape: bf16[64,64], index: 10, kind: input, shape index: {}]
  %s11 = inlined_call_operand.vmem [shape: f32[1,64], index: 11, kind: input, shape index: {}]
  %s12 = inlined_call_operand.vmem [shape: f32[2,176,64], index: 12, kind: output, shape index: {}]
  %s13 = sld [smem:[#allocation0]]
  $region81: #{tpu_custom_call.1} parent=0
    _
  %s15 = ssub.s32 1, %s13
  %s16 = scalar_select 0, %s15, %s13
  loop: start=0, step=1, limit=4
  $region2: #{tpu_custom_call.1} parent=0 // loop_pre_header
    _
  $region3: #{tpu_custom_call.1} parent=0 // loop_header
    %s18 = sphi 0, %s22
    %p19 = scmp.ge.s32.totalorder %s18, 4
    %s28 = sphi 0, %s30
    %s31 = sphi 0, %s28
    %s32 = sphi 0, %s31
    %s48 = sphi 0, %s32
    %s52 = sphi 0, %s52
    %s54 = sphi 0, %s52
    %s55 = sphi 0, %s54
    %s69 = sphi 0, %s55
    %s73 = sphi 0, %s73
    %s75 = sphi 0, %s73
    %s76 = sphi 0, %s75
    %s90 = sphi 0, %s76
    %s94 = sphi 0, %s94
    %s96 = sphi 0, %s94
    %s97 = sphi 0, %s96
    %s111 = sphi 0, %s97
    %s115 = sphi 0, %s115
    %s117 = sphi 0, %s115
    %s118 = sphi 0, %s117
    %s132 = sphi 0, %s118
    %s136 = sphi 0, %s136
    %s138 = sphi 0, %s136
    %s139 = sphi 0, %s138
    %s153 = sphi 0, %s139
    %s157 = sphi 0, %s157
    %s159 = sphi 0, %s157
    %s160 = sphi 0, %s159
    %s174 = sphi 0, %s160
    %s178 = sphi 0, %s178
    %s180 = sphi 0, %s178
    %s181 = sphi 0, %s180
    %s195 = sphi 0, %s181
    %s199 = sphi 0, %s199
    %s201 = sphi 0, %s199
    %s202 = sphi 0, %s201
    %s216 = sphi 0, %s202
    %s220 = sphi 0, %s220
    %s222 = sphi 0, %s220
    %s223 = sphi 0, %s222
    %s237 = sphi 0, %s223
    %s241 = sphi 0, %s241
    %s243 = sphi 0, %s241
    %s244 = sphi 0, %s243
    %s258 = sphi 0, %s244
    %s262 = sphi 0, %s262
    %s264 = sphi 0, %s262
    %s265 = sphi 0, %s264
    %s279 = sphi 0, %s265
    %s285 = sphi 0, %s287
    %s288 = sphi 0, %s285
    %s289 = sphi 0, %s288
    %s305 = sphi 0, %s289
  $region4: #{tpu_custom_call.1} parent=0 // loop_header_branch
    %21 = sbr.rel (%p19) target = $region8
  $region5: #{tpu_custom_call.1} parent=0 // loop_body
    %s23 = ssub.s32 %s18, 1
    %s24 = ssub.s32 %s18, 2
    %s25 = sadd.s32 %s18, 1
    %s26 = ssub.s32 %s18, %s25
    %p27 = scmp.eq.s32.totalorder %s26, 0
    %s29 = sadd.s32 %s28, 1
    %s30 = scalar_select %p27, %s28, %s29
    %p33 = pneg %p27
    %p34 = scmp.eq.s32.totalorder %s18, 1
    %p35 = por %p33, %p34
    %p36 = scmp.ne.s32.totalorder %s28, %s31
    %p37 = scmp.eq.s32.totalorder %s18, 0
    %p38 = por %p36, %p37
    %p39 = scmp.ne.s32.totalorder %s28, %s31
    %p40 = scmp.eq.s32.totalorder %s23, 1
    %p41 = por %p39, %p40
    %p42 = scmp.ne.s32.totalorder %s31, %s32
    %p43 = scmp.eq.s32.totalorder %s23, 0
    %p44 = por %p42, %p43
    %p45 = scmp.ne.s32.totalorder %s31, %s32
    %p46 = scmp.eq.s32.totalorder %s24, 1
    %p47 = por %p45, %p46
    %p49 = scmp.ne.s32.totalorder %s32, %s48
    %p50 = scmp.eq.s32.totalorder %s24, 0
    %p51 = por %p49, %p50
    %s53 = sadd.s32 %s52, 1
    %p56 = scmp.eq.s32.totalorder %s18, 1
    %p57 = scmp.ne.s32.totalorder %s52, %s54
    %p58 = scmp.eq.s32.totalorder %s18, 0
    %p59 = por %p57, %p58
    %p60 = scmp.ne.s32.totalorder %s52, %s54
    %p61 = scmp.eq.s32.totalorder %s23, 1
    %p62 = por %p60, %p61
    %p63 = scmp.ne.s32.totalorder %s54, %s55
    %p64 = scmp.eq.s32.totalorder %s23, 0
    %p65 = por %p63, %p64
    %p66 = scmp.ne.s32.totalorder %s54, %s55
    %p67 = scmp.eq.s32.totalorder %s24, 1
    %p68 = por %p66, %p67
    %p70 = scmp.ne.s32.totalorder %s55, %s69
    %p71 = scmp.eq.s32.totalorder %s24, 0
    %p72 = por %p70, %p71
    %s74 = sadd.s32 %s73, 1
    %p77 = scmp.eq.s32.totalorder %s18, 1
    %p78 = scmp.ne.s32.totalorder %s73, %s75
    %p79 = scmp.eq.s32.totalorder %s18, 0
    %p80 = por %p78, %p79
    %p81 = scmp.ne.s32.totalorder %s73, %s75
    %p82 = scmp.eq.s32.totalorder %s23, 1
    %p83 = por %p81, %p82
    %p84 = scmp.ne.s32.totalorder %s75, %s76
    %p85 = scmp.eq.s32.totalorder %s23, 0
    %p86 = por %p84, %p85
    %p87 = scmp.ne.s32.totalorder %s75, %s76
    %p88 = scmp.eq.s32.totalorder %s24, 1
    %p89 = por %p87, %p88
    %p91 = scmp.ne.s32.totalorder %s76, %s90
    %p92 = scmp.eq.s32.totalorder %s24, 0
    %p93 = por %p91, %p92
    %s95 = sadd.s32 %s94, 1
    %p98 = scmp.eq.s32.totalorder %s18, 1
    %p99 = scmp.ne.s32.totalorder %s94, %s96
    %p100 = scmp.eq.s32.totalorder %s18, 0
    %p101 = por %p99, %p100
    %p102 = scmp.ne.s32.totalorder %s94, %s96
    %p103 = scmp.eq.s32.totalorder %s23, 1
    %p104 = por %p102, %p103
    %p105 = scmp.ne.s32.totalorder %s96, %s97
    %p106 = scmp.eq.s32.totalorder %s23, 0
    %p107 = por %p105, %p106
    %p108 = scmp.ne.s32.totalorder %s96, %s97
    %p109 = scmp.eq.s32.totalorder %s24, 1
    %p110 = por %p108, %p109
    %p112 = scmp.ne.s32.totalorder %s97, %s111
    %p113 = scmp.eq.s32.totalorder %s24, 0
    %p114 = por %p112, %p113
    %s116 = sadd.s32 %s115, 1
    %p119 = scmp.eq.s32.totalorder %s18, 1
    %p120 = scmp.ne.s32.totalorder %s115, %s117
    %p121 = scmp.eq.s32.totalorder %s18, 0
    %p122 = por %p120, %p121
    %p123 = scmp.ne.s32.totalorder %s115, %s117
    %p124 = scmp.eq.s32.totalorder %s23, 1
    %p125 = por %p123, %p124
    %p126 = scmp.ne.s32.totalorder %s117, %s118
    %p127 = scmp.eq.s32.totalorder %s23, 0
    %p128 = por %p126, %p127
    %p129 = scmp.ne.s32.totalorder %s117, %s118
    %p130 = scmp.eq.s32.totalorder %s24, 1
    %p131 = por %p129, %p130
    %p133 = scmp.ne.s32.totalorder %s118, %s132
    %p134 = scmp.eq.s32.totalorder %s24, 0
    %p135 = por %p133, %p134
    %s137 = sadd.s32 %s136, 1
    %p140 = scmp.eq.s32.totalorder %s18, 1
    %p141 = scmp.ne.s32.totalorder %s136, %s138
    %p142 = scmp.eq.s32.totalorder %s18, 0
    %p143 = por %p141, %p142
    %p144 = scmp.ne.s32.totalorder %s136, %s138
    %p145 = scmp.eq.s32.totalorder %s23, 1
    %p146 = por %p144, %p145
    %p147 = scmp.ne.s32.totalorder %s138, %s139
    %p148 = scmp.eq.s32.totalorder %s23, 0
    %p149 = por %p147, %p148
    %p150 = scmp.ne.s32.totalorder %s138, %s139
    %p151 = scmp.eq.s32.totalorder %s24, 1
    %p152 = por %p150, %p151
    %p154 = scmp.ne.s32.totalorder %s139, %s153
    %p155 = scmp.eq.s32.totalorder %s24, 0
    %p156 = por %p154, %p155
    %s158 = sadd.s32 %s157, 1
    %p161 = scmp.eq.s32.totalorder %s18, 1
    %p162 = scmp.ne.s32.totalorder %s157, %s159
    %p163 = scmp.eq.s32.totalorder %s18, 0
    %p164 = por %p162, %p163
    %p165 = scmp.ne.s32.totalorder %s157, %s159
    %p166 = scmp.eq.s32.totalorder %s23, 1
    %p167 = por %p165, %p166
    %p168 = scmp.ne.s32.totalorder %s159, %s160
    %p169 = scmp.eq.s32.totalorder %s23, 0
    %p170 = por %p168, %p169
    %p171 = scmp.ne.s32.totalorder %s159, %s160
    %p172 = scmp.eq.s32.totalorder %s24, 1
    %p173 = por %p171, %p172
    %p175 = scmp.ne.s32.totalorder %s160, %s174
    %p176 = scmp.eq.s32.totalorder %s24, 0
    %p177 = por %p175, %p176
    %s179 = sadd.s32 %s178, 1
    %p182 = scmp.eq.s32.totalorder %s18, 1
    %p183 = scmp.ne.s32.totalorder %s178, %s180
    %p184 = scmp.eq.s32.totalorder %s18, 0
    %p185 = por %p183, %p184
    %p186 = scmp.ne.s32.totalorder %s178, %s180
    %p187 = scmp.eq.s32.totalorder %s23, 1
    %p188 = por %p186, %p187
    %p189 = scmp.ne.s32.totalorder %s180, %s181
    %p190 = scmp.eq.s32.totalorder %s23, 0
    %p191 = por %p189, %p190
    %p192 = scmp.ne.s32.totalorder %s180, %s181
    %p193 = scmp.eq.s32.totalorder %s24, 1
    %p194 = por %p192, %p193
    %p196 = scmp.ne.s32.totalorder %s181, %s195
    %p197 = scmp.eq.s32.totalorder %s24, 0
    %p198 = por %p196, %p197
    %s200 = sadd.s32 %s199, 1
    %p203 = scmp.eq.s32.totalorder %s18, 1
    %p204 = scmp.ne.s32.totalorder %s199, %s201
    %p205 = scmp.eq.s32.totalorder %s18, 0
    %p206 = por %p204, %p205
    %p207 = scmp.ne.s32.totalorder %s199, %s201
    %p208 = scmp.eq.s32.totalorder %s23, 1
    %p209 = por %p207, %p208
    %p210 = scmp.ne.s32.totalorder %s201, %s202
    %p211 = scmp.eq.s32.totalorder %s23, 0
    %p212 = por %p210, %p211
    %p213 = scmp.ne.s32.totalorder %s201, %s202
    %p214 = scmp.eq.s32.totalorder %s24, 1
    %p215 = por %p213, %p214
    %p217 = scmp.ne.s32.totalorder %s202, %s216
    %p218 = scmp.eq.s32.totalorder %s24, 0
    %p219 = por %p217, %p218
    %s221 = sadd.s32 %s220, 1
    %p224 = scmp.eq.s32.totalorder %s18, 1
    %p225 = scmp.ne.s32.totalorder %s220, %s222
    %p226 = scmp.eq.s32.totalorder %s18, 0
    %p227 = por %p225, %p226
    %p228 = scmp.ne.s32.totalorder %s220, %s222
    %p229 = scmp.eq.s32.totalorder %s23, 1
    %p230 = por %p228, %p229
    %p231 = scmp.ne.s32.totalorder %s222, %s223
    %p232 = scmp.eq.s32.totalorder %s23, 0
    %p233 = por %p231, %p232
    %p234 = scmp.ne.s32.totalorder %s222, %s223
    %p235 = scmp.eq.s32.totalorder %s24, 1
    %p236 = por %p234, %p235
    %p238 = scmp.ne.s32.totalorder %s223, %s237
    %p239 = scmp.eq.s32.totalorder %s24, 0
    %p240 = por %p238, %p239
    %s242 = sadd.s32 %s241, 1
    %p245 = scmp.eq.s32.totalorder %s18, 1
    %p246 = scmp.ne.s32.totalorder %s241, %s243
    %p247 = scmp.eq.s32.totalorder %s18, 0
    %p248 = por %p246, %p247
    %p249 = scmp.ne.s32.totalorder %s241, %s243
    %p250 = scmp.eq.s32.totalorder %s23, 1
    %p251 = por %p249, %p250
    %p252 = scmp.ne.s32.totalorder %s243, %s244
    %p253 = scmp.eq.s32.totalorder %s23, 0
    %p254 = por %p252, %p253
    %p255 = scmp.ne.s32.totalorder %s243, %s244
    %p256 = scmp.eq.s32.totalorder %s24, 1
    %p257 = por %p255, %p256
    %p259 = scmp.ne.s32.totalorder %s244, %s258
    %p260 = scmp.eq.s32.totalorder %s24, 0
    %p261 = por %p259, %p260
    %s263 = sadd.s32 %s262, 1
    %p266 = scmp.eq.s32.totalorder %s18, 1
    %p267 = scmp.ne.s32.totalorder %s262, %s264
    %p268 = scmp.eq.s32.totalorder %s18, 0
    %p269 = por %p267, %p268
    %p270 = scmp.ne.s32.totalorder %s262, %s264
    %p271 = scmp.eq.s32.totalorder %s23, 1
    %p272 = por %p270, %p271
    %p273 = scmp.ne.s32.totalorder %s264, %s265
    %p274 = scmp.eq.s32.totalorder %s23, 0
    %p275 = por %p273, %p274
    %p276 = scmp.ne.s32.totalorder %s264, %s265
    %p277 = scmp.eq.s32.totalorder %s24, 1
    %p278 = por %p276, %p277
    %p280 = scmp.ne.s32.totalorder %s265, %s279
    %p281 = scmp.eq.s32.totalorder %s24, 0
    %p282 = por %p280, %p281
    %s283 = ssub.s32 %s18, %s25
    %p284 = scmp.eq.s32.totalorder %s283, 0
    %s286 = sadd.s32 %s285, 1
    %s287 = scalar_select %p284, %s285, %s286
    %p290 = pneg %p284
    %p291 = scmp.eq.s32.totalorder %s18, 1
    %p292 = por %p290, %p291
    %p293 = scmp.ne.s32.totalorder %s285, %s288
    %p294 = scmp.eq.s32.totalorder %s18, 0
    %p295 = por %p293, %p294
    %p296 = scmp.ne.s32.totalorder %s285, %s288
    %p297 = scmp.eq.s32.totalorder %s23, 1
    %p298 = por %p296, %p297
    %p299 = scmp.ne.s32.totalorder %s288, %s289
    %p300 = scmp.eq.s32.totalorder %s23, 0
    %p301 = por %p299, %p300
    %p302 = scmp.ne.s32.totalorder %s288, %s289
    %p303 = scmp.eq.s32.totalorder %s24, 1
    %p304 = por %p302, %p303
    %p306 = scmp.ne.s32.totalorder %s289, %s305
    %p307 = scmp.eq.s32.totalorder %s24, 0
    %p308 = por %p306, %p307
    %p309 = scmp.le.s32.totalorder 1, %s18
    %p310 = scmp.lt.s32.totalorder %s18, 3
    %p311 = pnand %p309, %p310
    %p312 = pneg %p311
    // Predicated region
    $region9: #{tpu_custom_call.1} parent=5 // pred_check
      _
    $region10: #{tpu_custom_call.1} parent=5 // pred_check_branch
      %314 = sbr.rel (%p311) target = $region12
    $region11: #{tpu_custom_call.1} parent=5 // pred_region
      %s315 = ssub.s32 %s18, 1
      // Predicated region
      $region13: #{tpu_custom_call.1} parent=11 // pred_check
        %p316 = pneg %p65
      $region14: #{tpu_custom_call.1} parent=11 // pred_check_branch
        %318 = sbr.rel (%p316) target = $region16
      $region15: #{tpu_custom_call.1} parent=11 // pred_region
        _
      $region16: #{tpu_custom_call.1} parent=11 // pred_fallthru
        _
      // Predicated region
      $region17: #{tpu_custom_call.1} parent=11 // pred_check
        %p319 = pneg %p86
      $region18: #{tpu_custom_call.1} parent=11 // pred_check_branch
        %321 = sbr.rel (%p319) target = $region20
      $region19: #{tpu_custom_call.1} parent=11 // pred_region
        _
      $region20: #{tpu_custom_call.1} parent=11 // pred_fallthru
        _
      // Predicated region
      $region21: #{tpu_custom_call.1} parent=11 // pred_check
        %p322 = pneg %p107
      $region22: #{tpu_custom_call.1} parent=11 // pred_check_branch
        %324 = sbr.rel (%p322) target = $region24
      $region23: #{tpu_custom_call.1} parent=11 // pred_region
        _
      $region24: #{tpu_custom_call.1} parent=11 // pred_fallthru
        _
      // Predicated region
      $region25: #{tpu_custom_call.1} parent=11 // pred_check
        %p325 = pneg %p128
      $region26: #{tpu_custom_call.1} parent=11 // pred_check_branch
        %327 = sbr.rel (%p325) target = $region28
      $region27: #{tpu_custom_call.1} parent=11 // pred_region
        _
      $region28: #{tpu_custom_call.1} parent=11 // pred_fallthru
        _
      // Predicated region
      $region29: #{tpu_custom_call.1} parent=11 // pred_check
        %p328 = pneg %p149
      $region30: #{tpu_custom_call.1} parent=11 // pred_check_branch
        %330 = sbr.rel (%p328) target = $region32
      $region31: #{tpu_custom_call.1} parent=11 // pred_region
        _
      $region32: #{tpu_custom_call.1} parent=11 // pred_fallthru
        _
      // Predicated region
      $region33: #{tpu_custom_call.1} parent=11 // pred_check
        %p331 = pneg %p170
      $region34: #{tpu_custom_call.1} parent=11 // pred_check_branch
        %333 = sbr.rel (%p331) target = $region36
      $region35: #{tpu_custom_call.1} parent=11 // pred_region
        _
      $region36: #{tpu_custom_call.1} parent=11 // pred_fallthru
        _
      // Predicated region
      $region37: #{tpu_custom_call.1} parent=11 // pred_check
        %p334 = pneg %p191
      $region38: #{tpu_custom_call.1} parent=11 // pred_check_branch
        %336 = sbr.rel (%p334) target = $region40
      $region39: #{tpu_custom_call.1} parent=11 // pred_region
        _
      $region40: #{tpu_custom_call.1} parent=11 // pred_fallthru
        _
      // Predicated region
      $region41: #{tpu_custom_call.1} parent=11 // pred_check
        %p337 = pneg %p212
      $region42: #{tpu_custom_call.1} parent=11 // pred_check_branch
        %339 = sbr.rel (%p337) target = $region44
      $region43: #{tpu_custom_call.1} parent=11 // pred_region
        _
      $region44: #{tpu_custom_call.1} parent=11 // pred_fallthru
        _
      // Predicated region
      $region45: #{tpu_custom_call.1} parent=11 // pred_check
        %p340 = pneg %p233
      $region46: #{tpu_custom_call.1} parent=11 // pred_check_branch
        %342 = sbr.rel (%p340) target = $region48
      $region47: #{tpu_custom_call.1} parent=11 // pred_region
        _
      $region48: #{tpu_custom_call.1} parent=11 // pred_fallthru
        _
      // Predicated region
      $region49: #{tpu_custom_call.1} parent=11 // pred_check
        %p343 = pneg %p254
      $region50: #{tpu_custom_call.1} parent=11 // pred_check_branch
        %345 = sbr.rel (%p343) target = $region52
      $region51: #{tpu_custom_call.1} parent=11 // pred_region
        _
      $region52: #{tpu_custom_call.1} parent=11 // pred_fallthru
        _
      // Predicated region
      $region53: #{tpu_custom_call.1} parent=11 // pred_check
        %p346 = pneg %p275
      $region54: #{tpu_custom_call.1} parent=11 // pred_check_branch
        %348 = sbr.rel (%p346) target = $region56
      $region55: #{tpu_custom_call.1} parent=11 // pred_region
        _
      $region56: #{tpu_custom_call.1} parent=11 // pred_fallthru
        _
    $region12: #{tpu_custom_call.1} parent=5 // pred_fallthru
      _
    %p349 = scmp.lt.s32.totalorder %s18, 2
    // Predicated region
    $region57: #{tpu_custom_call.1} parent=5 // pred_check
      %p350 = pneg %p349
    $region58: #{tpu_custom_call.1} parent=5 // pred_check_branch
      %352 = sbr.rel (%p350) target = $region60
    $region59: #{tpu_custom_call.1} parent=5 // pred_region
      // Predicated region
      $region61: #{tpu_custom_call.1} parent=59 // pred_check
        %p353 = pneg %p38
      $region62: #{tpu_custom_call.1} parent=59 // pred_check_branch
        %355 = sbr.rel (%p353) target = $region64
      $region63: #{tpu_custom_call.1} parent=59 // pred_region
        %p356 = scmp.lt.s32.totalorder %s18, 1
        %s357 = scalar_select %p356, %s18, 1
        %s358 = smul.addr %s357, 22
        %s359 = smul.addr %s358, 8
        %s360 = scalar_lea.vmem %s0, %s359
      $region64: #{tpu_custom_call.1} parent=59 // pred_fallthru
        _
    $region60: #{tpu_custom_call.1} parent=5 // pred_fallthru
      _
    %p361 = scmp.le.s32.totalorder 1, %s18
    %p362 = scmp.lt.s32.totalorder %s18, 3
    %p363 = pnand %p361, %p362
    %p364 = pneg %p363
    // Predicated region
    $region65: #{tpu_custom_call.1} parent=5 // pred_check
      _
    $region66: #{tpu_custom_call.1} parent=5 // pred_check_branch
      %366 = sbr.rel (%p363) target = $region68
    $region67: #{tpu_custom_call.1} parent=5 // pred_region
      %s367 = ssub.s32 %s18, 1
      %p368 = scmp.lt.s32.totalorder %s23, 1
      %s369 = scalar_select %p368, %s23, 1
      %s370 = smul.addr %s369, 22
      %s371 = smul.addr %s370, 8
      %s372 = scalar_lea.vmem %s0, %s371
      %p373 = pneg %p44
      %p374 = pneg %p41
      %p375 = pneg %p65
      %p376 = pneg %p62
      %p377 = pneg %p86
      %p378 = pneg %p83
      %p379 = pneg %p107
      %p380 = pneg %p104
      %p381 = pneg %p128
      %p382 = pneg %p125
      %p383 = pneg %p149
      %p384 = pneg %p146
      %p385 = pneg %p170
      %p386 = pneg %p167
      %p387 = pneg %p191
      %p388 = pneg %p188
      %p389 = pneg %p212
      %p390 = pneg %p209
      %p391 = pneg %p233
      %p392 = pneg %p230
      %p393 = pneg %p254
      %p394 = pneg %p251
      %p395 = pneg %p275
      %p396 = pneg %p272
      %p397 = pneg %p301
      %p398 = pneg %p298
      %p399 = scmp.lt.s32.totalorder %s23, 1
      %s400 = scalar_select %p399, %s23, 1
      %s401 = smul.addr %s400, 22
      %s402 = smul.addr %s401, 8
      %s403 = scalar_lea.vmem %s12, %s402
      %p404 = scmp.lt.s32.totalorder %s23, 1
      %s405 = scalar_select %p404, %s23, 1
      %s406 = smul.addr %s405, 22
      %s407 = smul.addr %s406, 8
      %s408 = scalar_lea.vmem %s0, %s407
      %p409 = scmp.lt.s32.totalorder %s23, 1
      %s410 = scalar_select %p409, %s23, 1
      %s411 = smul.addr %s410, 22
      %s412 = smul.addr %s411, 8
      %s413 = scalar_lea.vmem %s12, %s412
      %v415 = vld [vmem:[%s408] sm:$0xff]
      %v416 = vld [vmem:[%s408 + $0x8] sm:$0xff]
      %v417 = vld [vmem:[%s408 + $0x10] sm:$0xff]
      %v418 = vld [vmem:[%s408 + $0x18] sm:$0xff]
      %v419 = vld [vmem:[%s408 + $0x20] sm:$0xff]
      %v420 = vld [vmem:[%s408 + $0x28] sm:$0xff]
      %v421 = vld [vmem:[%s408 + $0x30] sm:$0xff]
      %v422 = vld [vmem:[%s408 + $0x38] sm:$0xff]
      %v423 = vld [vmem:[%s408 + $0x40] sm:$0xff]
      %v424 = vld [vmem:[%s408 + $0x48] sm:$0xff]
      %v425 = vld [vmem:[%s408 + $0x50] sm:$0xff]
      %v426 = vld [vmem:[%s408 + $0x58] sm:$0xff]
      %v427 = vld [vmem:[%s408 + $0x60] sm:$0xff]
      %v428 = vld [vmem:[%s408 + $0x68] sm:$0xff]
      %v429 = vld [vmem:[%s408 + $0x70] sm:$0xff]
      %v430 = vld [vmem:[%s408 + $0x78] sm:$0xff]
      %v431 = vld [vmem:[%s408 + $0x80] sm:$0xff]
      %v432 = vld [vmem:[%s408 + $0x88] sm:$0xff]
      %v433 = vld [vmem:[%s408 + $0x90] sm:$0xff]
      %v434 = vld [vmem:[%s408 + $0x98] sm:$0xff]
      %v435 = vld [vmem:[%s408 + $0xa0] sm:$0xff]
      %v436 = vld [vmem:[%s408 + $0xa8] sm:$0xff]
      %v437 = vld [vmem:[%s1] sm:$0x1]
      %v438 = vld [vmem:[%s2] sm:$0x1]
      %vm439 = vcmask 400384
      %v440 = vsel %vm439, %v415, 0.0
      %441 = vadd.xlane.f32.xlu0 %v440
      %v442 = vpop.xlane.xlu0 %441
      %v443 = vsel %vm439, %v416, 0.0
      %444 = vadd.xlane.f32.xlu0 %v443
      %v445 = vpop.xlane.xlu0 %444
      %v446 = vsel %vm439, %v417, 0.0
      %447 = vadd.xlane.f32.xlu0 %v446
      %v448 = vpop.xlane.xlu0 %447
      %v449 = vsel %vm439, %v418, 0.0
      %450 = vadd.xlane.f32.xlu0 %v449
      %v451 = vpop.xlane.xlu0 %450
      %v452 = vsel %vm439, %v419, 0.0
      %453 = vadd.xlane.f32.xlu0 %v452
      %v454 = vpop.xlane.xlu0 %453
      %v455 = vsel %vm439, %v420, 0.0
      %456 = vadd.xlane.f32.xlu0 %v455
      %v457 = vpop.xlane.xlu0 %456
      %v458 = vsel %vm439, %v421, 0.0
      %459 = vadd.xlane.f32.xlu0 %v458
      %v460 = vpop.xlane.xlu0 %459
      %v461 = vsel %vm439, %v422, 0.0
      %462 = vadd.xlane.f32.xlu0 %v461
      %v463 = vpop.xlane.xlu0 %462
      %v464 = vsel %vm439, %v423, 0.0
      %465 = vadd.xlane.f32.xlu0 %v464
      %v466 = vpop.xlane.xlu0 %465
      %v467 = vsel %vm439, %v424, 0.0
      %468 = vadd.xlane.f32.xlu0 %v467
      %v469 = vpop.xlane.xlu0 %468
      %v470 = vsel %vm439, %v425, 0.0
      %471 = vadd.xlane.f32.xlu0 %v470
      %v472 = vpop.xlane.xlu0 %471
      %v473 = vsel %vm439, %v426, 0.0
      %474 = vadd.xlane.f32.xlu0 %v473
      %v475 = vpop.xlane.xlu0 %474
      %v476 = vsel %vm439, %v427, 0.0
      %477 = vadd.xlane.f32.xlu0 %v476
      %v478 = vpop.xlane.xlu0 %477
      %v479 = vsel %vm439, %v428, 0.0
      %480 = vadd.xlane.f32.xlu0 %v479
      %v481 = vpop.xlane.xlu0 %480
      %v482 = vsel %vm439, %v429, 0.0
      %483 = vadd.xlane.f32.xlu0 %v482
      %v484 = vpop.xlane.xlu0 %483
      %v485 = vsel %vm439, %v430, 0.0
      %486 = vadd.xlane.f32.xlu0 %v485
      %v487 = vpop.xlane.xlu0 %486
      %v488 = vsel %vm439, %v431, 0.0
      %489 = vadd.xlane.f32.xlu0 %v488
      %v490 = vpop.xlane.xlu0 %489
      %v491 = vsel %vm439, %v432, 0.0
      %492 = vadd.xlane.f32.xlu0 %v491
      %v493 = vpop.xlane.xlu0 %492
      %v494 = vsel %vm439, %v433, 0.0
      %495 = vadd.xlane.f32.xlu0 %v494
      %v496 = vpop.xlane.xlu0 %495
      %v497 = vsel %vm439, %v434, 0.0
      %498 = vadd.xlane.f32.xlu0 %v497
      %v499 = vpop.xlane.xlu0 %498
      %v500 = vsel %vm439, %v435, 0.0
      %501 = vadd.xlane.f32.xlu0 %v500
      %v502 = vpop.xlane.xlu0 %501
      %v503 = vsel %vm439, %v436, 0.0
      %504 = vadd.xlane.f32.xlu0 %v503
      %v505 = vpop.xlane.xlu0 %504
      %v506 = vrcp.pop 49.0
      %v507 = vmul.f32 %v442, %v506
      %v508 = vmul.f32 %v445, %v506
      %v509 = vmul.f32 %v448, %v506
      %v510 = vmul.f32 %v451, %v506
      %v511 = vmul.f32 %v454, %v506
      %v512 = vmul.f32 %v457, %v506
      %v513 = vmul.f32 %v460, %v506
      %v514 = vmul.f32 %v463, %v506
      %v515 = vmul.f32 %v466, %v506
      %v516 = vmul.f32 %v469, %v506
      %v517 = vmul.f32 %v472, %v506
      %v518 = vmul.f32 %v475, %v506
      %v519 = vmul.f32 %v478, %v506
      %v520 = vmul.f32 %v481, %v506
      %v521 = vmul.f32 %v484, %v506
      %v522 = vmul.f32 %v487, %v506
      %v523 = vmul.f32 %v490, %v506
      %v524 = vmul.f32 %v493, %v506
      %v525 = vmul.f32 %v496, %v506
      %v526 = vmul.f32 %v499, %v506
      %v527 = vmul.f32 %v502, %v506
      %v528 = vmul.f32 %v505, %v506
      %v529 = vsub.f32 %v415, %v507
      %v530 = vsub.f32 %v416, %v508
      %v531 = vsub.f32 %v417, %v509
      %v532 = vsub.f32 %v418, %v510
      %v533 = vsub.f32 %v419, %v511
      %v534 = vsub.f32 %v420, %v512
      %v535 = vsub.f32 %v421, %v513
      %v536 = vsub.f32 %v422, %v514
      %v537 = vsub.f32 %v423, %v515
      %v538 = vsub.f32 %v424, %v516
      %v539 = vsub.f32 %v425, %v517
      %v540 = vsub.f32 %v426, %v518
      %v541 = vsub.f32 %v427, %v519
      %v542 = vsub.f32 %v428, %v520
      %v543 = vsub.f32 %v429, %v521
      %v544 = vsub.f32 %v430, %v522
      %v545 = vsub.f32 %v431, %v523
      %v546 = vsub.f32 %v432, %v524
      %v547 = vsub.f32 %v433, %v525
      %v548 = vsub.f32 %v434, %v526
      %v549 = vsub.f32 %v435, %v527
      %v550 = vsub.f32 %v436, %v528
      %v551 = vmul.f32 %v529, %v529
      %v552 = vmul.f32 %v530, %v530
      %v553 = vmul.f32 %v531, %v531
      %v554 = vmul.f32 %v532, %v532
      %v555 = vmul.f32 %v533, %v533
      %v556 = vmul.f32 %v534, %v534
      %v557 = vmul.f32 %v535, %v535
      %v558 = vmul.f32 %v536, %v536
      %v559 = vmul.f32 %v537, %v537
      %v560 = vmul.f32 %v538, %v538
      %v561 = vmul.f32 %v539, %v539
      %v562 = vmul.f32 %v540, %v540
      %v563 = vmul.f32 %v541, %v541
      %v564 = vmul.f32 %v542, %v542
      %v565 = vmul.f32 %v543, %v543
      %v566 = vmul.f32 %v544, %v544
      %v567 = vmul.f32 %v545, %v545
      %v568 = vmul.f32 %v546, %v546
      %v569 = vmul.f32 %v547, %v547
      %v570 = vmul.f32 %v548, %v548
      %v571 = vmul.f32 %v549, %v549
      %v572 = vmul.f32 %v550, %v550
      %v573 = vsel %vm439, %v551, 0.0
      %574 = vadd.xlane.f32.xlu0 %v573
      %v575 = vpop.xlane.xlu0 %574
      %v576 = vsel %vm439, %v552, 0.0
      %577 = vadd.xlane.f32.xlu0 %v576
      %v578 = vpop.xlane.xlu0 %577
      %v579 = vsel %vm439, %v553, 0.0
      %580 = vadd.xlane.f32.xlu0 %v579
      %v581 = vpop.xlane.xlu0 %580
      %v582 = vsel %vm439, %v554, 0.0
      %583 = vadd.xlane.f32.xlu0 %v582
      %v584 = vpop.xlane.xlu0 %583
      %v585 = vsel %vm439, %v555, 0.0
      %586 = vadd.xlane.f32.xlu0 %v585
      %v587 = vpop.xlane.xlu0 %586
      %v588 = vsel %vm439, %v556, 0.0
      %589 = vadd.xlane.f32.xlu0 %v588
      %v590 = vpop.xlane.xlu0 %589
      %v591 = vsel %vm439, %v557, 0.0
      %592 = vadd.xlane.f32.xlu0 %v591
      %v593 = vpop.xlane.xlu0 %592
      %v594 = vsel %vm439, %v558, 0.0
      %595 = vadd.xlane.f32.xlu0 %v594
      %v596 = vpop.xlane.xlu0 %595
      %v597 = vsel %vm439, %v559, 0.0
      %598 = vadd.xlane.f32.xlu0 %v597
      %v599 = vpop.xlane.xlu0 %598
      %v600 = vsel %vm439, %v560, 0.0
      %601 = vadd.xlane.f32.xlu0 %v600
      %v602 = vpop.xlane.xlu0 %601
      %v603 = vsel %vm439, %v561, 0.0
      %604 = vadd.xlane.f32.xlu0 %v603
      %v605 = vpop.xlane.xlu0 %604
      %v606 = vsel %vm439, %v562, 0.0
      %607 = vadd.xlane.f32.xlu0 %v606
      %v608 = vpop.xlane.xlu0 %607
      %v609 = vsel %vm439, %v563, 0.0
      %610 = vadd.xlane.f32.xlu0 %v609
      %v611 = vpop.xlane.xlu0 %610
      %v612 = vsel %vm439, %v564, 0.0
      %613 = vadd.xlane.f32.xlu0 %v612
      %v614 = vpop.xlane.xlu0 %613
      %v615 = vsel %vm439, %v565, 0.0
      %616 = vadd.xlane.f32.xlu0 %v615
      %v617 = vpop.xlane.xlu0 %616
      %v618 = vsel %vm439, %v566, 0.0
      %619 = vadd.xlane.f32.xlu0 %v618
      %v620 = vpop.xlane.xlu0 %619
      %v621 = vsel %vm439, %v567, 0.0
      %622 = vadd.xlane.f32.xlu0 %v621
      %v623 = vpop.xlane.xlu0 %622
      %v624 = vsel %vm439, %v568, 0.0
      %625 = vadd.xlane.f32.xlu0 %v624
      %v626 = vpop.xlane.xlu0 %625
      %v627 = vsel %vm439, %v569, 0.0
      %628 = vadd.xlane.f32.xlu0 %v627
      %v629 = vpop.xlane.xlu0 %628
      %v630 = vsel %vm439, %v570, 0.0
      %631 = vadd.xlane.f32.xlu0 %v630
      %v632 = vpop.xlane.xlu0 %631
      %v633 = vsel %vm439, %v571, 0.0
      %634 = vadd.xlane.f32.xlu0 %v633
      %v635 = vpop.xlane.xlu0 %634
      %v636 = vsel %vm439, %v572, 0.0
      %637 = vadd.xlane.f32.xlu0 %v636
      %v638 = vpop.xlane.xlu0 %637
      %v639 = vmul.f32 %v575, %v506
      %v640 = vmul.f32 %v578, %v506
      %v641 = vmul.f32 %v581, %v506
      %v642 = vmul.f32 %v584, %v506
      %v643 = vmul.f32 %v587, %v506
      %v644 = vmul.f32 %v590, %v506
      %v645 = vmul.f32 %v593, %v506
      %v646 = vmul.f32 %v596, %v506
      %v647 = vmul.f32 %v599, %v506
      %v648 = vmul.f32 %v602, %v506
      %v649 = vmul.f32 %v605, %v506
      %v650 = vmul.f32 %v608, %v506
      %v651 = vmul.f32 %v611, %v506
      %v652 = vmul.f32 %v614, %v506
      %v653 = vmul.f32 %v617, %v506
      %v654 = vmul.f32 %v620, %v506
      %v655 = vmul.f32 %v623, %v506
      %v656 = vmul.f32 %v626, %v506
      %v657 = vmul.f32 %v629, %v506
      %v658 = vmul.f32 %v632, %v506
      %v659 = vmul.f32 %v635, %v506
      %v660 = vmul.f32 %v638, %v506
      %v661 = vadd.f32 %v639, 1e-05
      %v662 = vadd.f32 %v640, 1e-05
      %v663 = vadd.f32 %v641, 1e-05
      %v664 = vadd.f32 %v642, 1e-05
      %v665 = vadd.f32 %v643, 1e-05
      %v666 = vadd.f32 %v644, 1e-05
      %v667 = vadd.f32 %v645, 1e-05
      %v668 = vadd.f32 %v646, 1e-05
      %v669 = vadd.f32 %v647, 1e-05
      %v670 = vadd.f32 %v648, 1e-05
      %v671 = vadd.f32 %v649, 1e-05
      %v672 = vadd.f32 %v650, 1e-05
      %v673 = vadd.f32 %v651, 1e-05
      %v674 = vadd.f32 %v652, 1e-05
      %v675 = vadd.f32 %v653, 1e-05
      %v676 = vadd.f32 %v654, 1e-05
      %v677 = vadd.f32 %v655, 1e-05
      %v678 = vadd.f32 %v656, 1e-05
      %v679 = vadd.f32 %v657, 1e-05
      %v680 = vadd.f32 %v658, 1e-05
      %v681 = vadd.f32 %v659, 1e-05
      %v682 = vadd.f32 %v660, 1e-05
      %v683 = vrsqrt.pop %v661
      %v684 = vrsqrt.pop %v662
      %v685 = vrsqrt.pop %v663
      %v686 = vrsqrt.pop %v664
      %v687 = vrsqrt.pop %v665
      %v688 = vrsqrt.pop %v666
      %v689 = vrsqrt.pop %v667
      %v690 = vrsqrt.pop %v668
      %v691 = vrsqrt.pop %v669
      %v692 = vrsqrt.pop %v670
      %v693 = vrsqrt.pop %v671
      %v694 = vrsqrt.pop %v672
      %v695 = vrsqrt.pop %v673
      %v696 = vrsqrt.pop %v674
      %v697 = vrsqrt.pop %v675
      %v698 = vrsqrt.pop %v676
      %v699 = vrsqrt.pop %v677
      %v700 = vrsqrt.pop %v678
      %v701 = vrsqrt.pop %v679
      %v702 = vrsqrt.pop %v680
      %v703 = vrsqrt.pop %v681
      %v704 = vrsqrt.pop %v682
      %v705 = vmul.f32 %v529, %v683
      %v706 = vmul.f32 %v530, %v684
      %v707 = vmul.f32 %v531, %v685
      %v708 = vmul.f32 %v532, %v686
      %v709 = vmul.f32 %v533, %v687
      %v710 = vmul.f32 %v534, %v688
      %v711 = vmul.f32 %v535, %v689
      %v712 = vmul.f32 %v536, %v690
      %v713 = vmul.f32 %v537, %v691
      %v714 = vmul.f32 %v538, %v692
      %v715 = vmul.f32 %v539, %v693
      %v716 = vmul.f32 %v540, %v694
      %v717 = vmul.f32 %v541, %v695
      %v718 = vmul.f32 %v542, %v696
      %v719 = vmul.f32 %v543, %v697
      %v720 = vmul.f32 %v544, %v698
      %v721 = vmul.f32 %v545, %v699
      %v722 = vmul.f32 %v546, %v700
      %v723 = vmul.f32 %v547, %v701
      %v724 = vmul.f32 %v548, %v702
      %v725 = vmul.f32 %v549, %v703
      %v726 = vmul.f32 %v550, %v704
      %v728 = vlaneseq
      %v729 = vshrl.u32 %v728, 7
      %v730 = vsub.s32 0, %v729
      %v731 = vrot.slane %v437, %v730
      %v733 = vmul.f32 %v705, %v731
      %v734 = vmul.f32 %v706, %v731
      %v735 = vmul.f32 %v707, %v731
      %v736 = vmul.f32 %v708, %v731
      %v737 = vmul.f32 %v709, %v731
      %v738 = vmul.f32 %v710, %v731
      %v739 = vmul.f32 %v711, %v731
      %v740 = vmul.f32 %v712, %v731
      %v741 = vmul.f32 %v713, %v731
      %v742 = vmul.f32 %v714, %v731
      %v743 = vmul.f32 %v715, %v731
      %v744 = vmul.f32 %v716, %v731
      %v745 = vmul.f32 %v717, %v731
      %v746 = vmul.f32 %v718, %v731
      %v747 = vmul.f32 %v719, %v731
      %v748 = vmul.f32 %v720, %v731
      %v749 = vmul.f32 %v721, %v731
      %v750 = vmul.f32 %v722, %v731
      %v751 = vmul.f32 %v723, %v731
      %v752 = vmul.f32 %v724, %v731
      %v753 = vmul.f32 %v725, %v731
      %v754 = vmul.f32 %v726, %v731
      %v756 = vlaneseq
      %v757 = vshrl.u32 %v756, 7
      %v758 = vsub.s32 0, %v757
      %v759 = vrot.slane %v438, %v758
      %v761 = vadd.f32 %v733, %v759
      %v762 = vadd.f32 %v734, %v759
      %v763 = vadd.f32 %v735, %v759
      %v764 = vadd.f32 %v736, %v759
      %v765 = vadd.f32 %v737, %v759
      %v766 = vadd.f32 %v738, %v759
      %v767 = vadd.f32 %v739, %v759
      %v768 = vadd.f32 %v740, %v759
      %v769 = vadd.f32 %v741, %v759
      %v770 = vadd.f32 %v742, %v759
      %v771 = vadd.f32 %v743, %v759
      %v772 = vadd.f32 %v744, %v759
      %v773 = vadd.f32 %v745, %v759
      %v774 = vadd.f32 %v746, %v759
      %v775 = vadd.f32 %v747, %v759
      %v776 = vadd.f32 %v748, %v759
      %v777 = vadd.f32 %v749, %v759
      %v778 = vadd.f32 %v750, %v759
      %v779 = vadd.f32 %v751, %v759
      %v780 = vadd.f32 %v752, %v759
      %v781 = vadd.f32 %v753, %v759
      %v782 = vadd.f32 %v754, %v759
      %v783 = vpack.c.bf16 %v762, %v761
      %v784 = vpack.c.bf16 %v764, %v763
      %v785 = vpack.c.bf16 %v766, %v765
      %v786 = vpack.c.bf16 %v768, %v767
      %v787 = vpack.c.bf16 %v770, %v769
      %v788 = vpack.c.bf16 %v772, %v771
      %v789 = vpack.c.bf16 %v774, %v773
      %v790 = vpack.c.bf16 %v776, %v775
      %v791 = vpack.c.bf16 %v778, %v777
      %v792 = vpack.c.bf16 %v780, %v779
      %v793 = vpack.c.bf16 %v782, %v781
      %v794 = vld [vmem:[%s3] sm:$0xff]
      %v795 = vld [vmem:[%s3 + $0x8] sm:$0xff]
      %v796 = vld [vmem:[%s3 + $0x10] sm:$0xff]
      %v797 = vld [vmem:[%s3 + $0x18] sm:$0xff]
      %v798 = vld [vmem:[%s3 + $0x20] sm:$0xff]
      %v799 = vld [vmem:[%s3 + $0x28] sm:$0xff]
      %v800 = vld [vmem:[%s3 + $0x30] sm:$0x11]
      %v808 = vunpack.c.l.b16 %v794
      %v809 = vunpack.c.h.b16 %v794
      %v810 = vunpack.c.l.b16 %v795
      %v811 = vunpack.c.h.b16 %v795
      %v812 = vunpack.c.l.b16 %v796
      %v813 = vunpack.c.h.b16 %v796
      %v814 = vunpack.c.l.b16 %v797
      %v815 = vunpack.c.h.b16 %v797
      %v816 = vunpack.c.l.b16 %v798
      %v817 = vunpack.c.h.b16 %v798
      %v818 = vunpack.c.l.b16 %v799
      %v819 = vunpack.c.h.b16 %v799
      %v820 = vunpack.c.l.b16 %v800
      %v821 = vunpack.c.h.b16 %v800
      %v822 = vpack.c.b16 %v810, %v808
      %v823 = vpack.c.b16 %v811, %v809
      %v824 = vpack.c.b16 %v814, %v812
      %v825 = vpack.c.b16 %v815, %v813
      %v826 = vpack.c.b16 %v818, %v816
      %v827 = vpack.c.b16 %v819, %v817
      %v828 = vpack.c.b16 %v820, %v820
      %v829 = vpack.c.b16 %v821, %v821
      %v837 = vsel %vm439, %v783, 0
      %v840 = vsel %vm439, %v784, 0
      %v843 = vsel %vm439, %v785, 0
      %v846 = vsel %vm439, %v786, 0
      %v849 = vsel %vm439, %v787, 0
      %v852 = vsel %vm439, %v788, 0
      %v855 = vsel %vm439, %v789, 0
      %v858 = vsel %vm439, %v790, 0
      %v861 = vsel %vm439, %v791, 0
      %v864 = vsel %vm439, %v792, 0
      %v867 = vsel %vm439, %v793, 0
      %vm869 = vcmask 1040384
      %v870 = vsel 0, 4294967295, 65535
      %v871 = vsel %vm869, %v870, 0
      %v873 = vand.u32 %v828, %v871
      %v876 = vand.u32 %v829, %v871
      %878 = vmatprep.subr.bf16.mxu0 %v823
      %879 = vmatpush1.bf16.msra.mxu0 %v822
      %880 = vmatprep.subr.bf16.mxu0 %v825
      %881 = vmatpush1.bf16.msra.mxu0 %v824
      %882 = vmatprep.subr.bf16.mxu0 %v827
      %883 = vmatpush1.bf16.msra.mxu0 %v826
      %884 = vmatprep.subr.bf16.mxu0 %v876
      %885 = vmatpush1.bf16.msra.mxu0 %v873
      %886 = vmatprep.subr.bf16.mxu0 0
      %887 = vmatpush1.bf16.msra.mxu0 0
      %888 = vmatprep.subr.bf16.mxu0 0
      %889 = vmatpush1.bf16.msra.mxu0 0
      %890 = vmatprep.subr.bf16.mxu0 0
      %891 = vmatpush1.bf16.msra.mxu0 0
      %892 = vmatprep.subr.bf16.mxu0 0
      %893 = vmatpush1.bf16.msra.mxu0 0
      %894 = vmatprep.subr.bf16.mxu0 0
      %895 = vmatpush1.bf16.msra.mxu0 0
      %896 = vmatprep.subr.bf16.mxu0 0
      %897 = vmatpush1.bf16.msra.mxu0 0
      %898 = vmatprep.subr.bf16.mxu0 0
      %899 = vmatpush1.bf16.msra.mxu0 0
      %900 = vmatprep.subr.bf16.mxu0 0
      %901 = vmatpush1.bf16.msra.mxu0 0
      %902 = vmatprep.subr.bf16.mxu0 0
      %903 = vmatpush1.bf16.msra.mxu0 0
      %904 = vmatprep.subr.bf16.mxu0 0
      %905 = vmatpush1.bf16.msra.mxu0 0
      %906 = vmatprep.subr.bf16.mxu0 0
      %907 = vmatpush1.bf16.msra.mxu0 0
      %908 = vmatprep.subr.bf16.mxu0 0
      %909 = vmatpush1.bf16.msra.mxu0 0
      %910 = vmatprep.mubr.bf16.mxu0 0
      %911 = vmatmul.mubr.bf16.gmra.mrb[0].mxu0 %v837
      %v912 = vpop.f32.mrb[0].mxu0
      %v913 = vadd.f32 0.0, %v912
      %v914 = vpop.f32.mrb[0].mxu0
      %v915 = vadd.f32 0.0, %v914
      %v916 = vpop.f32.mrb[0].mxu0
      %v917 = vadd.f32 0.0, %v916
      %v918 = vpop.f32.mrb[0].mxu0
      %v919 = vadd.f32 0.0, %v918
      %920 = vmatprep.mubr.bf16.mxu0 0
      %921 = vmatmul.mubr.bf16.gmra.mrb[0].mxu0 %v840
      %v922 = vpop.f32.mrb[0].mxu0
      %v923 = vadd.f32 0.0, %v922
      %v924 = vpop.f32.mrb[0].mxu0
      %v925 = vadd.f32 0.0, %v924
      %v926 = vpop.f32.mrb[0].mxu0
      %v927 = vadd.f32 0.0, %v926
      %v928 = vpop.f32.mrb[0].mxu0
      %v929 = vadd.f32 0.0, %v928
      %930 = vmatprep.mubr.bf16.mxu0 0
      %931 = vmatmul.mubr.bf16.gmra.mrb[0].mxu0 %v843
      %v932 = vpop.f32.mrb[0].mxu0
      %v933 = vadd.f32 0.0, %v932
      %v934 = vpop.f32.mrb[0].mxu0
      %v935 = vadd.f32 0.0, %v934
      %v936 = vpop.f32.mrb[0].mxu0
      %v937 = vadd.f32 0.0, %v936
      %v938 = vpop.f32.mrb[0].mxu0
      %v939 = vadd.f32 0.0, %v938
      %940 = vmatprep.mubr.bf16.mxu0 0
      %941 = vmatmul.mubr.bf16.gmra.mrb[0].mxu0 %v846
      %v942 = vpop.f32.mrb[0].mxu0
      %v943 = vadd.f32 0.0, %v942
      %v944 = vpop.f32.mrb[0].mxu0
      %v945 = vadd.f32 0.0, %v944
      %v946 = vpop.f32.mrb[0].mxu0
      %v947 = vadd.f32 0.0, %v946
      %v948 = vpop.f32.mrb[0].mxu0
      %v949 = vadd.f32 0.0, %v948
      %950 = vmatprep.mubr.bf16.mxu0 0
      %951 = vmatmul.mubr.bf16.gmra.mrb[0].mxu0 %v849
      %v952 = vpop.f32.mrb[0].mxu0
      %v953 = vadd.f32 0.0, %v952
      %v954 = vpop.f32.mrb[0].mxu0
      %v955 = vadd.f32 0.0, %v954
      %v956 = vpop.f32.mrb[0].mxu0
      %v957 = vadd.f32 0.0, %v956
      %v958 = vpop.f32.mrb[0].mxu0
      %v959 = vadd.f32 0.0, %v958
      %960 = vmatprep.mubr.bf16.mxu0 0
      %961 = vmatmul.mubr.bf16.gmra.mrb[0].mxu0 %v852
      %v962 = vpop.f32.mrb[0].mxu0
      %v963 = vadd.f32 0.0, %v962
      %v964 = vpop.f32.mrb[0].mxu0
      %v965 = vadd.f32 0.0, %v964
      %v966 = vpop.f32.mrb[0].mxu0
      %v967 = vadd.f32 0.0, %v966
      %v968 = vpop.f32.mrb[0].mxu0
      %v969 = vadd.f32 0.0, %v968
      %970 = vmatprep.mubr.bf16.mxu0 0
      %971 = vmatmul.mubr.bf16.gmra.mrb[0].mxu0 %v855
      %v972 = vpop.f32.mrb[0].mxu0
      %v973 = vadd.f32 0.0, %v972
      %v974 = vpop.f32.mrb[0].mxu0
      %v975 = vadd.f32 0.0, %v974
      %v976 = vpop.f32.mrb[0].mxu0
      %v977 = vadd.f32 0.0, %v976
      %v978 = vpop.f32.mrb[0].mxu0
      %v979 = vadd.f32 0.0, %v978
      %980 = vmatprep.mubr.bf16.mxu0 0
      %981 = vmatmul.mubr.bf16.gmra.mrb[0].mxu0 %v858
      %v982 = vpop.f32.mrb[0].mxu0
      %v983 = vadd.f32 0.0, %v982
      %v984 = vpop.f32.mrb[0].mxu0
      %v985 = vadd.f32 0.0, %v984
      %v986 = vpop.f32.mrb[0].mxu0
      %v987 = vadd.f32 0.0, %v986
      %v988 = vpop.f32.mrb[0].mxu0
      %v989 = vadd.f32 0.0, %v988
      %990 = vmatprep.mubr.bf16.mxu0 0
      %991 = vmatmul.mubr.bf16.gmra.mrb[0].mxu0 %v861
      %v992 = vpop.f32.mrb[0].mxu0
      %v993 = vadd.f32 0.0, %v992
      %v994 = vpop.f32.mrb[0].mxu0
      %v995 = vadd.f32 0.0, %v994
      %v996 = vpop.f32.mrb[0].mxu0
      %v997 = vadd.f32 0.0, %v996
      %v998 = vpop.f32.mrb[0].mxu0
      %v999 = vadd.f32 0.0, %v998
      %1000 = vmatprep.mubr.bf16.mxu0 0
      %1001 = vmatmul.mubr.bf16.gmra.mrb[0].mxu0 %v864
      %v1002 = vpop.f32.mrb[0].mxu0
      %v1003 = vadd.f32 0.0, %v1002
      %v1004 = vpop.f32.mrb[0].mxu0
      %v1005 = vadd.f32 0.0, %v1004
      %v1006 = vpop.f32.mrb[0].mxu0
      %v1007 = vadd.f32 0.0, %v1006
      %v1008 = vpop.f32.mrb[0].mxu0
      %v1009 = vadd.f32 0.0, %v1008
      %1010 = vmatprep.mubr.bf16.mxu0 0
      %1011 = vmatmul.mubr.bf16.gmra.mrb[0].mxu0 %v867
      %v1012 = vpop.f32.mrb[0].mxu0
      %v1013 = vadd.f32 0.0, %v1012
      %v1014 = vpop.f32.mrb[0].mxu0
      %v1015 = vadd.f32 0.0, %v1014
      %v1016 = vpop.f32.mrb[0].mxu0
      %v1017 = vadd.f32 0.0, %v1016
      %v1018 = vpop.f32.mrb[0].mxu0
      %v1019 = vadd.f32 0.0, %v1018
      %1020 = vdwg.mxu0
      %v1021 = vpack.c.bf16 %v917, %v913
      %v1022 = vpack.c.bf16 %v927, %v923
      %v1023 = vpack.c.bf16 %v937, %v933
      %v1024 = vpack.c.bf16 %v947, %v943
      %v1025 = vpack.c.bf16 %v957, %v953
      %v1026 = vpack.c.bf16 %v967, %v963
      %v1027 = vpack.c.bf16 %v977, %v973
      %v1028 = vpack.c.bf16 %v987, %v983
      %v1029 = vpack.c.bf16 %v997, %v993
      %v1030 = vpack.c.bf16 %v1007, %v1003
      %v1031 = vpack.c.bf16 %v1017, %v1013
      %1043 = vrot.lane.b32.xlu0 %v1021, 64
      %v1044 = vpop.permute.xlu0 %1043
      %1045 = vrot.lane.b32.xlu0 %v1022, 64
      %v1046 = vpop.permute.xlu0 %1045
      %1047 = vrot.lane.b32.xlu0 %v1023, 64
      %v1048 = vpop.permute.xlu0 %1047
      %1049 = vrot.lane.b32.xlu0 %v1024, 64
      %v1050 = vpop.permute.xlu0 %1049
      %1051 = vrot.lane.b32.xlu0 %v1025, 64
      %v1052 = vpop.permute.xlu0 %1051
      %1053 = vrot.lane.b32.xlu0 %v1026, 64
      %v1054 = vpop.permute.xlu0 %1053
      %1055 = vrot.lane.b32.xlu0 %v1027, 64
      %v1056 = vpop.permute.xlu0 %1055
      %1057 = vrot.lane.b32.xlu0 %v1028, 64
      %v1058 = vpop.permute.xlu0 %1057
      %1059 = vrot.lane.b32.xlu0 %v1029, 64
      %v1060 = vpop.permute.xlu0 %1059
      %1061 = vrot.lane.b32.xlu0 %v1030, 64
      %v1062 = vpop.permute.xlu0 %1061
      %1063 = vrot.lane.b32.xlu0 %v1031, 64
      %v1064 = vpop.permute.xlu0 %1063
      %vm1065 = vcmask 523264
      %v1067 = vsel %vm1065, %v1021, 0
      %v1070 = vsel %vm1065, %v1022, 0
      %v1073 = vsel %vm1065, %v1023, 0
      %v1076 = vsel %vm1065, %v1024, 0
      %v1079 = vsel %vm1065, %v1025, 0
      %v1082 = vsel %vm1065, %v1026, 0
      %v1085 = vsel %vm1065, %v1027, 0
      %v1088 = vsel %vm1065, %v1028, 0
      %v1091 = vsel %vm1065, %v1029, 0
      %v1094 = vsel %vm1065, %v1030, 0
      %v1097 = vsel %vm1065, %v1031, 0
      %v1100 = vsel %vm1065, %v1044, 0
      %v1103 = vsel %vm1065, %v1046, 0
      %v1106 = vsel %vm1065, %v1048, 0
      %v1109 = vsel %vm1065, %v1050, 0
      %v1112 = vsel %vm1065, %v1052, 0
      %v1115 = vsel %vm1065, %v1054, 0
      %v1118 = vsel %vm1065, %v1056, 0
      %v1121 = vsel %vm1065, %v1058, 0
      %v1124 = vsel %vm1065, %v1060, 0
      %v1127 = vsel %vm1065, %v1062, 0
      %v1130 = vsel %vm1065, %v1064, 0
      %1132 = vmatprep.subr.bf16.mxu0 0
      %1133 = vmatpush1.bf16.xpose.msra.mxu0 %v1100
      %1134 = vmatprep.subr.bf16.mxu0 0
      %1135 = vmatpush1.bf16.xpose.msra.mxu0 %v1103
      %1136 = vmatprep.subr.bf16.mxu0 0
      %1137 = vmatpush1.bf16.xpose.msra.mxu0 %v1106
      %1138 = vmatprep.subr.bf16.mxu0 0
      %1139 = vmatpush1.bf16.xpose.msra.mxu0 %v1109
      %1140 = vmatprep.subr.bf16.mxu0 0
      %1141 = vmatpush1.bf16.xpose.msra.mxu0 %v1112
      %1142 = vmatprep.subr.bf16.mxu0 0
      %1143 = vmatpush1.bf16.xpose.msra.mxu0 %v1115
      %1144 = vmatprep.subr.bf16.mxu0 0
      %1145 = vmatpush1.bf16.xpose.msra.mxu0 %v1118
      %1146 = vmatprep.subr.bf16.mxu0 0
      %1147 = vmatpush1.bf16.xpose.msra.mxu0 %v1121
      %1148 = vmatprep.subr.bf16.mxu0 0
      %1149 = vmatpush1.bf16.xpose.msra.mxu0 %v1124
      %1150 = vmatprep.subr.bf16.mxu0 0
      %1151 = vmatpush1.bf16.xpose.msra.mxu0 %v1127
      %1152 = vmatprep.subr.bf16.mxu0 0
      %1153 = vmatpush1.bf16.xpose.msra.mxu0 %v1130
      %1154 = vmatprep.subr.bf16.mxu0 0
      %1155 = vmatpush1.bf16.xpose.msra.mxu0 0
      %1156 = vmatprep.subr.bf16.mxu0 0
      %1157 = vmatpush1.bf16.xpose.msra.mxu0 0
      %1158 = vmatprep.subr.bf16.mxu0 0
      %1159 = vmatpush1.bf16.xpose.msra.mxu0 0
      %1160 = vmatprep.subr.bf16.mxu0 0
      %1161 = vmatpush1.bf16.xpose.msra.mxu0 0
      %1162 = vmatprep.subr.bf16.mxu0 0
      %1163 = vmatpush1.bf16.xpose.msra.mxu0 0
      %1164 = vmatprep.mubr.bf16.mxu0 0
      %1165 = vmatmul.mubr.bf16.gmra.mrb[0].mxu0 %v1067
      %v1166 = vpop.f32.mrb[0].mxu0
      %v1167 = vadd.f32 0.0, %v1166
      %v1168 = vpop.f32.mrb[0].mxu0
      %v1169 = vadd.f32 0.0, %v1168
      %v1170 = vpop.f32.mrb[0].mxu0
      %v1171 = vadd.f32 0.0, %v1170
      %v1172 = vpop.f32.mrb[0].mxu0
      %v1173 = vadd.f32 0.0, %v1172
      %1174 = vmatprep.mubr.bf16.mxu0 0
      %1175 = vmatmul.mubr.bf16.gmra.mrb[0].mxu0 %v1070
      %v1176 = vpop.f32.mrb[0].mxu0
      %v1177 = vadd.f32 0.0, %v1176
      %v1178 = vpop.f32.mrb[0].mxu0
      %v1179 = vadd.f32 0.0, %v1178
      %v1180 = vpop.f32.mrb[0].mxu0
      %v1181 = vadd.f32 0.0, %v1180
      %v1182 = vpop.f32.mrb[0].mxu0
      %v1183 = vadd.f32 0.0, %v1182
      %1184 = vmatprep.mubr.bf16.mxu0 0
      %1185 = vmatmul.mubr.bf16.gmra.mrb[0].mxu0 %v1073
      %v1186 = vpop.f32.mrb[0].mxu0
      %v1187 = vadd.f32 0.0, %v1186
      %v1188 = vpop.f32.mrb[0].mxu0
      %v1189 = vadd.f32 0.0, %v1188
      %v1190 = vpop.f32.mrb[0].mxu0
      %v1191 = vadd.f32 0.0, %v1190
      %v1192 = vpop.f32.mrb[0].mxu0
      %v1193 = vadd.f32 0.0, %v1192
      %1194 = vmatprep.mubr.bf16.mxu0 0
      %1195 = vmatmul.mubr.bf16.gmra.mrb[0].mxu0 %v1076
      %v1196 = vpop.f32.mrb[0].mxu0
      %v1197 = vadd.f32 0.0, %v1196
      %v1198 = vpop.f32.mrb[0].mxu0
      %v1199 = vadd.f32 0.0, %v1198
      %v1200 = vpop.f32.mrb[0].mxu0
      %v1201 = vadd.f32 0.0, %v1200
      %v1202 = vpop.f32.mrb[0].mxu0
      %v1203 = vadd.f32 0.0, %v1202
      %1204 = vmatprep.mubr.bf16.mxu0 0
      %1205 = vmatmul.mubr.bf16.gmra.mrb[0].mxu0 %v1079
      %v1206 = vpop.f32.mrb[0].mxu0
      %v1207 = vadd.f32 0.0, %v1206
      %v1208 = vpop.f32.mrb[0].mxu0
      %v1209 = vadd.f32 0.0, %v1208
      %v1210 = vpop.f32.mrb[0].mxu0
      %v1211 = vadd.f32 0.0, %v1210
      %v1212 = vpop.f32.mrb[0].mxu0
      %v1213 = vadd.f32 0.0, %v1212
      %1214 = vmatprep.mubr.bf16.mxu0 0
      %1215 = vmatmul.mubr.bf16.gmra.mrb[0].mxu0 %v1082
      %v1216 = vpop.f32.mrb[0].mxu0
      %v1217 = vadd.f32 0.0, %v1216
      %v1218 = vpop.f32.mrb[0].mxu0
      %v1219 = vadd.f32 0.0, %v1218
      %v1220 = vpop.f32.mrb[0].mxu0
      %v1221 = vadd.f32 0.0, %v1220
      %v1222 = vpop.f32.mrb[0].mxu0
      %v1223 = vadd.f32 0.0, %v1222
      %1224 = vmatprep.mubr.bf16.mxu0 0
      %1225 = vmatmul.mubr.bf16.gmra.mrb[0].mxu0 %v1085
      %v1226 = vpop.f32.mrb[0].mxu0
      %v1227 = vadd.f32 0.0, %v1226
      %v1228 = vpop.f32.mrb[0].mxu0
      %v1229 = vadd.f32 0.0, %v1228
      %v1230 = vpop.f32.mrb[0].mxu0
      %v1231 = vadd.f32 0.0, %v1230
      %v1232 = vpop.f32.mrb[0].mxu0
      %v1233 = vadd.f32 0.0, %v1232
      %1234 = vmatprep.mubr.bf16.mxu0 0
      %1235 = vmatmul.mubr.bf16.gmra.mrb[0].mxu0 %v1088
      %v1236 = vpop.f32.mrb[0].mxu0
      %v1237 = vadd.f32 0.0, %v1236
      %v1238 = vpop.f32.mrb[0].mxu0
      %v1239 = vadd.f32 0.0, %v1238
      %v1240 = vpop.f32.mrb[0].mxu0
      %v1241 = vadd.f32 0.0, %v1240
      %v1242 = vpop.f32.mrb[0].mxu0
      %v1243 = vadd.f32 0.0, %v1242
      %1244 = vmatprep.mubr.bf16.mxu0 0
      %1245 = vmatmul.mubr.bf16.gmra.mrb[0].mxu0 %v1091
      %v1246 = vpop.f32.mrb[0].mxu0
      %v1247 = vadd.f32 0.0, %v1246
      %v1248 = vpop.f32.mrb[0].mxu0
      %v1249 = vadd.f32 0.0, %v1248
      %v1250 = vpop.f32.mrb[0].mxu0
      %v1251 = vadd.f32 0.0, %v1250
      %v1252 = vpop.f32.mrb[0].mxu0
      %v1253 = vadd.f32 0.0, %v1252
      %1254 = vmatprep.mubr.bf16.mxu0 0
      %1255 = vmatmul.mubr.bf16.gmra.mrb[0].mxu0 %v1094
      %v1256 = vpop.f32.mrb[0].mxu0
      %v1257 = vadd.f32 0.0, %v1256
      %v1258 = vpop.f32.mrb[0].mxu0
      %v1259 = vadd.f32 0.0, %v1258
      %v1260 = vpop.f32.mrb[0].mxu0
      %v1261 = vadd.f32 0.0, %v1260
      %v1262 = vpop.f32.mrb[0].mxu0
      %v1263 = vadd.f32 0.0, %v1262
      %1264 = vmatprep.mubr.bf16.mxu0 0
      %1265 = vmatmul.mubr.bf16.gmra.mrb[0].mxu0 %v1097
      %v1266 = vpop.f32.mrb[0].mxu0
      %v1267 = vadd.f32 0.0, %v1266
      %v1268 = vpop.f32.mrb[0].mxu0
      %v1269 = vadd.f32 0.0, %v1268
      %v1270 = vpop.f32.mrb[0].mxu0
      %v1271 = vadd.f32 0.0, %v1270
      %v1272 = vpop.f32.mrb[0].mxu0
      %v1273 = vadd.f32 0.0, %v1272
      %1274 = vdwg.mxu0
      %v1275 = vlaneseq
      %v1276 = vand.u32 %v1275, 127
      %v1277 = vadd.s32 %v1276, 128
      %vm1278 = vcmp.lt.s32.totalorder %v1276, 169
      %vm1279 = vcmp.lt.s32.totalorder %v1277, 169
      %v1280 = vsel %vm1278, %v1167, -1e+30
      %v1281 = vsel %vm1279, %v1169, -1e+30
      %v1282 = vsel %vm1278, %v1171, -1e+30
      %v1283 = vsel %vm1279, %v1173, -1e+30
      %v1284 = vsel %vm1278, %v1177, -1e+30
      %v1285 = vsel %vm1279, %v1179, -1e+30
      %v1286 = vsel %vm1278, %v1181, -1e+30
      %v1287 = vsel %vm1279, %v1183, -1e+30
      %v1288 = vsel %vm1278, %v1187, -1e+30
      %v1289 = vsel %vm1279, %v1189, -1e+30
      %v1290 = vsel %vm1278, %v1191, -1e+30
      %v1291 = vsel %vm1279, %v1193, -1e+30
      %v1292 = vsel %vm1278, %v1197, -1e+30
      %v1293 = vsel %vm1279, %v1199, -1e+30
      %v1294 = vsel %vm1278, %v1201, -1e+30
      %v1295 = vsel %vm1279, %v1203, -1e+30
      %v1296 = vsel %vm1278, %v1207, -1e+30
      %v1297 = vsel %vm1279, %v1209, -1e+30
      %v1298 = vsel %vm1278, %v1211, -1e+30
      %v1299 = vsel %vm1279, %v1213, -1e+30
      %v1300 = vsel %vm1278, %v1217, -1e+30
      %v1301 = vsel %vm1279, %v1219, -1e+30
      %v1302 = vsel %vm1278, %v1221, -1e+30
      %v1303 = vsel %vm1279, %v1223, -1e+30
      %v1304 = vsel %vm1278, %v1227, -1e+30
      %v1305 = vsel %vm1279, %v1229, -1e+30
      %v1306 = vsel %vm1278, %v1231, -1e+30
      %v1307 = vsel %vm1279, %v1233, -1e+30
      %v1308 = vsel %vm1278, %v1237, -1e+30
      %v1309 = vsel %vm1279, %v1239, -1e+30
      %v1310 = vsel %vm1278, %v1241, -1e+30
      %v1311 = vsel %vm1279, %v1243, -1e+30
      %v1312 = vsel %vm1278, %v1247, -1e+30
      %v1313 = vsel %vm1279, %v1249, -1e+30
      %v1314 = vsel %vm1278, %v1251, -1e+30
      %v1315 = vsel %vm1279, %v1253, -1e+30
      %v1316 = vsel %vm1278, %v1257, -1e+30
      %v1317 = vsel %vm1279, %v1259, -1e+30
      %v1318 = vsel %vm1278, %v1261, -1e+30
      %v1319 = vsel %vm1279, %v1263, -1e+30
      %v1320 = vsel %vm1278, %v1267, -1e+30
      %v1321 = vsel %vm1279, %v1269, -1e+30
      %v1322 = vsel %vm1278, %v1271, -1e+30
      %v1323 = vsel %vm1279, %v1273, -1e+30
      %vm1324 = vcmask 392192
      %v1325 = vsel %vm1324, %v1281, -inf
      %v1326 = vmax.f32 %v1280, %v1325
      %1327 = vmax.xlane.f32.xlu0 %v1326
      %v1328 = vpop.xlane.xlu0 %1327
      %v1329 = vsel %vm1324, %v1283, -inf
      %v1330 = vmax.f32 %v1282, %v1329
      %1331 = vmax.xlane.f32.xlu0 %v1330
      %v1332 = vpop.xlane.xlu0 %1331
      %v1333 = vsel %vm1324, %v1285, -inf
      %v1334 = vmax.f32 %v1284, %v1333
      %1335 = vmax.xlane.f32.xlu0 %v1334
      %v1336 = vpop.xlane.xlu0 %1335
      %v1337 = vsel %vm1324, %v1287, -inf
      %v1338 = vmax.f32 %v1286, %v1337
      %1339 = vmax.xlane.f32.xlu0 %v1338
      %v1340 = vpop.xlane.xlu0 %1339
      %v1341 = vsel %vm1324, %v1289, -inf
      %v1342 = vmax.f32 %v1288, %v1341
      %1343 = vmax.xlane.f32.xlu0 %v1342
      %v1344 = vpop.xlane.xlu0 %1343
      %v1345 = vsel %vm1324, %v1291, -inf
      %v1346 = vmax.f32 %v1290, %v1345
      %1347 = vmax.xlane.f32.xlu0 %v1346
      %v1348 = vpop.xlane.xlu0 %1347
      %v1349 = vsel %vm1324, %v1293, -inf
      %v1350 = vmax.f32 %v1292, %v1349
      %1351 = vmax.xlane.f32.xlu0 %v1350
      %v1352 = vpop.xlane.xlu0 %1351
      %v1353 = vsel %vm1324, %v1295, -inf
      %v1354 = vmax.f32 %v1294, %v1353
      %1355 = vmax.xlane.f32.xlu0 %v1354
      %v1356 = vpop.xlane.xlu0 %1355
      %v1357 = vsel %vm1324, %v1297, -inf
      %v1358 = vmax.f32 %v1296, %v1357
      %1359 = vmax.xlane.f32.xlu0 %v1358
      %v1360 = vpop.xlane.xlu0 %1359
      %v1361 = vsel %vm1324, %v1299, -inf
      %v1362 = vmax.f32 %v1298, %v1361
      %1363 = vmax.xlane.f32.xlu0 %v1362
      %v1364 = vpop.xlane.xlu0 %1363
      %v1365 = vsel %vm1324, %v1301, -inf
      %v1366 = vmax.f32 %v1300, %v1365
      %1367 = vmax.xlane.f32.xlu0 %v1366
      %v1368 = vpop.xlane.xlu0 %1367
      %v1369 = vsel %vm1324, %v1303, -inf
      %v1370 = vmax.f32 %v1302, %v1369
      %1371 = vmax.xlane.f32.xlu0 %v1370
      %v1372 = vpop.xlane.xlu0 %1371
      %v1373 = vsel %vm1324, %v1305, -inf
      %v1374 = vmax.f32 %v1304, %v1373
      %1375 = vmax.xlane.f32.xlu0 %v1374
      %v1376 = vpop.xlane.xlu0 %1375
      %v1377 = vsel %vm1324, %v1307, -inf
      %v1378 = vmax.f32 %v1306, %v1377
      %1379 = vmax.xlane.f32.xlu0 %v1378
      %v1380 = vpop.xlane.xlu0 %1379
      %v1381 = vsel %vm1324, %v1309, -inf
      %v1382 = vmax.f32 %v1308, %v1381
      %1383 = vmax.xlane.f32.xlu0 %v1382
      %v1384 = vpop.xlane.xlu0 %1383
      %v1385 = vsel %vm1324, %v1311, -inf
      %v1386 = vmax.f32 %v1310, %v1385
      %1387 = vmax.xlane.f32.xlu0 %v1386
      %v1388 = vpop.xlane.xlu0 %1387
      %v1389 = vsel %vm1324, %v1313, -inf
      %v1390 = vmax.f32 %v1312, %v1389
      %1391 = vmax.xlane.f32.xlu0 %v1390
      %v1392 = vpop.xlane.xlu0 %1391
      %v1393 = vsel %vm1324, %v1315, -inf
      %v1394 = vmax.f32 %v1314, %v1393
      %1395 = vmax.xlane.f32.xlu0 %v1394
      %v1396 = vpop.xlane.xlu0 %1395
      %v1397 = vsel %vm1324, %v1317, -inf
      %v1398 = vmax.f32 %v1316, %v1397
      %1399 = vmax.xlane.f32.xlu0 %v1398
      %v1400 = vpop.xlane.xlu0 %1399
      %v1401 = vsel %vm1324, %v1319, -inf
      %v1402 = vmax.f32 %v1318, %v1401
      %1403 = vmax.xlane.f32.xlu0 %v1402
      %v1404 = vpop.xlane.xlu0 %1403
      %v1405 = vsel %vm1324, %v1321, -inf
      %v1406 = vmax.f32 %v1320, %v1405
      %1407 = vmax.xlane.f32.xlu0 %v1406
      %v1408 = vpop.xlane.xlu0 %1407
      %v1409 = vsel %vm1324, %v1323, -inf
      %v1410 = vmax.f32 %v1322, %v1409
      %1411 = vmax.xlane.f32.xlu0 %v1410
      %v1412 = vpop.xlane.xlu0 %1411
      %v1413 = vsub.f32 %v1280, %v1328
      %v1414 = vsub.f32 %v1281, %v1328
      %v1415 = vsub.f32 %v1282, %v1332
      %v1416 = vsub.f32 %v1283, %v1332
      %v1417 = vsub.f32 %v1284, %v1336
      %v1418 = vsub.f32 %v1285, %v1336
      %v1419 = vsub.f32 %v1286, %v1340
      %v1420 = vsub.f32 %v1287, %v1340
      %v1421 = vsub.f32 %v1288, %v1344
      %v1422 = vsub.f32 %v1289, %v1344
      %v1423 = vsub.f32 %v1290, %v1348
      %v1424 = vsub.f32 %v1291, %v1348
      %v1425 = vsub.f32 %v1292, %v1352
      %v1426 = vsub.f32 %v1293, %v1352
      %v1427 = vsub.f32 %v1294, %v1356
      %v1428 = vsub.f32 %v1295, %v1356
      %v1429 = vsub.f32 %v1296, %v1360
      %v1430 = vsub.f32 %v1297, %v1360
      %v1431 = vsub.f32 %v1298, %v1364
      %v1432 = vsub.f32 %v1299, %v1364
      %v1433 = vsub.f32 %v1300, %v1368
      %v1434 = vsub.f32 %v1301, %v1368
      %v1435 = vsub.f32 %v1302, %v1372
      %v1436 = vsub.f32 %v1303, %v1372
      %v1437 = vsub.f32 %v1304, %v1376
      %v1438 = vsub.f32 %v1305, %v1376
      %v1439 = vsub.f32 %v1306, %v1380
      %v1440 = vsub.f32 %v1307, %v1380
      %v1441 = vsub.f32 %v1308, %v1384
      %v1442 = vsub.f32 %v1309, %v1384
      %v1443 = vsub.f32 %v1310, %v1388
      %v1444 = vsub.f32 %v1311, %v1388
      %v1445 = vsub.f32 %v1312, %v1392
      %v1446 = vsub.f32 %v1313, %v1392
      %v1447 = vsub.f32 %v1314, %v1396
      %v1448 = vsub.f32 %v1315, %v1396
      %v1449 = vsub.f32 %v1316, %v1400
      %v1450 = vsub.f32 %v1317, %v1400
      %v1451 = vsub.f32 %v1318, %v1404
      %v1452 = vsub.f32 %v1319, %v1404
      %v1453 = vsub.f32 %v1320, %v1408
      %v1454 = vsub.f32 %v1321, %v1408
      %v1455 = vsub.f32 %v1322, %v1412
      %v1456 = vsub.f32 %v1323, %v1412
      %v1457 = vmul.f32 %v1413, 1.442695
      %v1458 = vpow.pop %v1457
      %v1459 = vmul.f32 %v1414, 1.442695
      %v1460 = vpow.pop %v1459
      %v1461 = vmul.f32 %v1415, 1.442695
      %v1462 = vpow.pop %v1461
      %v1463 = vmul.f32 %v1416, 1.442695
      %v1464 = vpow.pop %v1463
      %v1465 = vmul.f32 %v1417, 1.442695
      %v1466 = vpow.pop %v1465
      %v1467 = vmul.f32 %v1418, 1.442695
      %v1468 = vpow.pop %v1467
      %v1469 = vmul.f32 %v1419, 1.442695
      %v1470 = vpow.pop %v1469
      %v1471 = vmul.f32 %v1420, 1.442695
      %v1472 = vpow.pop %v1471
      %v1473 = vmul.f32 %v1421, 1.442695
      %v1474 = vpow.pop %v1473
      %v1475 = vmul.f32 %v1422, 1.442695
      %v1476 = vpow.pop %v1475
      %v1477 = vmul.f32 %v1423, 1.442695
      %v1478 = vpow.pop %v1477
      %v1479 = vmul.f32 %v1424, 1.442695
      %v1480 = vpow.pop %v1479
      %v1481 = vmul.f32 %v1425, 1.442695
      %v1482 = vpow.pop %v1481
      %v1483 = vmul.f32 %v1426, 1.442695
      %v1484 = vpow.pop %v1483
      %v1485 = vmul.f32 %v1427, 1.442695
      %v1486 = vpow.pop %v1485
      %v1487 = vmul.f32 %v1428, 1.442695
      %v1488 = vpow.pop %v1487
      %v1489 = vmul.f32 %v1429, 1.442695
      %v1490 = vpow.pop %v1489
      %v1491 = vmul.f32 %v1430, 1.442695
      %v1492 = vpow.pop %v1491
      %v1493 = vmul.f32 %v1431, 1.442695
      %v1494 = vpow.pop %v1493
      %v1495 = vmul.f32 %v1432, 1.442695
      %v1496 = vpow.pop %v1495
      %v1497 = vmul.f32 %v1433, 1.442695
      %v1498 = vpow.pop %v1497
      %v1499 = vmul.f32 %v1434, 1.442695
      %v1500 = vpow.pop %v1499
      %v1501 = vmul.f32 %v1435, 1.442695
      %v1502 = vpow.pop %v1501
      %v1503 = vmul.f32 %v1436, 1.442695
      %v1504 = vpow.pop %v1503
      %v1505 = vmul.f32 %v1437, 1.442695
      %v1506 = vpow.pop %v1505
      %v1507 = vmul.f32 %v1438, 1.442695
      %v1508 = vpow.pop %v1507
      %v1509 = vmul.f32 %v1439, 1.442695
      %v1510 = vpow.pop %v1509
      %v1511 = vmul.f32 %v1440, 1.442695
      %v1512 = vpow.pop %v1511
      %v1513 = vmul.f32 %v1441, 1.442695
      %v1514 = vpow.pop %v1513
      %v1515 = vmul.f32 %v1442, 1.442695
      %v1516 = vpow.pop %v1515
      %v1517 = vmul.f32 %v1443, 1.442695
      %v1518 = vpow.pop %v1517
      %v1519 = vmul.f32 %v1444, 1.442695
      %v1520 = vpow.pop %v1519
      %v1521 = vmul.f32 %v1445, 1.442695
      %v1522 = vpow.pop %v1521
      %v1523 = vmul.f32 %v1446, 1.442695
      %v1524 = vpow.pop %v1523
      %v1525 = vmul.f32 %v1447, 1.442695
      %v1526 = vpow.pop %v1525
      %v1527 = vmul.f32 %v1448, 1.442695
      %v1528 = vpow.pop %v1527
      %v1529 = vmul.f32 %v1449, 1.442695
      %v1530 = vpow.pop %v1529
      %v1531 = vmul.f32 %v1450, 1.442695
      %v1532 = vpow.pop %v1531
      %v1533 = vmul.f32 %v1451, 1.442695
      %v1534 = vpow.pop %v1533
      %v1535 = vmul.f32 %v1452, 1.442695
      %v1536 = vpow.pop %v1535
      %v1537 = vmul.f32 %v1453, 1.442695
      %v1538 = vpow.pop %v1537
      %v1539 = vmul.f32 %v1454, 1.442695
      %v1540 = vpow.pop %v1539
      %v1541 = vmul.f32 %v1455, 1.442695
      %v1542 = vpow.pop %v1541
      %v1543 = vmul.f32 %v1456, 1.442695
      %v1544 = vpow.pop %v1543
      %v1545 = vsel %vm1324, %v1460, 0.0
      %v1546 = vadd.f32 %v1458, %v1545
      %1547 = vadd.xlane.f32.xlu0 %v1546
      %v1548 = vpop.xlane.xlu0 %1547
      %v1549 = vsel %vm1324, %v1464, 0.0
      %v1550 = vadd.f32 %v1462, %v1549
      %1551 = vadd.xlane.f32.xlu0 %v1550
      %v1552 = vpop.xlane.xlu0 %1551
      %v1553 = vsel %vm1324, %v1468, 0.0
      %v1554 = vadd.f32 %v1466, %v1553
      %1555 = vadd.xlane.f32.xlu0 %v1554
      %v1556 = vpop.xlane.xlu0 %1555
      %v1557 = vsel %vm1324, %v1472, 0.0
      %v1558 = vadd.f32 %v1470, %v1557
      %1559 = vadd.xlane.f32.xlu0 %v1558
      %v1560 = vpop.xlane.xlu0 %1559
      %v1561 = vsel %vm1324, %v1476, 0.0
      %v1562 = vadd.f32 %v1474, %v1561
      %1563 = vadd.xlane.f32.xlu0 %v1562
      %v1564 = vpop.xlane.xlu0 %1563
      %v1565 = vsel %vm1324, %v1480, 0.0
      %v1566 = vadd.f32 %v1478, %v1565
      %1567 = vadd.xlane.f32.xlu0 %v1566
      %v1568 = vpop.xlane.xlu0 %1567
      %v1569 = vsel %vm1324, %v1484, 0.0
      %v1570 = vadd.f32 %v1482, %v1569
      %1571 = vadd.xlane.f32.xlu0 %v1570
      %v1572 = vpop.xlane.xlu0 %1571
      %v1573 = vsel %vm1324, %v1488, 0.0
      %v1574 = vadd.f32 %v1486, %v1573
      %1575 = vadd.xlane.f32.xlu0 %v1574
      %v1576 = vpop.xlane.xlu0 %1575
      %v1577 = vsel %vm1324, %v1492, 0.0
      %v1578 = vadd.f32 %v1490, %v1577
      %1579 = vadd.xlane.f32.xlu0 %v1578
      %v1580 = vpop.xlane.xlu0 %1579
      %v1581 = vsel %vm1324, %v1496, 0.0
      %v1582 = vadd.f32 %v1494, %v1581
      %1583 = vadd.xlane.f32.xlu0 %v1582
      %v1584 = vpop.xlane.xlu0 %1583
      %v1585 = vsel %vm1324, %v1500, 0.0
      %v1586 = vadd.f32 %v1498, %v1585
      %1587 = vadd.xlane.f32.xlu0 %v1586
      %v1588 = vpop.xlane.xlu0 %1587
      %v1589 = vsel %vm1324, %v1504, 0.0
      %v1590 = vadd.f32 %v1502, %v1589
      %1591 = vadd.xlane.f32.xlu0 %v1590
      %v1592 = vpop.xlane.xlu0 %1591
      %v1593 = vsel %vm1324, %v1508, 0.0
      %v1594 = vadd.f32 %v1506, %v1593
      %1595 = vadd.xlane.f32.xlu0 %v1594
      %v1596 = vpop.xlane.xlu0 %1595
      %v1597 = vsel %vm1324, %v1512, 0.0
      %v1598 = vadd.f32 %v1510, %v1597
      %1599 = vadd.xlane.f32.xlu0 %v1598
      %v1600 = vpop.xlane.xlu0 %1599
      %v1601 = vsel %vm1324, %v1516, 0.0
      %v1602 = vadd.f32 %v1514, %v1601
      %1603 = vadd.xlane.f32.xlu0 %v1602
      %v1604 = vpop.xlane.xlu0 %1603
      %v1605 = vsel %vm1324, %v1520, 0.0
      %v1606 = vadd.f32 %v1518, %v1605
      %1607 = vadd.xlane.f32.xlu0 %v1606
      %v1608 = vpop.xlane.xlu0 %1607
      %v1609 = vsel %vm1324, %v1524, 0.0
      %v1610 = vadd.f32 %v1522, %v1609
      %1611 = vadd.xlane.f32.xlu0 %v1610
      %v1612 = vpop.xlane.xlu0 %1611
      %v1613 = vsel %vm1324, %v1528, 0.0
      %v1614 = vadd.f32 %v1526, %v1613
      %1615 = vadd.xlane.f32.xlu0 %v1614
      %v1616 = vpop.xlane.xlu0 %1615
      %v1617 = vsel %vm1324, %v1532, 0.0
      %v1618 = vadd.f32 %v1530, %v1617
      %1619 = vadd.xlane.f32.xlu0 %v1618
      %v1620 = vpop.xlane.xlu0 %1619
      %v1621 = vsel %vm1324, %v1536, 0.0
      %v1622 = vadd.f32 %v1534, %v1621
      %1623 = vadd.xlane.f32.xlu0 %v1622
      %v1624 = vpop.xlane.xlu0 %1623
      %v1625 = vsel %vm1324, %v1540, 0.0
      %v1626 = vadd.f32 %v1538, %v1625
      %1627 = vadd.xlane.f32.xlu0 %v1626
      %v1628 = vpop.xlane.xlu0 %1627
      %v1629 = vsel %vm1324, %v1544, 0.0
      %v1630 = vadd.f32 %v1542, %v1629
      %1631 = vadd.xlane.f32.xlu0 %v1630
      %v1632 = vpop.xlane.xlu0 %1631
      %v1633 = vrcp.pop %v1548
      %v1634 = vrcp.pop %v1552
      %v1635 = vrcp.pop %v1556
      %v1636 = vrcp.pop %v1560
      %v1637 = vrcp.pop %v1564
      %v1638 = vrcp.pop %v1568
      %v1639 = vrcp.pop %v1572
      %v1640 = vrcp.pop %v1576
      %v1641 = vrcp.pop %v1580
      %v1642 = vrcp.pop %v1584
      %v1643 = vrcp.pop %v1588
      %v1644 = vrcp.pop %v1592
      %v1645 = vrcp.pop %v1596
      %v1646 = vrcp.pop %v1600
      %v1647 = vrcp.pop %v1604
      %v1648 = vrcp.pop %v1608
      %v1649 = vrcp.pop %v1612
      %v1650 = vrcp.pop %v1616
      %v1651 = vrcp.pop %v1620
      %v1652 = vrcp.pop %v1624
      %v1653 = vrcp.pop %v1628
      %v1654 = vrcp.pop %v1632
      %v1655 = vmul.f32 %v1458, %v1633
      %v1656 = vmul.f32 %v1460, %v1633
      %v1657 = vmul.f32 %v1462, %v1634
      %v1658 = vmul.f32 %v1464, %v1634
      %v1659 = vmul.f32 %v1466, %v1635
      %v1660 = vmul.f32 %v1468, %v1635
      %v1661 = vmul.f32 %v1470, %v1636
      %v1662 = vmul.f32 %v1472, %v1636
      %v1663 = vmul.f32 %v1474, %v1637
      %v1664 = vmul.f32 %v1476, %v1637
      %v1665 = vmul.f32 %v1478, %v1638
      %v1666 = vmul.f32 %v1480, %v1638
      %v1667 = vmul.f32 %v1482, %v1639
      %v1668 = vmul.f32 %v1484, %v1639
      %v1669 = vmul.f32 %v1486, %v1640
      %v1670 = vmul.f32 %v1488, %v1640
      %v1671 = vmul.f32 %v1490, %v1641
      %v1672 = vmul.f32 %v1492, %v1641
      %v1673 = vmul.f32 %v1494, %v1642
      %v1674 = vmul.f32 %v1496, %v1642
      %v1675 = vmul.f32 %v1498, %v1643
      %v1676 = vmul.f32 %v1500, %v1643
      %v1677 = vmul.f32 %v1502, %v1644
      %v1678 = vmul.f32 %v1504, %v1644
      %v1679 = vmul.f32 %v1506, %v1645
      %v1680 = vmul.f32 %v1508, %v1645
      %v1681 = vmul.f32 %v1510, %v1646
      %v1682 = vmul.f32 %v1512, %v1646
      %v1683 = vmul.f32 %v1514, %v1647
      %v1684 = vmul.f32 %v1516, %v1647
      %v1685 = vmul.f32 %v1518, %v1648
      %v1686 = vmul.f32 %v1520, %v1648
      %v1687 = vmul.f32 %v1522, %v1649
      %v1688 = vmul.f32 %v1524, %v1649
      %v1689 = vmul.f32 %v1526, %v1650
      %v1690 = vmul.f32 %v1528, %v1650
      %v1691 = vmul.f32 %v1530, %v1651
      %v1692 = vmul.f32 %v1532, %v1651
      %v1693 = vmul.f32 %v1534, %v1652
      %v1694 = vmul.f32 %v1536, %v1652
      %v1695 = vmul.f32 %v1538, %v1653
      %v1696 = vmul.f32 %v1540, %v1653
      %v1697 = vmul.f32 %v1542, %v1654
      %v1698 = vmul.f32 %v1544, %v1654
      %v1699 = vpack.c.bf16 %v1657, %v1655
      %v1700 = vpack.c.bf16 %v1658, %v1656
      %v1701 = vpack.c.bf16 %v1661, %v1659
      %v1702 = vpack.c.bf16 %v1662, %v1660
      %v1703 = vpack.c.bf16 %v1665, %v1663
      %v1704 = vpack.c.bf16 %v1666, %v1664
      %v1705 = vpack.c.bf16 %v1669, %v1667
      %v1706 = vpack.c.bf16 %v1670, %v1668
      %v1707 = vpack.c.bf16 %v1673, %v1671
      %v1708 = vpack.c.bf16 %v1674, %v1672
      %v1709 = vpack.c.bf16 %v1677, %v1675
      %v1710 = vpack.c.bf16 %v1678, %v1676
      %v1711 = vpack.c.bf16 %v1681, %v1679
      %v1712 = vpack.c.bf16 %v1682, %v1680
      %v1713 = vpack.c.bf16 %v1685, %v1683
      %v1714 = vpack.c.bf16 %v1686, %v1684
      %v1715 = vpack.c.bf16 %v1689, %v1687
      %v1716 = vpack.c.bf16 %v1690, %v1688
      %v1717 = vpack.c.bf16 %v1693, %v1691
      %v1718 = vpack.c.bf16 %v1694, %v1692
      %v1719 = vpack.c.bf16 %v1697, %v1695
      %v1720 = vpack.c.bf16 %v1698, %v1696
      %v1721 = vpack.c.bf16 %v919, %v915
      %v1722 = vpack.c.bf16 %v929, %v925
      %v1723 = vpack.c.bf16 %v939, %v935
      %v1724 = vpack.c.bf16 %v949, %v945
      %v1725 = vpack.c.bf16 %v959, %v955
      %v1726 = vpack.c.bf16 %v969, %v965
      %v1727 = vpack.c.bf16 %v979, %v975
      %v1728 = vpack.c.bf16 %v989, %v985
      %v1729 = vpack.c.bf16 %v999, %v995
      %v1730 = vpack.c.bf16 %v1009, %v1005
      %v1731 = vpack.c.bf16 %v1019, %v1015
      %v1733 = vsel %vm1324, %v1700, 0
      %v1736 = vsel %vm1324, %v1702, 0
      %v1739 = vsel %vm1324, %v1704, 0
      %v1742 = vsel %vm1324, %v1706, 0
      %v1745 = vsel %vm1324, %v1708, 0
      %v1748 = vsel %vm1324, %v1710, 0
      %v1751 = vsel %vm1324, %v1712, 0
      %v1754 = vsel %vm1324, %v1714, 0
      %v1757 = vsel %vm1324, %v1716, 0
      %v1760 = vsel %vm1324, %v1718, 0
      %v1763 = vsel %vm1324, %v1720, 0
      %1765 = vmatprep.subr.bf16.mxu0 0
      %1766 = vmatpush1.bf16.msra.mxu0 %v1721
      %1767 = vmatprep.subr.bf16.mxu0 0
      %1768 = vmatpush1.bf16.msra.mxu0 %v1722
      %1769 = vmatprep.subr.bf16.mxu0 0
      %1770 = vmatpush1.bf16.msra.mxu0 %v1723
      %1771 = vmatprep.subr.bf16.mxu0 0
      %1772 = vmatpush1.bf16.msra.mxu0 %v1724
      %1773 = vmatprep.subr.bf16.mxu0 0
      %1774 = vmatpush1.bf16.msra.mxu0 %v1725
      %1775 = vmatprep.subr.bf16.mxu0 0
      %1776 = vmatpush1.bf16.msra.mxu0 %v1726
      %1777 = vmatprep.subr.bf16.mxu0 0
      %1778 = vmatpush1.bf16.msra.mxu0 %v1727
      %1779 = vmatprep.subr.bf16.mxu0 0
      %1780 = vmatpush1.bf16.msra.mxu0 %v1728
      %1781 = vmatprep.subr.bf16.mxu0 0
      %1782 = vmatpush1.bf16.msra.mxu0 %v1729
      %1783 = vmatprep.subr.bf16.mxu0 0
      %1784 = vmatpush1.bf16.msra.mxu0 %v1730
      %1785 = vmatprep.subr.bf16.mxu0 0
      %1786 = vmatpush1.bf16.msra.mxu0 %v1731
      %1787 = vmatprep.subr.bf16.mxu0 0
      %1788 = vmatpush1.bf16.msra.mxu0 0
      %1789 = vmatprep.subr.bf16.mxu0 0
      %1790 = vmatpush1.bf16.msra.mxu0 0
      %1791 = vmatprep.subr.bf16.mxu0 0
      %1792 = vmatpush1.bf16.msra.mxu0 0
      %1793 = vmatprep.subr.bf16.mxu0 0
      %1794 = vmatpush1.bf16.msra.mxu0 0
      %1795 = vmatprep.subr.bf16.mxu0 0
      %1796 = vmatpush1.bf16.msra.mxu0 0
      %1797 = vmatprep.mubr.bf16.mxu0 %v1733
      %1798 = vmatmul.mubr.bf16.gmra.mrb[0].mxu0 %v1699
      %v1799 = vpop.f32.mrb[0].mxu0
      %v1800 = vadd.f32 0.0, %v1799
      %v1801 = vpop.f32.mrb[0].mxu0
      %v1802 = vpop.f32.mrb[0].mxu0
      %v1803 = vadd.f32 0.0, %v1802
      %v1804 = vpop.f32.mrb[0].mxu0
      %1805 = vmatprep.mubr.bf16.mxu0 %v1736
      %1806 = vmatmul.mubr.bf16.gmra.mrb[0].mxu0 %v1701
      %v1807 = vpop.f32.mrb[0].mxu0
      %v1808 = vadd.f32 0.0, %v1807
      %v1809 = vpop.f32.mrb[0].mxu0
      %v1810 = vpop.f32.mrb[0].mxu0
      %v1811 = vadd.f32 0.0, %v1810
      %v1812 = vpop.f32.mrb[0].mxu0
      %1813 = vmatprep.mubr.bf16.mxu0 %v1739
      %1814 = vmatmul.mubr.bf16.gmra.mrb[0].mxu0 %v1703
      %v1815 = vpop.f32.mrb[0].mxu0
      %v1816 = vadd.f32 0.0, %v1815
      %v1817 = vpop.f32.mrb[0].mxu0
      %v1818 = vpop.f32.mrb[0].mxu0
      %v1819 = vadd.f32 0.0, %v1818
      %v1820 = vpop.f32.mrb[0].mxu0
      %1821 = vmatprep.mubr.bf16.mxu0 %v1742
      %1822 = vmatmul.mubr.bf16.gmra.mrb[0].mxu0 %v1705
      %v1823 = vpop.f32.mrb[0].mxu0
      %v1824 = vadd.f32 0.0, %v1823
      %v1825 = vpop.f32.mrb[0].mxu0
      %v1826 = vpop.f32.mrb[0].mxu0
      %v1827 = vadd.f32 0.0, %v1826
      %v1828 = vpop.f32.mrb[0].mxu0
      %1829 = vmatprep.mubr.bf16.mxu0 %v1745
      %1830 = vmatmul.mubr.bf16.gmra.mrb[0].mxu0 %v1707
      %v1831 = vpop.f32.mrb[0].mxu0
      %v1832 = vadd.f32 0.0, %v1831
      %v1833 = vpop.f32.mrb[0].mxu0
      %v1834 = vpop.f32.mrb[0].mxu0
      %v1835 = vadd.f32 0.0, %v1834
      %v1836 = vpop.f32.mrb[0].mxu0
      %1837 = vmatprep.mubr.bf16.mxu0 %v1748
      %1838 = vmatmul.mubr.bf16.gmra.mrb[0].mxu0 %v1709
      %v1839 = vpop.f32.mrb[0].mxu0
      %v1840 = vadd.f32 0.0, %v1839
      %v1841 = vpop.f32.mrb[0].mxu0
      %v1842 = vpop.f32.mrb[0].mxu0
      %v1843 = vadd.f32 0.0, %v1842
      %v1844 = vpop.f32.mrb[0].mxu0
      %1845 = vmatprep.mubr.bf16.mxu0 %v1751
      %1846 = vmatmul.mubr.bf16.gmra.mrb[0].mxu0 %v1711
      %v1847 = vpop.f32.mrb[0].mxu0
      %v1848 = vadd.f32 0.0, %v1847
      %v1849 = vpop.f32.mrb[0].mxu0
      %v1850 = vpop.f32.mrb[0].mxu0
      %v1851 = vadd.f32 0.0, %v1850
      %v1852 = vpop.f32.mrb[0].mxu0
      %1853 = vmatprep.mubr.bf16.mxu0 %v1754
      %1854 = vmatmul.mubr.bf16.gmra.mrb[0].mxu0 %v1713
      %v1855 = vpop.f32.mrb[0].mxu0
      %v1856 = vadd.f32 0.0, %v1855
      %v1857 = vpop.f32.mrb[0].mxu0
      %v1858 = vpop.f32.mrb[0].mxu0
      %v1859 = vadd.f32 0.0, %v1858
      %v1860 = vpop.f32.mrb[0].mxu0
      %1861 = vmatprep.mubr.bf16.mxu0 %v1757
      %1862 = vmatmul.mubr.bf16.gmra.mrb[0].mxu0 %v1715
      %v1863 = vpop.f32.mrb[0].mxu0
      %v1864 = vadd.f32 0.0, %v1863
      %v1865 = vpop.f32.mrb[0].mxu0
      %v1866 = vpop.f32.mrb[0].mxu0
      %v1867 = vadd.f32 0.0, %v1866
      %v1868 = vpop.f32.mrb[0].mxu0
      %1869 = vmatprep.mubr.bf16.mxu0 %v1760
      %1870 = vmatmul.mubr.bf16.gmra.mrb[0].mxu0 %v1717
      %v1871 = vpop.f32.mrb[0].mxu0
      %v1872 = vadd.f32 0.0, %v1871
      %v1873 = vpop.f32.mrb[0].mxu0
      %v1874 = vpop.f32.mrb[0].mxu0
      %v1875 = vadd.f32 0.0, %v1874
      %v1876 = vpop.f32.mrb[0].mxu0
      %1877 = vmatprep.mubr.bf16.mxu0 %v1763
      %1878 = vmatmul.mubr.bf16.gmra.mrb[0].mxu0 %v1719
      %v1879 = vpop.f32.mrb[0].mxu0
      %v1880 = vadd.f32 0.0, %v1879
      %v1881 = vpop.f32.mrb[0].mxu0
      %v1882 = vpop.f32.mrb[0].mxu0
      %v1883 = vadd.f32 0.0, %v1882
      %v1884 = vpop.f32.mrb[0].mxu0
      %1885 = vdwg.mxu0
      %v1886 = vpack.c.bf16 %v1803, %v1800
      %v1887 = vpack.c.bf16 %v1811, %v1808
      %v1888 = vpack.c.bf16 %v1819, %v1816
      %v1889 = vpack.c.bf16 %v1827, %v1824
      %v1890 = vpack.c.bf16 %v1835, %v1832
      %v1891 = vpack.c.bf16 %v1843, %v1840
      %v1892 = vpack.c.bf16 %v1851, %v1848
      %v1893 = vpack.c.bf16 %v1859, %v1856
      %v1894 = vpack.c.bf16 %v1867, %v1864
      %v1895 = vpack.c.bf16 %v1875, %v1872
      %v1896 = vpack.c.bf16 %v1883, %v1880
      %v1897 = vld [vmem:[%s4] sm:$0xf]
      %v1898 = vld [vmem:[%s4 + $0x4] sm:$0xf]
      %v1899 = vld [vmem:[%s4 + $0x8] sm:$0xf]
      %v1900 = vld [vmem:[%s4 + $0xc] sm:$0xf]
      %v1901 = vld [vmem:[%s4 + $0x10] sm:$0xf]
      %v1902 = vld [vmem:[%s4 + $0x14] sm:$0xf]
      %v1903 = vld [vmem:[%s4 + $0x18] sm:$0xf]
      %v1904 = vld [vmem:[%s4 + $0x1c] sm:$0xf]
      %v1905 = vld [vmem:[%s5] sm:$0x1]
      %v1907 = vlaneseq
      %v1908 = vshrl.u32 %v1907, 7
      %v1909 = vsub.s32 0, %v1908
      %v1910 = vrot.slane %v1905, %v1909
      %v1920 = vunpack.c.l.b16 %v1897
      %v1921 = vunpack.c.l.b16 %v1898
      %v1922 = vunpack.c.l.b16 %v1899
      %v1923 = vunpack.c.l.b16 %v1900
      %v1924 = vunpack.c.l.b16 %v1901
      %v1925 = vunpack.c.l.b16 %v1902
      %v1926 = vunpack.c.l.b16 %v1903
      %v1927 = vunpack.c.l.b16 %v1904
      %v1928 = vpack.c.b16 %v1921, %v1920
      %v1929 = vpack.c.b16 %v1923, %v1922
      %v1930 = vpack.c.b16 %v1925, %v1924
      %v1931 = vpack.c.b16 %v1927, %v1926
      %v1937 = vsel %vm1065, %v1886, 0
      %v1940 = vsel %vm1065, %v1887, 0
      %v1943 = vsel %vm1065, %v1888, 0
      %v1946 = vsel %vm1065, %v1889, 0
      %v1949 = vsel %vm1065, %v1890, 0
      %v1952 = vsel %vm1065, %v1891, 0
      %v1955 = vsel %vm1065, %v1892, 0
      %v1958 = vsel %vm1065, %v1893, 0
      %v1961 = vsel %vm1065, %v1894, 0
      %v1964 = vsel %vm1065, %v1895, 0
      %v1967 = vsel %vm1065, %v1896, 0
      %1969 = vmatprep.subr.bf16.mxu0 0
      %1970 = vmatpush1.bf16.msra.mxu0 %v1928
      %1971 = vmatprep.subr.bf16.mxu0 0
      %1972 = vmatpush1.bf16.msra.mxu0 %v1929
      %1973 = vmatprep.subr.bf16.mxu0 0
      %1974 = vmatpush1.bf16.msra.mxu0 %v1930
      %1975 = vmatprep.subr.bf16.mxu0 0
      %1976 = vmatpush1.bf16.msra.mxu0 %v1931
      %1977 = vmatprep.subr.bf16.mxu0 0
      %1978 = vmatpush1.bf16.msra.mxu0 0
      %1979 = vmatprep.subr.bf16.mxu0 0
      %1980 = vmatpush1.bf16.msra.mxu0 0
      %1981 = vmatprep.subr.bf16.mxu0 0
      %1982 = vmatpush1.bf16.msra.mxu0 0
      %1983 = vmatprep.subr.bf16.mxu0 0
      %1984 = vmatpush1.bf16.msra.mxu0 0
      %1985 = vmatprep.subr.bf16.mxu0 0
      %1986 = vmatpush1.bf16.msra.mxu0 0
      %1987 = vmatprep.subr.bf16.mxu0 0
      %1988 = vmatpush1.bf16.msra.mxu0 0
      %1989 = vmatprep.subr.bf16.mxu0 0
      %1990 = vmatpush1.bf16.msra.mxu0 0
      %1991 = vmatprep.subr.bf16.mxu0 0
      %1992 = vmatpush1.bf16.msra.mxu0 0
      %1993 = vmatprep.subr.bf16.mxu0 0
      %1994 = vmatpush1.bf16.msra.mxu0 0
      %1995 = vmatprep.subr.bf16.mxu0 0
      %1996 = vmatpush1.bf16.msra.mxu0 0
      %1997 = vmatprep.subr.bf16.mxu0 0
      %1998 = vmatpush1.bf16.msra.mxu0 0
      %1999 = vmatprep.subr.bf16.mxu0 0
      %2000 = vmatpush1.bf16.msra.mxu0 0
      %2001 = vmatprep.mubr.bf16.mxu0 0
      %2002 = vmatmul.mubr.bf16.gmra.mrb[0].mxu0 %v1937
      %v2003 = vpop.f32.mrb[0].mxu0
      %v2004 = vadd.f32 %v1910, %v2003
      %v2005 = vpop.f32.mrb[0].mxu0
      %v2006 = vpop.f32.mrb[0].mxu0
      %v2007 = vadd.f32 %v1910, %v2006
      %v2008 = vpop.f32.mrb[0].mxu0
      %2009 = vmatprep.mubr.bf16.mxu0 0
      %2010 = vmatmul.mubr.bf16.gmra.mrb[0].mxu0 %v1940
      %v2011 = vpop.f32.mrb[0].mxu0
      %v2012 = vadd.f32 %v1910, %v2011
      %v2013 = vpop.f32.mrb[0].mxu0
      %v2014 = vpop.f32.mrb[0].mxu0
      %v2015 = vadd.f32 %v1910, %v2014
      %v2016 = vpop.f32.mrb[0].mxu0
      %2017 = vmatprep.mubr.bf16.mxu0 0
      %2018 = vmatmul.mubr.bf16.gmra.mrb[0].mxu0 %v1943
      %v2019 = vpop.f32.mrb[0].mxu0
      %v2020 = vadd.f32 %v1910, %v2019
      %v2021 = vpop.f32.mrb[0].mxu0
      %v2022 = vpop.f32.mrb[0].mxu0
      %v2023 = vadd.f32 %v1910, %v2022
      %v2024 = vpop.f32.mrb[0].mxu0
      %2025 = vmatprep.mubr.bf16.mxu0 0
      %2026 = vmatmul.mubr.bf16.gmra.mrb[0].mxu0 %v1946
      %v2027 = vpop.f32.mrb[0].mxu0
      %v2028 = vadd.f32 %v1910, %v2027
      %v2029 = vpop.f32.mrb[0].mxu0
      %v2030 = vpop.f32.mrb[0].mxu0
      %v2031 = vadd.f32 %v1910, %v2030
      %v2032 = vpop.f32.mrb[0].mxu0
      %2033 = vmatprep.mubr.bf16.mxu0 0
      %2034 = vmatmul.mubr.bf16.gmra.mrb[0].mxu0 %v1949
      %v2035 = vpop.f32.mrb[0].mxu0
      %v2036 = vadd.f32 %v1910, %v2035
      %v2037 = vpop.f32.mrb[0].mxu0
      %v2038 = vpop.f32.mrb[0].mxu0
      %v2039 = vadd.f32 %v1910, %v2038
      %v2040 = vpop.f32.mrb[0].mxu0
      %2041 = vmatprep.mubr.bf16.mxu0 0
      %2042 = vmatmul.mubr.bf16.gmra.mrb[0].mxu0 %v1952
      %v2043 = vpop.f32.mrb[0].mxu0
      %v2044 = vadd.f32 %v1910, %v2043
      %v2045 = vpop.f32.mrb[0].mxu0
      %v2046 = vpop.f32.mrb[0].mxu0
      %v2047 = vadd.f32 %v1910, %v2046
      %v2048 = vpop.f32.mrb[0].mxu0
      %2049 = vmatprep.mubr.bf16.mxu0 0
      %2050 = vmatmul.mubr.bf16.gmra.mrb[0].mxu0 %v1955
      %v2051 = vpop.f32.mrb[0].mxu0
      %v2052 = vadd.f32 %v1910, %v2051
      %v2053 = vpop.f32.mrb[0].mxu0
      %v2054 = vpop.f32.mrb[0].mxu0
      %v2055 = vadd.f32 %v1910, %v2054
      %v2056 = vpop.f32.mrb[0].mxu0
      %2057 = vmatprep.mubr.bf16.mxu0 0
      %2058 = vmatmul.mubr.bf16.gmra.mrb[0].mxu0 %v1958
      %v2059 = vpop.f32.mrb[0].mxu0
      %v2060 = vadd.f32 %v1910, %v2059
      %v2061 = vpop.f32.mrb[0].mxu0
      %v2062 = vpop.f32.mrb[0].mxu0
      %v2063 = vadd.f32 %v1910, %v2062
      %v2064 = vpop.f32.mrb[0].mxu0
      %2065 = vmatprep.mubr.bf16.mxu0 0
      %2066 = vmatmul.mubr.bf16.gmra.mrb[0].mxu0 %v1961
      %v2067 = vpop.f32.mrb[0].mxu0
      %v2068 = vadd.f32 %v1910, %v2067
      %v2069 = vpop.f32.mrb[0].mxu0
      %v2070 = vpop.f32.mrb[0].mxu0
      %v2071 = vadd.f32 %v1910, %v2070
      %v2072 = vpop.f32.mrb[0].mxu0
      %2073 = vmatprep.mubr.bf16.mxu0 0
      %2074 = vmatmul.mubr.bf16.gmra.mrb[0].mxu0 %v1964
      %v2075 = vpop.f32.mrb[0].mxu0
      %v2076 = vadd.f32 %v1910, %v2075
      %v2077 = vpop.f32.mrb[0].mxu0
      %v2078 = vpop.f32.mrb[0].mxu0
      %v2079 = vadd.f32 %v1910, %v2078
      %v2080 = vpop.f32.mrb[0].mxu0
      %2081 = vmatprep.mubr.bf16.mxu0 0
      %2082 = vmatmul.mubr.bf16.gmra.mrb[0].mxu0 %v1967
      %v2083 = vpop.f32.mrb[0].mxu0
      %v2084 = vadd.f32 %v1910, %v2083
      %v2085 = vpop.f32.mrb[0].mxu0
      %v2086 = vpop.f32.mrb[0].mxu0
      %v2087 = vadd.f32 %v1910, %v2086
      %v2088 = vpop.f32.mrb[0].mxu0
      %2089 = vdwg.mxu0
      %v2090 = vadd.f32 %v915, %v2004
      %v2091 = vadd.f32 %v919, %v2007
      %v2092 = vadd.f32 %v925, %v2012
      %v2093 = vadd.f32 %v929, %v2015
      %v2094 = vadd.f32 %v935, %v2020
      %v2095 = vadd.f32 %v939, %v2023
      %v2096 = vadd.f32 %v945, %v2028
      %v2097 = vadd.f32 %v949, %v2031
      %v2098 = vadd.f32 %v955, %v2036
      %v2099 = vadd.f32 %v959, %v2039
      %v2100 = vadd.f32 %v965, %v2044
      %v2101 = vadd.f32 %v969, %v2047
      %v2102 = vadd.f32 %v975, %v2052
      %v2103 = vadd.f32 %v979, %v2055
      %v2104 = vadd.f32 %v985, %v2060
      %v2105 = vadd.f32 %v989, %v2063
      %v2106 = vadd.f32 %v995, %v2068
      %v2107 = vadd.f32 %v999, %v2071
      %v2108 = vadd.f32 %v1005, %v2076
      %v2109 = vadd.f32 %v1009, %v2079
      %v2110 = vadd.f32 %v1015, %v2084
      %v2111 = vadd.f32 %v1019, %v2087
      %v2112 = vld [vmem:[%s6] sm:$0x1]
      %v2113 = vld [vmem:[%s7] sm:$0x1]
      %v2114 = vsel %vm1065, %v2090, 0.0
      %2115 = vadd.xlane.f32.xlu0 %v2114
      %v2116 = vpop.xlane.xlu0 %2115
      %v2117 = vsel %vm1065, %v2091, 0.0
      %2118 = vadd.xlane.f32.xlu0 %v2117
      %v2119 = vpop.xlane.xlu0 %2118
      %v2120 = vsel %vm1065, %v2092, 0.0
      %2121 = vadd.xlane.f32.xlu0 %v2120
      %v2122 = vpop.xlane.xlu0 %2121
      %v2123 = vsel %vm1065, %v2093, 0.0
      %2124 = vadd.xlane.f32.xlu0 %v2123
      %v2125 = vpop.xlane.xlu0 %2124
      %v2126 = vsel %vm1065, %v2094, 0.0
      %2127 = vadd.xlane.f32.xlu0 %v2126
      %v2128 = vpop.xlane.xlu0 %2127
      %v2129 = vsel %vm1065, %v2095, 0.0
      %2130 = vadd.xlane.f32.xlu0 %v2129
      %v2131 = vpop.xlane.xlu0 %2130
      %v2132 = vsel %vm1065, %v2096, 0.0
      %2133 = vadd.xlane.f32.xlu0 %v2132
      %v2134 = vpop.xlane.xlu0 %2133
      %v2135 = vsel %vm1065, %v2097, 0.0
      %2136 = vadd.xlane.f32.xlu0 %v2135
      %v2137 = vpop.xlane.xlu0 %2136
      %v2138 = vsel %vm1065, %v2098, 0.0
      %2139 = vadd.xlane.f32.xlu0 %v2138
      %v2140 = vpop.xlane.xlu0 %2139
      %v2141 = vsel %vm1065, %v2099, 0.0
      %2142 = vadd.xlane.f32.xlu0 %v2141
      %v2143 = vpop.xlane.xlu0 %2142
      %v2144 = vsel %vm1065, %v2100, 0.0
      %2145 = vadd.xlane.f32.xlu0 %v2144
      %v2146 = vpop.xlane.xlu0 %2145
      %v2147 = vsel %vm1065, %v2101, 0.0
      %2148 = vadd.xlane.f32.xlu0 %v2147
      %v2149 = vpop.xlane.xlu0 %2148
      %v2150 = vsel %vm1065, %v2102, 0.0
      %2151 = vadd.xlane.f32.xlu0 %v2150
      %v2152 = vpop.xlane.xlu0 %2151
      %v2153 = vsel %vm1065, %v2103, 0.0
      %2154 = vadd.xlane.f32.xlu0 %v2153
      %v2155 = vpop.xlane.xlu0 %2154
      %v2156 = vsel %vm1065, %v2104, 0.0
      %2157 = vadd.xlane.f32.xlu0 %v2156
      %v2158 = vpop.xlane.xlu0 %2157
      %v2159 = vsel %vm1065, %v2105, 0.0
      %2160 = vadd.xlane.f32.xlu0 %v2159
      %v2161 = vpop.xlane.xlu0 %2160
      %v2162 = vsel %vm1065, %v2106, 0.0
      %2163 = vadd.xlane.f32.xlu0 %v2162
      %v2164 = vpop.xlane.xlu0 %2163
      %v2165 = vsel %vm1065, %v2107, 0.0
      %2166 = vadd.xlane.f32.xlu0 %v2165
      %v2167 = vpop.xlane.xlu0 %2166
      %v2168 = vsel %vm1065, %v2108, 0.0
      %2169 = vadd.xlane.f32.xlu0 %v2168
      %v2170 = vpop.xlane.xlu0 %2169
      %v2171 = vsel %vm1065, %v2109, 0.0
      %2172 = vadd.xlane.f32.xlu0 %v2171
      %v2173 = vpop.xlane.xlu0 %2172
      %v2174 = vsel %vm1065, %v2110, 0.0
      %2175 = vadd.xlane.f32.xlu0 %v2174
      %v2176 = vpop.xlane.xlu0 %2175
      %v2177 = vsel %vm1065, %v2111, 0.0
      %2178 = vadd.xlane.f32.xlu0 %v2177
      %v2179 = vpop.xlane.xlu0 %2178
      %v2180 = vrcp.pop 64.0
      %v2181 = vmul.f32 %v2116, %v2180
      %v2182 = vmul.f32 %v2119, %v2180
      %v2183 = vmul.f32 %v2122, %v2180
      %v2184 = vmul.f32 %v2125, %v2180
      %v2185 = vmul.f32 %v2128, %v2180
      %v2186 = vmul.f32 %v2131, %v2180
      %v2187 = vmul.f32 %v2134, %v2180
      %v2188 = vmul.f32 %v2137, %v2180
      %v2189 = vmul.f32 %v2140, %v2180
      %v2190 = vmul.f32 %v2143, %v2180
      %v2191 = vmul.f32 %v2146, %v2180
      %v2192 = vmul.f32 %v2149, %v2180
      %v2193 = vmul.f32 %v2152, %v2180
      %v2194 = vmul.f32 %v2155, %v2180
      %v2195 = vmul.f32 %v2158, %v2180
      %v2196 = vmul.f32 %v2161, %v2180
      %v2197 = vmul.f32 %v2164, %v2180
      %v2198 = vmul.f32 %v2167, %v2180
      %v2199 = vmul.f32 %v2170, %v2180
      %v2200 = vmul.f32 %v2173, %v2180
      %v2201 = vmul.f32 %v2176, %v2180
      %v2202 = vmul.f32 %v2179, %v2180
      %v2203 = vsub.f32 %v2090, %v2181
      %v2204 = vsub.f32 %v2091, %v2182
      %v2205 = vsub.f32 %v2092, %v2183
      %v2206 = vsub.f32 %v2093, %v2184
      %v2207 = vsub.f32 %v2094, %v2185
      %v2208 = vsub.f32 %v2095, %v2186
      %v2209 = vsub.f32 %v2096, %v2187
      %v2210 = vsub.f32 %v2097, %v2188
      %v2211 = vsub.f32 %v2098, %v2189
      %v2212 = vsub.f32 %v2099, %v2190
      %v2213 = vsub.f32 %v2100, %v2191
      %v2214 = vsub.f32 %v2101, %v2192
      %v2215 = vsub.f32 %v2102, %v2193
      %v2216 = vsub.f32 %v2103, %v2194
      %v2217 = vsub.f32 %v2104, %v2195
      %v2218 = vsub.f32 %v2105, %v2196
      %v2219 = vsub.f32 %v2106, %v2197
      %v2220 = vsub.f32 %v2107, %v2198
      %v2221 = vsub.f32 %v2108, %v2199
      %v2222 = vsub.f32 %v2109, %v2200
      %v2223 = vsub.f32 %v2110, %v2201
      %v2224 = vsub.f32 %v2111, %v2202
      %v2225 = vmul.f32 %v2203, %v2203
      %v2226 = vmul.f32 %v2204, %v2204
      %v2227 = vmul.f32 %v2205, %v2205
      %v2228 = vmul.f32 %v2206, %v2206
      %v2229 = vmul.f32 %v2207, %v2207
      %v2230 = vmul.f32 %v2208, %v2208
      %v2231 = vmul.f32 %v2209, %v2209
      %v2232 = vmul.f32 %v2210, %v2210
      %v2233 = vmul.f32 %v2211, %v2211
      %v2234 = vmul.f32 %v2212, %v2212
      %v2235 = vmul.f32 %v2213, %v2213
      %v2236 = vmul.f32 %v2214, %v2214
      %v2237 = vmul.f32 %v2215, %v2215
      %v2238 = vmul.f32 %v2216, %v2216
      %v2239 = vmul.f32 %v2217, %v2217
      %v2240 = vmul.f32 %v2218, %v2218
      %v2241 = vmul.f32 %v2219, %v2219
      %v2242 = vmul.f32 %v2220, %v2220
      %v2243 = vmul.f32 %v2221, %v2221
      %v2244 = vmul.f32 %v2222, %v2222
      %v2245 = vmul.f32 %v2223, %v2223
      %v2246 = vmul.f32 %v2224, %v2224
      %v2247 = vsel %vm1065, %v2225, 0.0
      %2248 = vadd.xlane.f32.xlu0 %v2247
      %v2249 = vpop.xlane.xlu0 %2248
      %v2250 = vsel %vm1065, %v2226, 0.0
      %2251 = vadd.xlane.f32.xlu0 %v2250
      %v2252 = vpop.xlane.xlu0 %2251
      %v2253 = vsel %vm1065, %v2227, 0.0
      %2254 = vadd.xlane.f32.xlu0 %v2253
      %v2255 = vpop.xlane.xlu0 %2254
      %v2256 = vsel %vm1065, %v2228, 0.0
      %2257 = vadd.xlane.f32.xlu0 %v2256
      %v2258 = vpop.xlane.xlu0 %2257
      %v2259 = vsel %vm1065, %v2229, 0.0
      %2260 = vadd.xlane.f32.xlu0 %v2259
      %v2261 = vpop.xlane.xlu0 %2260
      %v2262 = vsel %vm1065, %v2230, 0.0
      %2263 = vadd.xlane.f32.xlu0 %v2262
      %v2264 = vpop.xlane.xlu0 %2263
      %v2265 = vsel %vm1065, %v2231, 0.0
      %2266 = vadd.xlane.f32.xlu0 %v2265
      %v2267 = vpop.xlane.xlu0 %2266
      %v2268 = vsel %vm1065, %v2232, 0.0
      %2269 = vadd.xlane.f32.xlu0 %v2268
      %v2270 = vpop.xlane.xlu0 %2269
      %v2271 = vsel %vm1065, %v2233, 0.0
      %2272 = vadd.xlane.f32.xlu0 %v2271
      %v2273 = vpop.xlane.xlu0 %2272
      %v2274 = vsel %vm1065, %v2234, 0.0
      %2275 = vadd.xlane.f32.xlu0 %v2274
      %v2276 = vpop.xlane.xlu0 %2275
      %v2277 = vsel %vm1065, %v2235, 0.0
      %2278 = vadd.xlane.f32.xlu0 %v2277
      %v2279 = vpop.xlane.xlu0 %2278
      %v2280 = vsel %vm1065, %v2236, 0.0
      %2281 = vadd.xlane.f32.xlu0 %v2280
      %v2282 = vpop.xlane.xlu0 %2281
      %v2283 = vsel %vm1065, %v2237, 0.0
      %2284 = vadd.xlane.f32.xlu0 %v2283
      %v2285 = vpop.xlane.xlu0 %2284
      %v2286 = vsel %vm1065, %v2238, 0.0
      %2287 = vadd.xlane.f32.xlu0 %v2286
      %v2288 = vpop.xlane.xlu0 %2287
      %v2289 = vsel %vm1065, %v2239, 0.0
      %2290 = vadd.xlane.f32.xlu0 %v2289
      %v2291 = vpop.xlane.xlu0 %2290
      %v2292 = vsel %vm1065, %v2240, 0.0
      %2293 = vadd.xlane.f32.xlu0 %v2292
      %v2294 = vpop.xlane.xlu0 %2293
      %v2295 = vsel %vm1065, %v2241, 0.0
      %2296 = vadd.xlane.f32.xlu0 %v2295
      %v2297 = vpop.xlane.xlu0 %2296
      %v2298 = vsel %vm1065, %v2242, 0.0
      %2299 = vadd.xlane.f32.xlu0 %v2298
      %v2300 = vpop.xlane.xlu0 %2299
      %v2301 = vsel %vm1065, %v2243, 0.0
      %2302 = vadd.xlane.f32.xlu0 %v2301
      %v2303 = vpop.xlane.xlu0 %2302
      %v2304 = vsel %vm1065, %v2244, 0.0
      %2305 = vadd.xlane.f32.xlu0 %v2304
      %v2306 = vpop.xlane.xlu0 %2305
      %v2307 = vsel %vm1065, %v2245, 0.0
      %2308 = vadd.xlane.f32.xlu0 %v2307
      %v2309 = vpop.xlane.xlu0 %2308
      %v2310 = vsel %vm1065, %v2246, 0.0
      %2311 = vadd.xlane.f32.xlu0 %v2310
      %v2312 = vpop.xlane.xlu0 %2311
      %v2313 = vmul.f32 %v2249, %v2180
      %v2314 = vmul.f32 %v2252, %v2180
      %v2315 = vmul.f32 %v2255, %v2180
      %v2316 = vmul.f32 %v2258, %v2180
      %v2317 = vmul.f32 %v2261, %v2180
      %v2318 = vmul.f32 %v2264, %v2180
      %v2319 = vmul.f32 %v2267, %v2180
      %v2320 = vmul.f32 %v2270, %v2180
      %v2321 = vmul.f32 %v2273, %v2180
      %v2322 = vmul.f32 %v2276, %v2180
      %v2323 = vmul.f32 %v2279, %v2180
      %v2324 = vmul.f32 %v2282, %v2180
      %v2325 = vmul.f32 %v2285, %v2180
      %v2326 = vmul.f32 %v2288, %v2180
      %v2327 = vmul.f32 %v2291, %v2180
      %v2328 = vmul.f32 %v2294, %v2180
      %v2329 = vmul.f32 %v2297, %v2180
      %v2330 = vmul.f32 %v2300, %v2180
      %v2331 = vmul.f32 %v2303, %v2180
      %v2332 = vmul.f32 %v2306, %v2180
      %v2333 = vmul.f32 %v2309, %v2180
      %v2334 = vmul.f32 %v2312, %v2180
      %v2335 = vadd.f32 %v2313, 1e-05
      %v2336 = vadd.f32 %v2314, 1e-05
      %v2337 = vadd.f32 %v2315, 1e-05
      %v2338 = vadd.f32 %v2316, 1e-05
      %v2339 = vadd.f32 %v2317, 1e-05
      %v2340 = vadd.f32 %v2318, 1e-05
      %v2341 = vadd.f32 %v2319, 1e-05
      %v2342 = vadd.f32 %v2320, 1e-05
      %v2343 = vadd.f32 %v2321, 1e-05
      %v2344 = vadd.f32 %v2322, 1e-05
      %v2345 = vadd.f32 %v2323, 1e-05
      %v2346 = vadd.f32 %v2324, 1e-05
      %v2347 = vadd.f32 %v2325, 1e-05
      %v2348 = vadd.f32 %v2326, 1e-05
      %v2349 = vadd.f32 %v2327, 1e-05
      %v2350 = vadd.f32 %v2328, 1e-05
      %v2351 = vadd.f32 %v2329, 1e-05
      %v2352 = vadd.f32 %v2330, 1e-05
      %v2353 = vadd.f32 %v2331, 1e-05
      %v2354 = vadd.f32 %v2332, 1e-05
      %v2355 = vadd.f32 %v2333, 1e-05
      %v2356 = vadd.f32 %v2334, 1e-05
      %v2357 = vrsqrt.pop %v2335
      %v2358 = vrsqrt.pop %v2336
      %v2359 = vrsqrt.pop %v2337
      %v2360 = vrsqrt.pop %v2338
      %v2361 = vrsqrt.pop %v2339
      %v2362 = vrsqrt.pop %v2340
      %v2363 = vrsqrt.pop %v2341
      %v2364 = vrsqrt.pop %v2342
      %v2365 = vrsqrt.pop %v2343
      %v2366 = vrsqrt.pop %v2344
      %v2367 = vrsqrt.pop %v2345
      %v2368 = vrsqrt.pop %v2346
      %v2369 = vrsqrt.pop %v2347
      %v2370 = vrsqrt.pop %v2348
      %v2371 = vrsqrt.pop %v2349
      %v2372 = vrsqrt.pop %v2350
      %v2373 = vrsqrt.pop %v2351
      %v2374 = vrsqrt.pop %v2352
      %v2375 = vrsqrt.pop %v2353
      %v2376 = vrsqrt.pop %v2354
      %v2377 = vrsqrt.pop %v2355
      %v2378 = vrsqrt.pop %v2356
      %v2379 = vmul.f32 %v2203, %v2357
      %v2380 = vmul.f32 %v2204, %v2358
      %v2381 = vmul.f32 %v2205, %v2359
      %v2382 = vmul.f32 %v2206, %v2360
      %v2383 = vmul.f32 %v2207, %v2361
      %v2384 = vmul.f32 %v2208, %v2362
      %v2385 = vmul.f32 %v2209, %v2363
      %v2386 = vmul.f32 %v2210, %v2364
      %v2387 = vmul.f32 %v2211, %v2365
      %v2388 = vmul.f32 %v2212, %v2366
      %v2389 = vmul.f32 %v2213, %v2367
      %v2390 = vmul.f32 %v2214, %v2368
      %v2391 = vmul.f32 %v2215, %v2369
      %v2392 = vmul.f32 %v2216, %v2370
      %v2393 = vmul.f32 %v2217, %v2371
      %v2394 = vmul.f32 %v2218, %v2372
      %v2395 = vmul.f32 %v2219, %v2373
      %v2396 = vmul.f32 %v2220, %v2374
      %v2397 = vmul.f32 %v2221, %v2375
      %v2398 = vmul.f32 %v2222, %v2376
      %v2399 = vmul.f32 %v2223, %v2377
      %v2400 = vmul.f32 %v2224, %v2378
      %v2402 = vlaneseq
      %v2403 = vshrl.u32 %v2402, 7
      %v2404 = vsub.s32 0, %v2403
      %v2405 = vrot.slane %v2112, %v2404
      %v2407 = vmul.f32 %v2379, %v2405
      %v2408 = vmul.f32 %v2380, %v2405
      %v2409 = vmul.f32 %v2381, %v2405
      %v2410 = vmul.f32 %v2382, %v2405
      %v2411 = vmul.f32 %v2383, %v2405
      %v2412 = vmul.f32 %v2384, %v2405
      %v2413 = vmul.f32 %v2385, %v2405
      %v2414 = vmul.f32 %v2386, %v2405
      %v2415 = vmul.f32 %v2387, %v2405
      %v2416 = vmul.f32 %v2388, %v2405
      %v2417 = vmul.f32 %v2389, %v2405
      %v2418 = vmul.f32 %v2390, %v2405
      %v2419 = vmul.f32 %v2391, %v2405
      %v2420 = vmul.f32 %v2392, %v2405
      %v2421 = vmul.f32 %v2393, %v2405
      %v2422 = vmul.f32 %v2394, %v2405
      %v2423 = vmul.f32 %v2395, %v2405
      %v2424 = vmul.f32 %v2396, %v2405
      %v2425 = vmul.f32 %v2397, %v2405
      %v2426 = vmul.f32 %v2398, %v2405
      %v2427 = vmul.f32 %v2399, %v2405
      %v2428 = vmul.f32 %v2400, %v2405
      %v2430 = vlaneseq
      %v2431 = vshrl.u32 %v2430, 7
      %v2432 = vsub.s32 0, %v2431
      %v2433 = vrot.slane %v2113, %v2432
      %v2435 = vadd.f32 %v2407, %v2433
      %v2436 = vadd.f32 %v2408, %v2433
      %v2437 = vadd.f32 %v2409, %v2433
      %v2438 = vadd.f32 %v2410, %v2433
      %v2439 = vadd.f32 %v2411, %v2433
      %v2440 = vadd.f32 %v2412, %v2433
      %v2441 = vadd.f32 %v2413, %v2433
      %v2442 = vadd.f32 %v2414, %v2433
      %v2443 = vadd.f32 %v2415, %v2433
      %v2444 = vadd.f32 %v2416, %v2433
      %v2445 = vadd.f32 %v2417, %v2433
      %v2446 = vadd.f32 %v2418, %v2433
      %v2447 = vadd.f32 %v2419, %v2433
      %v2448 = vadd.f32 %v2420, %v2433
      %v2449 = vadd.f32 %v2421, %v2433
      %v2450 = vadd.f32 %v2422, %v2433
      %v2451 = vadd.f32 %v2423, %v2433
      %v2452 = vadd.f32 %v2424, %v2433
      %v2453 = vadd.f32 %v2425, %v2433
      %v2454 = vadd.f32 %v2426, %v2433
      %v2455 = vadd.f32 %v2427, %v2433
      %v2456 = vadd.f32 %v2428, %v2433
      %v2457 = vpack.c.bf16 %v2436, %v2435
      %v2458 = vpack.c.bf16 %v2438, %v2437
      %v2459 = vpack.c.bf16 %v2440, %v2439
      %v2460 = vpack.c.bf16 %v2442, %v2441
      %v2461 = vpack.c.bf16 %v2444, %v2443
      %v2462 = vpack.c.bf16 %v2446, %v2445
      %v2463 = vpack.c.bf16 %v2448, %v2447
      %v2464 = vpack.c.bf16 %v2450, %v2449
      %v2465 = vpack.c.bf16 %v2452, %v2451
      %v2466 = vpack.c.bf16 %v2454, %v2453
      %v2467 = vpack.c.bf16 %v2456, %v2455
      %v2468 = vld [vmem:[%s8] sm:$0xf]
      %v2469 = vld [vmem:[%s8 + $0x4] sm:$0xf]
      %v2470 = vld [vmem:[%s8 + $0x8] sm:$0xf]
      %v2471 = vld [vmem:[%s8 + $0xc] sm:$0xf]
      %v2472 = vld [vmem:[%s8 + $0x10] sm:$0xf]
      %v2473 = vld [vmem:[%s8 + $0x14] sm:$0xf]
      %v2474 = vld [vmem:[%s8 + $0x18] sm:$0xf]
      %v2475 = vld [vmem:[%s8 + $0x1c] sm:$0xf]
      %v2476 = vld [vmem:[%s9] sm:$0x1]
      %v2478 = vlaneseq
      %v2479 = vshrl.u32 %v2478, 7
      %v2480 = vsub.s32 0, %v2479
      %v2481 = vrot.slane %v2476, %v2480
      %v2491 = vunpack.c.l.b16 %v2468
      %v2492 = vunpack.c.l.b16 %v2469
      %v2493 = vunpack.c.l.b16 %v2470
      %v2494 = vunpack.c.l.b16 %v2471
      %v2495 = vunpack.c.l.b16 %v2472
      %v2496 = vunpack.c.l.b16 %v2473
      %v2497 = vunpack.c.l.b16 %v2474
      %v2498 = vunpack.c.l.b16 %v2475
      %v2499 = vpack.c.b16 %v2492, %v2491
      %v2500 = vpack.c.b16 %v2494, %v2493
      %v2501 = vpack.c.b16 %v2496, %v2495
      %v2502 = vpack.c.b16 %v2498, %v2497
      %v2508 = vsel %vm1065, %v2457, 0
      %v2511 = vsel %vm1065, %v2458, 0
      %v2514 = vsel %vm1065, %v2459, 0
      %v2517 = vsel %vm1065, %v2460, 0
      %v2520 = vsel %vm1065, %v2461, 0
      %v2523 = vsel %vm1065, %v2462, 0
      %v2526 = vsel %vm1065, %v2463, 0
      %v2529 = vsel %vm1065, %v2464, 0
      %v2532 = vsel %vm1065, %v2465, 0
      %v2535 = vsel %vm1065, %v2466, 0
      %v2538 = vsel %vm1065, %v2467, 0
      %2540 = vmatprep.subr.bf16.mxu0 0
      %2541 = vmatpush1.bf16.msra.mxu0 %v2499
      %2542 = vmatprep.subr.bf16.mxu0 0
      %2543 = vmatpush1.bf16.msra.mxu0 %v2500
      %2544 = vmatprep.subr.bf16.mxu0 0
      %2545 = vmatpush1.bf16.msra.mxu0 %v2501
      %2546 = vmatprep.subr.bf16.mxu0 0
      %2547 = vmatpush1.bf16.msra.mxu0 %v2502
      %2548 = vmatprep.subr.bf16.mxu0 0
      %2549 = vmatpush1.bf16.msra.mxu0 0
      %2550 = vmatprep.subr.bf16.mxu0 0
      %2551 = vmatpush1.bf16.msra.mxu0 0
      %2552 = vmatprep.subr.bf16.mxu0 0
      %2553 = vmatpush1.bf16.msra.mxu0 0
      %2554 = vmatprep.subr.bf16.mxu0 0
      %2555 = vmatpush1.bf16.msra.mxu0 0
      %2556 = vmatprep.subr.bf16.mxu0 0
      %2557 = vmatpush1.bf16.msra.mxu0 0
      %2558 = vmatprep.subr.bf16.mxu0 0
      %2559 = vmatpush1.bf16.msra.mxu0 0
      %2560 = vmatprep.subr.bf16.mxu0 0
      %2561 = vmatpush1.bf16.msra.mxu0 0
      %2562 = vmatprep.subr.bf16.mxu0 0
      %2563 = vmatpush1.bf16.msra.mxu0 0
      %2564 = vmatprep.subr.bf16.mxu0 0
      %2565 = vmatpush1.bf16.msra.mxu0 0
      %2566 = vmatprep.subr.bf16.mxu0 0
      %2567 = vmatpush1.bf16.msra.mxu0 0
      %2568 = vmatprep.subr.bf16.mxu0 0
      %2569 = vmatpush1.bf16.msra.mxu0 0
      %2570 = vmatprep.subr.bf16.mxu0 0
      %2571 = vmatpush1.bf16.msra.mxu0 0
      %2572 = vmatprep.mubr.bf16.mxu0 0
      %2573 = vmatmul.mubr.bf16.gmra.mrb[0].mxu0 %v2508
      %v2574 = vpop.f32.mrb[0].mxu0
      %v2575 = vadd.f32 %v2481, %v2574
      %v2576 = vpop.f32.mrb[0].mxu0
      %v2577 = vpop.f32.mrb[0].mxu0
      %v2578 = vadd.f32 %v2481, %v2577
      %v2579 = vpop.f32.mrb[0].mxu0
      %2580 = vmatprep.mubr.bf16.mxu0 0
      %2581 = vmatmul.mubr.bf16.gmra.mrb[0].mxu0 %v2511
      %v2582 = vpop.f32.mrb[0].mxu0
      %v2583 = vadd.f32 %v2481, %v2582
      %v2584 = vpop.f32.mrb[0].mxu0
      %v2585 = vpop.f32.mrb[0].mxu0
      %v2586 = vadd.f32 %v2481, %v2585
      %v2587 = vpop.f32.mrb[0].mxu0
      %2588 = vmatprep.mubr.bf16.mxu0 0
      %2589 = vmatmul.mubr.bf16.gmra.mrb[0].mxu0 %v2514
      %v2590 = vpop.f32.mrb[0].mxu0
      %v2591 = vadd.f32 %v2481, %v2590
      %v2592 = vpop.f32.mrb[0].mxu0
      %v2593 = vpop.f32.mrb[0].mxu0
      %v2594 = vadd.f32 %v2481, %v2593
      %v2595 = vpop.f32.mrb[0].mxu0
      %2596 = vmatprep.mubr.bf16.mxu0 0
      %2597 = vmatmul.mubr.bf16.gmra.mrb[0].mxu0 %v2517
      %v2598 = vpop.f32.mrb[0].mxu0
      %v2599 = vadd.f32 %v2481, %v2598
      %v2600 = vpop.f32.mrb[0].mxu0
      %v2601 = vpop.f32.mrb[0].mxu0
      %v2602 = vadd.f32 %v2481, %v2601
      %v2603 = vpop.f32.mrb[0].mxu0
      %2604 = vmatprep.mubr.bf16.mxu0 0
      %2605 = vmatmul.mubr.bf16.gmra.mrb[0].mxu0 %v2520
      %v2606 = vpop.f32.mrb[0].mxu0
      %v2607 = vadd.f32 %v2481, %v2606
      %v2608 = vpop.f32.mrb[0].mxu0
      %v2609 = vpop.f32.mrb[0].mxu0
      %v2610 = vadd.f32 %v2481, %v2609
      %v2611 = vpop.f32.mrb[0].mxu0
      %2612 = vmatprep.mubr.bf16.mxu0 0
      %2613 = vmatmul.mubr.bf16.gmra.mrb[0].mxu0 %v2523
      %v2614 = vpop.f32.mrb[0].mxu0
      %v2615 = vadd.f32 %v2481, %v2614
      %v2616 = vpop.f32.mrb[0].mxu0
      %v2617 = vpop.f32.mrb[0].mxu0
      %v2618 = vadd.f32 %v2481, %v2617
      %v2619 = vpop.f32.mrb[0].mxu0
      %2620 = vmatprep.mubr.bf16.mxu0 0
      %2621 = vmatmul.mubr.bf16.gmra.mrb[0].mxu0 %v2526
      %v2622 = vpop.f32.mrb[0].mxu0
      %v2623 = vadd.f32 %v2481, %v2622
      %v2624 = vpop.f32.mrb[0].mxu0
      %v2625 = vpop.f32.mrb[0].mxu0
      %v2626 = vadd.f32 %v2481, %v2625
      %v2627 = vpop.f32.mrb[0].mxu0
      %2628 = vmatprep.mubr.bf16.mxu0 0
      %2629 = vmatmul.mubr.bf16.gmra.mrb[0].mxu0 %v2529
      %v2630 = vpop.f32.mrb[0].mxu0
      %v2631 = vadd.f32 %v2481, %v2630
      %v2632 = vpop.f32.mrb[0].mxu0
      %v2633 = vpop.f32.mrb[0].mxu0
      %v2634 = vadd.f32 %v2481, %v2633
      %v2635 = vpop.f32.mrb[0].mxu0
      %2636 = vmatprep.mubr.bf16.mxu0 0
      %2637 = vmatmul.mubr.bf16.gmra.mrb[0].mxu0 %v2532
      %v2638 = vpop.f32.mrb[0].mxu0
      %v2639 = vadd.f32 %v2481, %v2638
      %v2640 = vpop.f32.mrb[0].mxu0
      %v2641 = vpop.f32.mrb[0].mxu0
      %v2642 = vadd.f32 %v2481, %v2641
      %v2643 = vpop.f32.mrb[0].mxu0
      %2644 = vmatprep.mubr.bf16.mxu0 0
      %2645 = vmatmul.mubr.bf16.gmra.mrb[0].mxu0 %v2535
      %v2646 = vpop.f32.mrb[0].mxu0
      %v2647 = vadd.f32 %v2481, %v2646
      %v2648 = vpop.f32.mrb[0].mxu0
      %v2649 = vpop.f32.mrb[0].mxu0
      %v2650 = vadd.f32 %v2481, %v2649
      %v2651 = vpop.f32.mrb[0].mxu0
      %2652 = vmatprep.mubr.bf16.mxu0 0
      %2653 = vmatmul.mubr.bf16.gmra.mrb[0].mxu0 %v2538
      %v2654 = vpop.f32.mrb[0].mxu0
      %v2655 = vadd.f32 %v2481, %v2654
      %v2656 = vpop.f32.mrb[0].mxu0
      %v2657 = vpop.f32.mrb[0].mxu0
      %v2658 = vadd.f32 %v2481, %v2657
      %v2659 = vpop.f32.mrb[0].mxu0
      %2660 = vdwg.mxu0
      %v2661 = vmul.f32 %v2575, 0.5
      %v2662 = vmul.f32 %v2578, 0.5
      %v2663 = vmul.f32 %v2583, 0.5
      %v2664 = vmul.f32 %v2586, 0.5
      %v2665 = vmul.f32 %v2591, 0.5
      %v2666 = vmul.f32 %v2594, 0.5
      %v2667 = vmul.f32 %v2599, 0.5
      %v2668 = vmul.f32 %v2602, 0.5
      %v2669 = vmul.f32 %v2607, 0.5
      %v2670 = vmul.f32 %v2610, 0.5
      %v2671 = vmul.f32 %v2615, 0.5
      %v2672 = vmul.f32 %v2618, 0.5
      %v2673 = vmul.f32 %v2623, 0.5
      %v2674 = vmul.f32 %v2626, 0.5
      %v2675 = vmul.f32 %v2631, 0.5
      %v2676 = vmul.f32 %v2634, 0.5
      %v2677 = vmul.f32 %v2639, 0.5
      %v2678 = vmul.f32 %v2642, 0.5
      %v2679 = vmul.f32 %v2647, 0.5
      %v2680 = vmul.f32 %v2650, 0.5
      %v2681 = vmul.f32 %v2655, 0.5
      %v2682 = vmul.f32 %v2658, 0.5
      %v2683 = vmul.f32 %v2575, 0.70710677
      %v2684 = vmul.f32 %v2578, 0.70710677
      %v2685 = vmul.f32 %v2583, 0.70710677
      %v2686 = vmul.f32 %v2586, 0.70710677
      %v2687 = vmul.f32 %v2591, 0.70710677
      %v2688 = vmul.f32 %v2594, 0.70710677
      %v2689 = vmul.f32 %v2599, 0.70710677
      %v2690 = vmul.f32 %v2602, 0.70710677
      %v2691 = vmul.f32 %v2607, 0.70710677
      %v2692 = vmul.f32 %v2610, 0.70710677
      %v2693 = vmul.f32 %v2615, 0.70710677
      %v2694 = vmul.f32 %v2618, 0.70710677
      %v2695 = vmul.f32 %v2623, 0.70710677
      %v2696 = vmul.f32 %v2626, 0.70710677
      %v2697 = vmul.f32 %v2631, 0.70710677
      %v2698 = vmul.f32 %v2634, 0.70710677
      %v2699 = vmul.f32 %v2639, 0.70710677
      %v2700 = vmul.f32 %v2642, 0.70710677
      %v2701 = vmul.f32 %v2647, 0.70710677
      %v2702 = vmul.f32 %v2650, 0.70710677
      %v2703 = vmul.f32 %v2655, 0.70710677
      %v2704 = vmul.f32 %v2658, 0.70710677
      %v2705 = verf.f32.pop %v2683
      %v2706 = verf.f32.pop %v2684
      %v2707 = verf.f32.pop %v2685
      %v2708 = verf.f32.pop %v2686
      %v2709 = verf.f32.pop %v2687
      %v2710 = verf.f32.pop %v2688
      %v2711 = verf.f32.pop %v2689
      %v2712 = verf.f32.pop %v2690
      %v2713 = verf.f32.pop %v2691
      %v2714 = verf.f32.pop %v2692
      %v2715 = verf.f32.pop %v2693
      %v2716 = verf.f32.pop %v2694
      %v2717 = verf.f32.pop %v2695
      %v2718 = verf.f32.pop %v2696
      %v2719 = verf.f32.pop %v2697
      %v2720 = verf.f32.pop %v2698
      %v2721 = verf.f32.pop %v2699
      %v2722 = verf.f32.pop %v2700
      %v2723 = verf.f32.pop %v2701
      %v2724 = verf.f32.pop %v2702
      %v2725 = verf.f32.pop %v2703
      %v2726 = verf.f32.pop %v2704
      %v2727 = vadd.f32 %v2705, 1.0
      %v2728 = vadd.f32 %v2706, 1.0
      %v2729 = vadd.f32 %v2707, 1.0
      %v2730 = vadd.f32 %v2708, 1.0
      %v2731 = vadd.f32 %v2709, 1.0
      %v2732 = vadd.f32 %v2710, 1.0
      %v2733 = vadd.f32 %v2711, 1.0
      %v2734 = vadd.f32 %v2712, 1.0
      %v2735 = vadd.f32 %v2713, 1.0
      %v2736 = vadd.f32 %v2714, 1.0
      %v2737 = vadd.f32 %v2715, 1.0
      %v2738 = vadd.f32 %v2716, 1.0
      %v2739 = vadd.f32 %v2717, 1.0
      %v2740 = vadd.f32 %v2718, 1.0
      %v2741 = vadd.f32 %v2719, 1.0
      %v2742 = vadd.f32 %v2720, 1.0
      %v2743 = vadd.f32 %v2721, 1.0
      %v2744 = vadd.f32 %v2722, 1.0
      %v2745 = vadd.f32 %v2723, 1.0
      %v2746 = vadd.f32 %v2724, 1.0
      %v2747 = vadd.f32 %v2725, 1.0
      %v2748 = vadd.f32 %v2726, 1.0
      %v2749 = vmul.f32 %v2661, %v2727
      %v2750 = vmul.f32 %v2662, %v2728
      %v2751 = vmul.f32 %v2663, %v2729
      %v2752 = vmul.f32 %v2664, %v2730
      %v2753 = vmul.f32 %v2665, %v2731
      %v2754 = vmul.f32 %v2666, %v2732
      %v2755 = vmul.f32 %v2667, %v2733
      %v2756 = vmul.f32 %v2668, %v2734
      %v2757 = vmul.f32 %v2669, %v2735
      %v2758 = vmul.f32 %v2670, %v2736
      %v2759 = vmul.f32 %v2671, %v2737
      %v2760 = vmul.f32 %v2672, %v2738
      %v2761 = vmul.f32 %v2673, %v2739
      %v2762 = vmul.f32 %v2674, %v2740
      %v2763 = vmul.f32 %v2675, %v2741
      %v2764 = vmul.f32 %v2676, %v2742
      %v2765 = vmul.f32 %v2677, %v2743
      %v2766 = vmul.f32 %v2678, %v2744
      %v2767 = vmul.f32 %v2679, %v2745
      %v2768 = vmul.f32 %v2680, %v2746
      %v2769 = vmul.f32 %v2681, %v2747
      %v2770 = vmul.f32 %v2682, %v2748
      %v2771 = vpack.c.bf16 %v2750, %v2749
      %v2772 = vpack.c.bf16 %v2752, %v2751
      %v2773 = vpack.c.bf16 %v2754, %v2753
      %v2774 = vpack.c.bf16 %v2756, %v2755
      %v2775 = vpack.c.bf16 %v2758, %v2757
      %v2776 = vpack.c.bf16 %v2760, %v2759
      %v2777 = vpack.c.bf16 %v2762, %v2761
      %v2778 = vpack.c.bf16 %v2764, %v2763
      %v2779 = vpack.c.bf16 %v2766, %v2765
      %v2780 = vpack.c.bf16 %v2768, %v2767
      %v2781 = vpack.c.bf16 %v2770, %v2769
      %v2782 = vld [vmem:[%s10] sm:$0xf]
      %v2783 = vld [vmem:[%s10 + $0x4] sm:$0xf]
      %v2784 = vld [vmem:[%s10 + $0x8] sm:$0xf]
      %v2785 = vld [vmem:[%s10 + $0xc] sm:$0xf]
      %v2786 = vld [vmem:[%s10 + $0x10] sm:$0xf]
      %v2787 = vld [vmem:[%s10 + $0x14] sm:$0xf]
      %v2788 = vld [vmem:[%s10 + $0x18] sm:$0xf]
      %v2789 = vld [vmem:[%s10 + $0x1c] sm:$0xf]
      %v2790 = vld [vmem:[%s11] sm:$0x1]
      %v2792 = vlaneseq
      %v2793 = vshrl.u32 %v2792, 7
      %v2794 = vsub.s32 0, %v2793
      %v2795 = vrot.slane %v2790, %v2794
      %v2805 = vunpack.c.l.b16 %v2782
      %v2806 = vunpack.c.l.b16 %v2783
      %v2807 = vunpack.c.l.b16 %v2784
      %v2808 = vunpack.c.l.b16 %v2785
      %v2809 = vunpack.c.l.b16 %v2786
      %v2810 = vunpack.c.l.b16 %v2787
      %v2811 = vunpack.c.l.b16 %v2788
      %v2812 = vunpack.c.l.b16 %v2789
      %v2813 = vpack.c.b16 %v2806, %v2805
      %v2814 = vpack.c.b16 %v2808, %v2807
      %v2815 = vpack.c.b16 %v2810, %v2809
      %v2816 = vpack.c.b16 %v2812, %v2811
      %v2822 = vsel %vm1065, %v2771, 0
      %v2825 = vsel %vm1065, %v2772, 0
      %v2828 = vsel %vm1065, %v2773, 0
      %v2831 = vsel %vm1065, %v2774, 0
      %v2834 = vsel %vm1065, %v2775, 0
      %v2837 = vsel %vm1065, %v2776, 0
      %v2840 = vsel %vm1065, %v2777, 0
      %v2843 = vsel %vm1065, %v2778, 0
      %v2846 = vsel %vm1065, %v2779, 0
      %v2849 = vsel %vm1065, %v2780, 0
      %v2852 = vsel %vm1065, %v2781, 0
      %2854 = vmatprep.subr.bf16.mxu0 0
      %2855 = vmatpush1.bf16.msra.mxu0 %v2813
      %2856 = vmatprep.subr.bf16.mxu0 0
      %2857 = vmatpush1.bf16.msra.mxu0 %v2814
      %2858 = vmatprep.subr.bf16.mxu0 0
      %2859 = vmatpush1.bf16.msra.mxu0 %v2815
      %2860 = vmatprep.subr.bf16.mxu0 0
      %2861 = vmatpush1.bf16.msra.mxu0 %v2816
      %2862 = vmatprep.subr.bf16.mxu0 0
      %2863 = vmatpush1.bf16.msra.mxu0 0
      %2864 = vmatprep.subr.bf16.mxu0 0
      %2865 = vmatpush1.bf16.msra.mxu0 0
      %2866 = vmatprep.subr.bf16.mxu0 0
      %2867 = vmatpush1.bf16.msra.mxu0 0
      %2868 = vmatprep.subr.bf16.mxu0 0
      %2869 = vmatpush1.bf16.msra.mxu0 0
      %2870 = vmatprep.subr.bf16.mxu0 0
      %2871 = vmatpush1.bf16.msra.mxu0 0
      %2872 = vmatprep.subr.bf16.mxu0 0
      %2873 = vmatpush1.bf16.msra.mxu0 0
      %2874 = vmatprep.subr.bf16.mxu0 0
      %2875 = vmatpush1.bf16.msra.mxu0 0
      %2876 = vmatprep.subr.bf16.mxu0 0
      %2877 = vmatpush1.bf16.msra.mxu0 0
      %2878 = vmatprep.subr.bf16.mxu0 0
      %2879 = vmatpush1.bf16.msra.mxu0 0
      %2880 = vmatprep.subr.bf16.mxu0 0
      %2881 = vmatpush1.bf16.msra.mxu0 0
      %2882 = vmatprep.subr.bf16.mxu0 0
      %2883 = vmatpush1.bf16.msra.mxu0 0
      %2884 = vmatprep.subr.bf16.mxu0 0
      %2885 = vmatpush1.bf16.msra.mxu0 0
      %2886 = vmatprep.mubr.bf16.mxu0 0
      %2887 = vmatmul.mubr.bf16.gmra.mrb[0].mxu0 %v2822
      %v2888 = vpop.f32.mrb[0].mxu0
      %v2889 = vadd.f32 %v2795, %v2888
      %v2890 = vpop.f32.mrb[0].mxu0
      %v2891 = vpop.f32.mrb[0].mxu0
      %v2892 = vadd.f32 %v2795, %v2891
      %v2893 = vpop.f32.mrb[0].mxu0
      %2894 = vmatprep.mubr.bf16.mxu0 0
      %2895 = vmatmul.mubr.bf16.gmra.mrb[0].mxu0 %v2825
      %v2896 = vpop.f32.mrb[0].mxu0
      %v2897 = vadd.f32 %v2795, %v2896
      %v2898 = vpop.f32.mrb[0].mxu0
      %v2899 = vpop.f32.mrb[0].mxu0
      %v2900 = vadd.f32 %v2795, %v2899
      %v2901 = vpop.f32.mrb[0].mxu0
      %2902 = vmatprep.mubr.bf16.mxu0 0
      %2903 = vmatmul.mubr.bf16.gmra.mrb[0].mxu0 %v2828
      %v2904 = vpop.f32.mrb[0].mxu0
      %v2905 = vadd.f32 %v2795, %v2904
      %v2906 = vpop.f32.mrb[0].mxu0
      %v2907 = vpop.f32.mrb[0].mxu0
      %v2908 = vadd.f32 %v2795, %v2907
      %v2909 = vpop.f32.mrb[0].mxu0
      %2910 = vmatprep.mubr.bf16.mxu0 0
      %2911 = vmatmul.mubr.bf16.gmra.mrb[0].mxu0 %v2831
      %v2912 = vpop.f32.mrb[0].mxu0
      %v2913 = vadd.f32 %v2795, %v2912
      %v2914 = vpop.f32.mrb[0].mxu0
      %v2915 = vpop.f32.mrb[0].mxu0
      %v2916 = vadd.f32 %v2795, %v2915
      %v2917 = vpop.f32.mrb[0].mxu0
      %2918 = vmatprep.mubr.bf16.mxu0 0
      %2919 = vmatmul.mubr.bf16.gmra.mrb[0].mxu0 %v2834
      %v2920 = vpop.f32.mrb[0].mxu0
      %v2921 = vadd.f32 %v2795, %v2920
      %v2922 = vpop.f32.mrb[0].mxu0
      %v2923 = vpop.f32.mrb[0].mxu0
      %v2924 = vadd.f32 %v2795, %v2923
      %v2925 = vpop.f32.mrb[0].mxu0
      %2926 = vmatprep.mubr.bf16.mxu0 0
      %2927 = vmatmul.mubr.bf16.gmra.mrb[0].mxu0 %v2837
      %v2928 = vpop.f32.mrb[0].mxu0
      %v2929 = vadd.f32 %v2795, %v2928
      %v2930 = vpop.f32.mrb[0].mxu0
      %v2931 = vpop.f32.mrb[0].mxu0
      %v2932 = vadd.f32 %v2795, %v2931
      %v2933 = vpop.f32.mrb[0].mxu0
      %2934 = vmatprep.mubr.bf16.mxu0 0
      %2935 = vmatmul.mubr.bf16.gmra.mrb[0].mxu0 %v2840
      %v2936 = vpop.f32.mrb[0].mxu0
      %v2937 = vadd.f32 %v2795, %v2936
      %v2938 = vpop.f32.mrb[0].mxu0
      %v2939 = vpop.f32.mrb[0].mxu0
      %v2940 = vadd.f32 %v2795, %v2939
      %v2941 = vpop.f32.mrb[0].mxu0
      %2942 = vmatprep.mubr.bf16.mxu0 0
      %2943 = vmatmul.mubr.bf16.gmra.mrb[0].mxu0 %v2843
      %v2944 = vpop.f32.mrb[0].mxu0
      %v2945 = vadd.f32 %v2795, %v2944
      %v2946 = vpop.f32.mrb[0].mxu0
      %v2947 = vpop.f32.mrb[0].mxu0
      %v2948 = vadd.f32 %v2795, %v2947
      %v2949 = vpop.f32.mrb[0].mxu0
      %2950 = vmatprep.mubr.bf16.mxu0 0
      %2951 = vmatmul.mubr.bf16.gmra.mrb[0].mxu0 %v2846
      %v2952 = vpop.f32.mrb[0].mxu0
      %v2953 = vadd.f32 %v2795, %v2952
      %v2954 = vpop.f32.mrb[0].mxu0
      %v2955 = vpop.f32.mrb[0].mxu0
      %v2956 = vadd.f32 %v2795, %v2955
      %v2957 = vpop.f32.mrb[0].mxu0
      %2958 = vmatprep.mubr.bf16.mxu0 0
      %2959 = vmatmul.mubr.bf16.gmra.mrb[0].mxu0 %v2849
      %v2960 = vpop.f32.mrb[0].mxu0
      %v2961 = vadd.f32 %v2795, %v2960
      %v2962 = vpop.f32.mrb[0].mxu0
      %v2963 = vpop.f32.mrb[0].mxu0
      %v2964 = vadd.f32 %v2795, %v2963
      %v2965 = vpop.f32.mrb[0].mxu0
      %2966 = vmatprep.mubr.bf16.mxu0 0
      %2967 = vmatmul.mubr.bf16.gmra.mrb[0].mxu0 %v2852
      %v2968 = vpop.f32.mrb[0].mxu0
      %v2969 = vadd.f32 %v2795, %v2968
      %v2970 = vpop.f32.mrb[0].mxu0
      %v2971 = vpop.f32.mrb[0].mxu0
      %v2972 = vadd.f32 %v2795, %v2971
      %v2973 = vpop.f32.mrb[0].mxu0
      %2974 = vdwg.mxu0
      %v2975 = vadd.f32 %v2090, %v2889
      %v2976 = vadd.f32 %v2091, %v2892
      %v2977 = vadd.f32 %v2092, %v2897
      %v2978 = vadd.f32 %v2093, %v2900
      %v2979 = vadd.f32 %v2094, %v2905
      %v2980 = vadd.f32 %v2095, %v2908
      %v2981 = vadd.f32 %v2096, %v2913
      %v2982 = vadd.f32 %v2097, %v2916
      %v2983 = vadd.f32 %v2098, %v2921
      %v2984 = vadd.f32 %v2099, %v2924
      %v2985 = vadd.f32 %v2100, %v2929
      %v2986 = vadd.f32 %v2101, %v2932
      %v2987 = vadd.f32 %v2102, %v2937
      %v2988 = vadd.f32 %v2103, %v2940
      %v2989 = vadd.f32 %v2104, %v2945
      %v2990 = vadd.f32 %v2105, %v2948
      %v2991 = vadd.f32 %v2106, %v2953
      %v2992 = vadd.f32 %v2107, %v2956
      %v2993 = vadd.f32 %v2108, %v2961
      %v2994 = vadd.f32 %v2109, %v2964
      %v2995 = vadd.f32 %v2110, %v2969
      %v2996 = vadd.f32 %v2111, %v2972
      %2997 = vst.msk [vmem:[%s413] sm:$0xff] %vm1065, %v2975
      %2998 = vst.msk [vmem:[%s413 + $0x8] sm:$0xff] %vm1065, %v2976
      %2999 = vst.msk [vmem:[%s413 + $0x10] sm:$0xff] %vm1065, %v2977
      %3000 = vst.msk [vmem:[%s413 + $0x18] sm:$0xff] %vm1065, %v2978
      %3001 = vst.msk [vmem:[%s413 + $0x20] sm:$0xff] %vm1065, %v2979
      %3002 = vst.msk [vmem:[%s413 + $0x28] sm:$0xff] %vm1065, %v2980
      %3003 = vst.msk [vmem:[%s413 + $0x30] sm:$0xff] %vm1065, %v2981
      %3004 = vst.msk [vmem:[%s413 + $0x38] sm:$0xff] %vm1065, %v2982
      %3005 = vst.msk [vmem:[%s413 + $0x40] sm:$0xff] %vm1065, %v2983
      %3006 = vst.msk [vmem:[%s413 + $0x48] sm:$0xff] %vm1065, %v2984
      %3007 = vst.msk [vmem:[%s413 + $0x50] sm:$0xff] %vm1065, %v2985
      %3008 = vst.msk [vmem:[%s413 + $0x58] sm:$0xff] %vm1065, %v2986
      %3009 = vst.msk [vmem:[%s413 + $0x60] sm:$0xff] %vm1065, %v2987
      %3010 = vst.msk [vmem:[%s413 + $0x68] sm:$0xff] %vm1065, %v2988
      %3011 = vst.msk [vmem:[%s413 + $0x70] sm:$0xff] %vm1065, %v2989
      %3012 = vst.msk [vmem:[%s413 + $0x78] sm:$0xff] %vm1065, %v2990
      %3013 = vst.msk [vmem:[%s413 + $0x80] sm:$0xff] %vm1065, %v2991
      %3014 = vst.msk [vmem:[%s413 + $0x88] sm:$0xff] %vm1065, %v2992
      %3015 = vst.msk [vmem:[%s413 + $0x90] sm:$0xff] %vm1065, %v2993
      %3016 = vst.msk [vmem:[%s413 + $0x98] sm:$0xff] %vm1065, %v2994
      %3017 = vst.msk [vmem:[%s413 + $0xa0] sm:$0xff] %vm1065, %v2995
      %3018 = vst.msk [vmem:[%s413 + $0xa8] sm:$0xff] %vm1065, %v2996
      %p3019 = scmp.lt.s32.totalorder %s23, 1
      %s3020 = scalar_select %p3019, %s23, 1
      %s3021 = smul.addr %s3020, 22
      %s3022 = smul.addr %s3021, 8
      %s3023 = scalar_lea.vmem %s12, %s3022
      // Predicated region
      $region69: #{tpu_custom_call.1} parent=67 // pred_check
        %p3024 = pneg %p298
      $region70: #{tpu_custom_call.1} parent=67 // pred_check_branch
        %3026 = sbr.rel (%p3024) target = $region72
      $region71: #{tpu_custom_call.1} parent=67 // pred_region
        _
      $region72: #{tpu_custom_call.1} parent=67 // pred_fallthru
        _
    $region68: #{tpu_custom_call.1} parent=5 // pred_fallthru
      _
    %p3027 = scmp.le.s32.totalorder 2, %s18
    // Predicated region
    $region73: #{tpu_custom_call.1} parent=5 // pred_check
      %p3028 = pneg %p3027
    $region74: #{tpu_custom_call.1} parent=5 // pred_check_branch
      %3030 = sbr.rel (%p3028) target = $region76
    $region75: #{tpu_custom_call.1} parent=5 // pred_region
      %s3031 = ssub.s32 %s18, 2
      // Predicated region
      $region77: #{tpu_custom_call.1} parent=75 // pred_check
        %p3032 = pneg %p304
      $region78: #{tpu_custom_call.1} parent=75 // pred_check_branch
        %3034 = sbr.rel (%p3032) target = $region80
      $region79: #{tpu_custom_call.1} parent=75 // pred_region
        %p3035 = scmp.lt.s32.totalorder %s24, 1
        %s3036 = scalar_select %p3035, %s24, 1
        %s3037 = smul.addr %s3036, 22
        %s3038 = smul.addr %s3037, 8
        %s3039 = scalar_lea.vmem %s12, %s3038
      $region80: #{tpu_custom_call.1} parent=75 // pred_fallthru
        _
    $region76: #{tpu_custom_call.1} parent=5 // pred_fallthru
      _
  $region6: #{tpu_custom_call.1} parent=0 // loop_footer
    %s22 = sadd.s32 1, %s18
  $region7: #{tpu_custom_call.1} parent=0 // loop_footer_branch
    %17 = sbr.rel target = $region3
  $region8: #{tpu_custom_call.1} parent=0 // loop_exit
    _

</llo_original>
